<compile_context>
chip_gen: v7x
topology: tpu7x:2x2x1
jax: 0.10.0
libtpu: 0.0.40
codegen_flags: <defaults>
</compile_context>

<pallas_src>
import functools

import jax
import jax.numpy as jnp
from jax import lax
from jax.experimental import pallas as pl
from jax.experimental.pallas import tpu as pltpu


# ---------------------------------------------------------------------------
# Kernel: one (batch, channel-tile) grid step.
#   inputs : x block (1, tc, H*W) in VMEM (lane-dense), conv weights (2*KS*KS,) in SMEM
#   output : (1, 1, H*W) attention map (written once, at the last channel step)
#   scratch: running sum (1, H*W), running max (1, H*W), conv halo (2, H+2P, W+2P)
# ---------------------------------------------------------------------------
def _spatial_attn_kernel(x_ref, w_ref, o_ref, sum_ref, max_ref, pad_ref, *,
                         C, H, W, HW, KS, PAD, tc, n_c_steps, ch_sub):
    c_step = pl.program_id(1)

    @pl.when(c_step == 0)
    def _init():
        sum_ref[...] = jnp.zeros((1, HW), jnp.float32)
        max_ref[...] = jnp.full((1, HW), -jnp.inf, jnp.float32)

    # ---- channel pooling (lane-dense; the HBM-bound bulk of the kernel) ----
    needs_mask = (C % tc) != 0
    if needs_mask:
        # Number of valid channels in this block (only the last block is ragged).
        valid = jnp.minimum(C - c_step * tc, tc)

    for s in range(0, tc, ch_sub):                       # sub-chunked: bounds vreg pressure
        cs = min(ch_sub, tc - s)
        xv = x_ref[0, s:s + cs, :].astype(jnp.float32)   # (cs, HW)
        if needs_mask:
            ch = s + lax.broadcasted_iota(jnp.int32, (cs, HW), 0)
            in_range = ch < valid
            xs = jnp.where(in_range, xv, 0.0)
            xm = jnp.where(in_range, xv, -jnp.inf)
        else:
            xs = xv
            xm = xv
        sum_ref[...] = sum_ref[...] + jnp.sum(xs, axis=0, keepdims=True)
        max_ref[...] = jnp.maximum(max_ref[...], jnp.max(xm, axis=0, keepdims=True))

    # ---- finalize: 7x7 conv over [avg, max] + sigmoid, once per batch ------
    @pl.when(c_step == n_c_steps - 1)
    def _finalize():
        inv_c = 1.0 / C
        SH, SW = H + 2 * PAD, W + 2 * PAD

        # Zero only the PAD border of the halo (interior is fully overwritten).
        pad_ref[:, 0:PAD, :] = jnp.zeros((2, PAD, SW), jnp.float32)
        pad_ref[:, PAD + H:SH, :] = jnp.zeros((2, PAD, SW), jnp.float32)
        pad_ref[:, PAD:PAD + H, 0:PAD] = jnp.zeros((2, H, PAD), jnp.float32)
        pad_ref[:, PAD:PAD + H, PAD + W:SW] = jnp.zeros((2, H, PAD), jnp.float32)

        # Scatter the flat pooled rows into the 2-D halo interior (flat -> 2D).
        for y in range(H):
            row = slice(y * W, (y + 1) * W)
            pad_ref[0, PAD + y:PAD + y + 1, PAD:PAD + W] = sum_ref[:, row] * inv_c
            pad_ref[1, PAD + y:PAD + y + 1, PAD:PAD + W] = max_ref[:, row]

        # 2*KS*KS scalar-broadcast FMAs on the VPU; weights are SMEM scalars.
        # TODO(synk): the tap reads could be turned into one aligned load per
        # (c, ky) plus pltpu.roll lane shifts (XLU slot); kept as static slice
        # reads for robustness since this is a tiny per-batch epilogue.
        acc = jnp.zeros((H, W), jnp.float32)
        for c in range(2):
            for ky in range(KS):
                for kx in range(KS):
                    wv = w_ref[c * KS * KS + ky * KS + kx]
                    acc = acc + wv * pad_ref[c, ky:ky + H, kx:kx + W]

        sig = 1.0 / (1.0 + jnp.exp(-acc))                # exp -> EUP

        # Lane-dense output store: fill the flat (1, 1, H*W) block row by row.
        for y in range(H):
            o_ref[0, 0:1, y * W:(y + 1) * W] = sig[y:y + 1, :]


def _round_up(a, b):
    return ((a + b - 1) // b) * b


def spatial_attention(x, weight, *, kernel_size=7,
                      c_tile_budget_bytes=4 * 1024 * 1024,
                      vmem_limit_bytes=None):
    """x: (N, C, H, W); weight: (1, 2, KS, KS) (bias-free). Returns (N, 1, H, W)."""
    assert kernel_size in (3, 7), "kernel size must be 3 or 7"
    pad = 3 if kernel_size == 7 else 1
    N, C, H, W = x.shape
    KS = kernel_size
    HW = H * W

    # Lane-dense layout: put H*W on the lane axis (row-major flatten is free).
    x_flat = x.reshape(N, C, HW)

    # Channel tile: all of C if it fits the per-buffer budget, otherwise the
    # largest multiple of 8 that does (ragged tail handled by in-kernel mask).
    # Budget defaults keep 2x double-buffered input + scratch + output within
    # v5e's 16 MiB scoped-VMEM default; raise on v6e (128 MiB) if desired.
    bytes_per_chan = _round_up(HW, 128) * 4
    chan_cap = max(1, c_tile_budget_bytes // bytes_per_chan)
    tc = C if C <= chan_cap else max(8, (chan_cap // 8) * 8)
    n_c_steps = pl.cdiv(C, tc)

    # Sub-chunk size for the in-kernel reduction (~<=128 KiB of f32 live).
    ch_sub = min(tc, max(8, ((128 * 1024 // bytes_per_chan) // 8) * 8))

    w_flat = weight.reshape(-1).astype(jnp.float32)      # (2*KS*KS,) in (cin, kh, kw)

    kernel = functools.partial(
        _spatial_attn_kernel, C=C, H=H, W=W, HW=HW, KS=KS, PAD=pad,
        tc=tc, n_c_steps=n_c_steps, ch_sub=ch_sub)

    out_flat = pl.pallas_call(
        kernel,
        out_shape=jax.ShapeDtypeStruct((N, 1, HW), jnp.float32),
        grid=(N, n_c_steps),
        in_specs=[
            pl.BlockSpec((1, tc, HW), lambda n, c: (n, c, 0)),
            pl.BlockSpec(memory_space=pltpu.MemorySpace.SMEM),
        ],
        out_specs=pl.BlockSpec((1, 1, HW), lambda n, c: (n, 0, 0)),
        scratch_shapes=[
            pltpu.VMEM((1, HW), jnp.float32),                        # running channel sum
            pltpu.VMEM((1, HW), jnp.float32),                        # running channel max
            pltpu.VMEM((2, H + 2 * pad, W + 2 * pad), jnp.float32),  # conv zero halo
        ],
        compiler_params=pltpu.CompilerParams(
            dimension_semantics=("parallel", "arbitrary"),
            vmem_limit_bytes=vmem_limit_bytes),
    )(x_flat, w_flat)

    return out_flat.reshape(N, 1, H, W)


# ---------------------------------------------------------------------------
if __name__ == "__main__":
    N, C, H, W = 2, 4, 16, 16
    KS = 7
    key = jax.random.PRNGKey(0)
    kx, kw = jax.random.split(key)

    x = jax.random.normal(kx, (N, C, H, W), jnp.float32)
    lim = 1.0 / float((2 * KS * KS) ** 0.5)              # PyTorch Conv2d default init
    weight = jax.random.uniform(kw, (1, 2, KS, KS), jnp.float32, -lim, lim)

    fwd = jax.jit(functools.partial(spatial_attention, kernel_size=KS))
    out = jax.block_until_ready(fwd(x, weight))

    # Pure-JAX reference (same math as the PyTorch module) for a sanity check.
    avg = jnp.mean(x, axis=1, keepdims=True)
    mx = jnp.max(x, axis=1, keepdims=True)
    inp = jnp.concatenate([avg, mx], axis=1)
    ref = lax.conv_general_dilated(
        inp, weight, window_strides=(1, 1),
        padding=((3, 3), (3, 3)) if KS == 7 else ((1, 1), (1, 1)),
        dimension_numbers=("NCHW", "OIHW", "NCHW"))
    ref = jax.nn.sigmoid(ref)

    assert out.shape == (N, 1, H, W)
    assert bool(jnp.all(jnp.isfinite(out)))
    assert bool(jnp.allclose(out, ref, atol=2e-5, rtol=2e-5))
    print("KERNEL_OK")
</pallas_src>

<mosaic_0001>
module attributes {stable_mosaic.version = 11 : i64} {
  func.func @_spatial_attn_kernel(%arg0: i32, %arg1: i32, %arg2: memref<1x4x256xf32, #tpu.memory_space<vmem>>, %arg3: memref<98xf32, #tpu.memory_space<smem>>, %arg4: memref<1x1x256xf32, #tpu.memory_space<vmem>>, %arg5: memref<1x256xf32, #tpu.memory_space<vmem>>, %arg6: memref<1x256xf32, #tpu.memory_space<vmem>>, %arg7: memref<2x22x22xf32, #tpu.memory_space<vmem>>) attributes {dimension_semantics = [#tpu.dimension_semantics<parallel>, #tpu.dimension_semantics<arbitrary>], iteration_bounds = array<i64: 2, 1>, scalar_prefetch = 0 : i64, scratch_operands = 3 : i64, tpu.core_type = #tpu.core_type<tc>, window_params = [{transform_indices = @transform_0, window_bounds = array<i64: 1, 4, 256>}, {transform_indices = @transform_1, window_bounds = array<i64: 98>}, {transform_indices = @transform_2, window_bounds = array<i64: 1, 1, 256>}]} {
    %c0_i32 = arith.constant 0 : i32
    %0 = arith.cmpi eq, %arg1, %c0_i32 : i32
    %1 = arith.extui %0 : i1 to i32
    %c0_i32_0 = arith.constant 0 : i32
    %2 = arith.cmpi ne, %1, %c0_i32_0 : i32
    scf.if %2 {
      %cst_14 = arith.constant 0.000000e+00 : f32
      %18 = vector.broadcast %cst_14 : f32 to vector<1x256xf32>
      %c0_15 = arith.constant 0 : index
      %c0_16 = arith.constant 0 : index
      %19 = vector.load %arg5[%c0_15, %c0_16] : memref<1x256xf32, #tpu.memory_space<vmem>>, vector<1x256xf32>
      tpu.vector_store %arg5[%c0_15, %c0_16], %18 {strides = array<i32>} : memref<1x256xf32, #tpu.memory_space<vmem>>, vector<1x256xf32>,
      %cst_17 = arith.constant 0xFF800000 : f32
      %20 = vector.broadcast %cst_17 : f32 to vector<1x256xf32>
      %c0_18 = arith.constant 0 : index
      %c0_19 = arith.constant 0 : index
      %21 = vector.load %arg6[%c0_18, %c0_19] : memref<1x256xf32, #tpu.memory_space<vmem>>, vector<1x256xf32>
      tpu.vector_store %arg6[%c0_18, %c0_19], %20 {strides = array<i32>} : memref<1x256xf32, #tpu.memory_space<vmem>>, vector<1x256xf32>,
    } else {
    }
    %c0 = arith.constant 0 : index
    %c0_1 = arith.constant 0 : index
    %c0_2 = arith.constant 0 : index
    %3 = vector.load %arg2[%c0, %c0_1, %c0_2] : memref<1x4x256xf32, #tpu.memory_space<vmem>>, vector<1x4x256xf32>
    %4 = vector.shape_cast %3 : vector<1x4x256xf32> to vector<4x256xf32>
    %c0_3 = arith.constant 0 : index
    %c0_4 = arith.constant 0 : index
    %5 = vector.load %arg5[%c0_3, %c0_4] : memref<1x256xf32, #tpu.memory_space<vmem>>, vector<1x256xf32>
    %cst = arith.constant dense<0.000000e+00> : vector<256xf32>
    %6 = vector.multi_reduction <add>, %4, %cst [0] : vector<4x256xf32> to vector<256xf32>
    %7 = vector.shape_cast %6 : vector<256xf32> to vector<1x256xf32>
    %8 = arith.addf %5, %7 : vector<1x256xf32>
    %c0_5 = arith.constant 0 : index
    %c0_6 = arith.constant 0 : index
    %9 = vector.load %arg5[%c0_5, %c0_6] : memref<1x256xf32, #tpu.memory_space<vmem>>, vector<1x256xf32>
    tpu.vector_store %arg5[%c0_5, %c0_6], %8 {strides = array<i32>} : memref<1x256xf32, #tpu.memory_space<vmem>>, vector<1x256xf32>,
    %c0_7 = arith.constant 0 : index
    %c0_8 = arith.constant 0 : index
    %10 = vector.load %arg6[%c0_7, %c0_8] : memref<1x256xf32, #tpu.memory_space<vmem>>, vector<1x256xf32>
    %cst_9 = arith.constant dense<0xFF800000> : vector<256xf32>
    %11 = vector.multi_reduction <maximumf>, %4, %cst_9 [0] : vector<4x256xf32> to vector<256xf32>
    %12 = vector.shape_cast %11 : vector<256xf32> to vector<1x256xf32>
    %13 = arith.maximumf %10, %12 : vector<1x256xf32>
    %c0_10 = arith.constant 0 : index
    %c0_11 = arith.constant 0 : index
    %14 = vector.load %arg6[%c0_10, %c0_11] : memref<1x256xf32, #tpu.memory_space<vmem>>, vector<1x256xf32>
    tpu.vector_store %arg6[%c0_10, %c0_11], %13 {strides = array<i32>} : memref<1x256xf32, #tpu.memory_space<vmem>>, vector<1x256xf32>,
    %c0_i32_12 = arith.constant 0 : i32
    %15 = arith.cmpi eq, %arg1, %c0_i32_12 : i32
    %16 = arith.extui %15 : i1 to i32
    %c0_i32_13 = arith.constant 0 : i32
    %17 = arith.cmpi ne, %16, %c0_i32_13 : i32
    scf.if %17 {
      %cst_14 = arith.constant 0.000000e+00 : f32
      %18 = vector.broadcast %cst_14 : f32 to vector<2x3x22xf32>
      %c0_15 = arith.constant 0 : index
      %c0_16 = arith.constant 0 : index
      %c0_17 = arith.constant 0 : index
      %19 = vector.load %arg7[%c0_15, %c0_16, %c0_17] : memref<2x22x22xf32, #tpu.memory_space<vmem>>, vector<2x3x22xf32>
      tpu.vector_store %arg7[%c0_15, %c0_16, %c0_17], %18 {strides = array<i32>} : memref<2x22x22xf32, #tpu.memory_space<vmem>>, vector<2x3x22xf32>,
      %cst_18 = arith.constant 0.000000e+00 : f32
      %20 = vector.broadcast %cst_18 : f32 to vector<2x3x22xf32>
      %c0_19 = arith.constant 0 : index
      %c19 = arith.constant 19 : index
      %c0_20 = arith.constant 0 : index
      %21 = vector.load %arg7[%c0_19, %c19, %c0_20] : memref<2x22x22xf32, #tpu.memory_space<vmem>>, vector<2x3x22xf32>
      tpu.vector_store %arg7[%c0_19, %c19, %c0_20], %20 {strides = array<i32>} : memref<2x22x22xf32, #tpu.memory_space<vmem>>, vector<2x3x22xf32>,
      %cst_21 = arith.constant 0.000000e+00 : f32
      %22 = vector.broadcast %cst_21 : f32 to vector<2x16x3xf32>
      %c0_22 = arith.constant 0 : index
      %c3 = arith.constant 3 : index
      %c0_23 = arith.constant 0 : index
      %23 = vector.load %arg7[%c0_22, %c3, %c0_23] : memref<2x22x22xf32, #tpu.memory_space<vmem>>, vector<2x16x3xf32>
      tpu.vector_store %arg7[%c0_22, %c3, %c0_23], %22 {strides = array<i32>} : memref<2x22x22xf32, #tpu.memory_space<vmem>>, vector<2x16x3xf32>,
      %cst_24 = arith.constant 0.000000e+00 : f32
      %24 = vector.broadcast %cst_24 : f32 to vector<2x16x3xf32>
      %c0_25 = arith.constant 0 : index
      %c3_26 = arith.constant 3 : index
      %c19_27 = arith.constant 19 : index
      %25 = vector.load %arg7[%c0_25, %c3_26, %c19_27] : memref<2x22x22xf32, #tpu.memory_space<vmem>>, vector<2x16x3xf32>
      tpu.vector_store %arg7[%c0_25, %c3_26, %c19_27], %24 {strides = array<i32>} : memref<2x22x22xf32, #tpu.memory_space<vmem>>, vector<2x16x3xf32>,
      %c0_28 = arith.constant 0 : index
      %c0_29 = arith.constant 0 : index
      %26 = vector.load %arg5[%c0_28, %c0_29] : memref<1x256xf32, #tpu.memory_space<vmem>>, vector<1x16xf32>
      %cst_30 = arith.constant 2.500000e-01 : f32
      %27 = vector.broadcast %cst_30 : f32 to vector<1x16xf32>
      %28 = arith.mulf %26, %27 : vector<1x16xf32>
      %c0_31 = arith.constant 0 : index
      %c3_32 = arith.constant 3 : index
      %c3_33 = arith.constant 3 : index
      %29 = vector.load %arg7[%c0_31, %c3_32, %c3_33] : memref<2x22x22xf32, #tpu.memory_space<vmem>>, vector<1x1x16xf32>
      %30 = vector.shape_cast %29 : vector<1x1x16xf32> to vector<1x16xf32>
      %31 = vector.shape_cast %28 : vector<1x16xf32> to vector<1x1x16xf32>
      tpu.vector_store %arg7[%c0_31, %c3_32, %c3_33], %31 {strides = array<i32>} : memref<2x22x22xf32, #tpu.memory_space<vmem>>, vector<1x1x16xf32>,
      %c0_34 = arith.constant 0 : index
      %c0_35 = arith.constant 0 : index
      %32 = vector.load %arg6[%c0_34, %c0_35] : memref<1x256xf32, #tpu.memory_space<vmem>>, vector<1x16xf32>
      %c1 = arith.constant 1 : index
      %c3_36 = arith.constant 3 : index
      %c3_37 = arith.constant 3 : index
      %33 = vector.load %arg7[%c1, %c3_36, %c3_37] : memref<2x22x22xf32, #tpu.memory_space<vmem>>, vector<1x1x16xf32>
      %34 = vector.shape_cast %33 : vector<1x1x16xf32> to vector<1x16xf32>
      %35 = vector.shape_cast %32 : vector<1x16xf32> to vector<1x1x16xf32>
      tpu.vector_store %arg7[%c1, %c3_36, %c3_37], %35 {strides = array<i32>} : memref<2x22x22xf32, #tpu.memory_space<vmem>>, vector<1x1x16xf32>,
      %c0_38 = arith.constant 0 : index
      %c16 = arith.constant 16 : index
      %36 = vector.load %arg5[%c0_38, %c16] : memref<1x256xf32, #tpu.memory_space<vmem>>, vector<1x16xf32>
      %cst_39 = arith.constant 2.500000e-01 : f32
      %37 = vector.broadcast %cst_39 : f32 to vector<1x16xf32>
      %38 = arith.mulf %36, %37 : vector<1x16xf32>
      %c0_40 = arith.constant 0 : index
      %c4 = arith.constant 4 : index
      %c3_41 = arith.constant 3 : index
      %39 = vector.load %arg7[%c0_40, %c4, %c3_41] : memref<2x22x22xf32, #tpu.memory_space<vmem>>, vector<1x1x16xf32>
      %40 = vector.shape_cast %39 : vector<1x1x16xf32> to vector<1x16xf32>
      %41 = vector.shape_cast %38 : vector<1x16xf32> to vector<1x1x16xf32>
      tpu.vector_store %arg7[%c0_40, %c4, %c3_41], %41 {strides = array<i32>} : memref<2x22x22xf32, #tpu.memory_space<vmem>>, vector<1x1x16xf32>,
      %c0_42 = arith.constant 0 : index
      %c16_43 = arith.constant 16 : index
      %42 = vector.load %arg6[%c0_42, %c16_43] : memref<1x256xf32, #tpu.memory_space<vmem>>, vector<1x16xf32>
      %c1_44 = arith.constant 1 : index
      %c4_45 = arith.constant 4 : index
      %c3_46 = arith.constant 3 : index
      %43 = vector.load %arg7[%c1_44, %c4_45, %c3_46] : memref<2x22x22xf32, #tpu.memory_space<vmem>>, vector<1x1x16xf32>
      %44 = vector.shape_cast %43 : vector<1x1x16xf32> to vector<1x16xf32>
      %45 = vector.shape_cast %42 : vector<1x16xf32> to vector<1x1x16xf32>
      tpu.vector_store %arg7[%c1_44, %c4_45, %c3_46], %45 {strides = array<i32>} : memref<2x22x22xf32, #tpu.memory_space<vmem>>, vector<1x1x16xf32>,
      %c0_47 = arith.constant 0 : index
      %c32 = arith.constant 32 : index
      %46 = vector.load %arg5[%c0_47, %c32] : memref<1x256xf32, #tpu.memory_space<vmem>>, vector<1x16xf32>
      %cst_48 = arith.constant 2.500000e-01 : f32
      %47 = vector.broadcast %cst_48 : f32 to vector<1x16xf32>
      %48 = arith.mulf %46, %47 : vector<1x16xf32>
      %c0_49 = arith.constant 0 : index
      %c5 = arith.constant 5 : index
      %c3_50 = arith.constant 3 : index
      %49 = vector.load %arg7[%c0_49, %c5, %c3_50] : memref<2x22x22xf32, #tpu.memory_space<vmem>>, vector<1x1x16xf32>
      %50 = vector.shape_cast %49 : vector<1x1x16xf32> to vector<1x16xf32>
      %51 = vector.shape_cast %48 : vector<1x16xf32> to vector<1x1x16xf32>
      tpu.vector_store %arg7[%c0_49, %c5, %c3_50], %51 {strides = array<i32>} : memref<2x22x22xf32, #tpu.memory_space<vmem>>, vector<1x1x16xf32>,
      %c0_51 = arith.constant 0 : index
      %c32_52 = arith.constant 32 : index
      %52 = vector.load %arg6[%c0_51, %c32_52] : memref<1x256xf32, #tpu.memory_space<vmem>>, vector<1x16xf32>
      %c1_53 = arith.constant 1 : index
      %c5_54 = arith.constant 5 : index
      %c3_55 = arith.constant 3 : index
      %53 = vector.load %arg7[%c1_53, %c5_54, %c3_55] : memref<2x22x22xf32, #tpu.memory_space<vmem>>, vector<1x1x16xf32>
      %54 = vector.shape_cast %53 : vector<1x1x16xf32> to vector<1x16xf32>
      %55 = vector.shape_cast %52 : vector<1x16xf32> to vector<1x1x16xf32>
      tpu.vector_store %arg7[%c1_53, %c5_54, %c3_55], %55 {strides = array<i32>} : memref<2x22x22xf32, #tpu.memory_space<vmem>>, vector<1x1x16xf32>,
      %c0_56 = arith.constant 0 : index
      %c48 = arith.constant 48 : index
      %56 = vector.load %arg5[%c0_56, %c48] : memref<1x256xf32, #tpu.memory_space<vmem>>, vector<1x16xf32>
      %cst_57 = arith.constant 2.500000e-01 : f32
      %57 = vector.broadcast %cst_57 : f32 to vector<1x16xf32>
      %58 = arith.mulf %56, %57 : vector<1x16xf32>
      %c0_58 = arith.constant 0 : index
      %c6 = arith.constant 6 : index
      %c3_59 = arith.constant 3 : index
      %59 = vector.load %arg7[%c0_58, %c6, %c3_59] : memref<2x22x22xf32, #tpu.memory_space<vmem>>, vector<1x1x16xf32>
      %60 = vector.shape_cast %59 : vector<1x1x16xf32> to vector<1x16xf32>
      %61 = vector.shape_cast %58 : vector<1x16xf32> to vector<1x1x16xf32>
      tpu.vector_store %arg7[%c0_58, %c6, %c3_59], %61 {strides = array<i32>} : memref<2x22x22xf32, #tpu.memory_space<vmem>>, vector<1x1x16xf32>,
      %c0_60 = arith.constant 0 : index
      %c48_61 = arith.constant 48 : index
      %62 = vector.load %arg6[%c0_60, %c48_61] : memref<1x256xf32, #tpu.memory_space<vmem>>, vector<1x16xf32>
      %c1_62 = arith.constant 1 : index
      %c6_63 = arith.constant 6 : index
      %c3_64 = arith.constant 3 : index
      %63 = vector.load %arg7[%c1_62, %c6_63, %c3_64] : memref<2x22x22xf32, #tpu.memory_space<vmem>>, vector<1x1x16xf32>
      %64 = vector.shape_cast %63 : vector<1x1x16xf32> to vector<1x16xf32>
      %65 = vector.shape_cast %62 : vector<1x16xf32> to vector<1x1x16xf32>
      tpu.vector_store %arg7[%c1_62, %c6_63, %c3_64], %65 {strides = array<i32>} : memref<2x22x22xf32, #tpu.memory_space<vmem>>, vector<1x1x16xf32>,
      %c0_65 = arith.constant 0 : index
      %c64 = arith.constant 64 : index
      %66 = vector.load %arg5[%c0_65, %c64] : memref<1x256xf32, #tpu.memory_space<vmem>>, vector<1x16xf32>
      %cst_66 = arith.constant 2.500000e-01 : f32
      %67 = vector.broadcast %cst_66 : f32 to vector<1x16xf32>
      %68 = arith.mulf %66, %67 : vector<1x16xf32>
      %c0_67 = arith.constant 0 : index
      %c7 = arith.constant 7 : index
      %c3_68 = arith.constant 3 : index
      %69 = vector.load %arg7[%c0_67, %c7, %c3_68] : memref<2x22x22xf32, #tpu.memory_space<vmem>>, vector<1x1x16xf32>
      %70 = vector.shape_cast %69 : vector<1x1x16xf32> to vector<1x16xf32>
      %71 = vector.shape_cast %68 : vector<1x16xf32> to vector<1x1x16xf32>
      tpu.vector_store %arg7[%c0_67, %c7, %c3_68], %71 {strides = array<i32>} : memref<2x22x22xf32, #tpu.memory_space<vmem>>, vector<1x1x16xf32>,
      %c0_69 = arith.constant 0 : index
      %c64_70 = arith.constant 64 : index
      %72 = vector.load %arg6[%c0_69, %c64_70] : memref<1x256xf32, #tpu.memory_space<vmem>>, vector<1x16xf32>
      %c1_71 = arith.constant 1 : index
      %c7_72 = arith.constant 7 : index
      %c3_73 = arith.constant 3 : index
      %73 = vector.load %arg7[%c1_71, %c7_72, %c3_73] : memref<2x22x22xf32, #tpu.memory_space<vmem>>, vector<1x1x16xf32>
      %74 = vector.shape_cast %73 : vector<1x1x16xf32> to vector<1x16xf32>
      %75 = vector.shape_cast %72 : vector<1x16xf32> to vector<1x1x16xf32>
      tpu.vector_store %arg7[%c1_71, %c7_72, %c3_73], %75 {strides = array<i32>} : memref<2x22x22xf32, #tpu.memory_space<vmem>>, vector<1x1x16xf32>,
      %c0_74 = arith.constant 0 : index
      %c80 = arith.constant 80 : index
      %76 = vector.load %arg5[%c0_74, %c80] : memref<1x256xf32, #tpu.memory_space<vmem>>, vector<1x16xf32>
      %cst_75 = arith.constant 2.500000e-01 : f32
      %77 = vector.broadcast %cst_75 : f32 to vector<1x16xf32>
      %78 = arith.mulf %76, %77 : vector<1x16xf32>
      %c0_76 = arith.constant 0 : index
      %c8 = arith.constant 8 : index
      %c3_77 = arith.constant 3 : index
      %79 = vector.load %arg7[%c0_76, %c8, %c3_77] : memref<2x22x22xf32, #tpu.memory_space<vmem>>, vector<1x1x16xf32>
      %80 = vector.shape_cast %79 : vector<1x1x16xf32> to vector<1x16xf32>
      %81 = vector.shape_cast %78 : vector<1x16xf32> to vector<1x1x16xf32>
      tpu.vector_store %arg7[%c0_76, %c8, %c3_77], %81 {strides = array<i32>} : memref<2x22x22xf32, #tpu.memory_space<vmem>>, vector<1x1x16xf32>,
      %c0_78 = arith.constant 0 : index
      %c80_79 = arith.constant 80 : index
      %82 = vector.load %arg6[%c0_78, %c80_79] : memref<1x256xf32, #tpu.memory_space<vmem>>, vector<1x16xf32>
      %c1_80 = arith.constant 1 : index
      %c8_81 = arith.constant 8 : index
      %c3_82 = arith.constant 3 : index
      %83 = vector.load %arg7[%c1_80, %c8_81, %c3_82] : memref<2x22x22xf32, #tpu.memory_space<vmem>>, vector<1x1x16xf32>
      %84 = vector.shape_cast %83 : vector<1x1x16xf32> to vector<1x16xf32>
      %85 = vector.shape_cast %82 : vector<1x16xf32> to vector<1x1x16xf32>
      tpu.vector_store %arg7[%c1_80, %c8_81, %c3_82], %85 {strides = array<i32>} : memref<2x22x22xf32, #tpu.memory_space<vmem>>, vector<1x1x16xf32>,
      %c0_83 = arith.constant 0 : index
      %c96 = arith.constant 96 : index
      %86 = vector.load %arg5[%c0_83, %c96] : memref<1x256xf32, #tpu.memory_space<vmem>>, vector<1x16xf32>
      %cst_84 = arith.constant 2.500000e-01 : f32
      %87 = vector.broadcast %cst_84 : f32 to vector<1x16xf32>
      %88 = arith.mulf %86, %87 : vector<1x16xf32>
      %c0_85 = arith.constant 0 : index
      %c9 = arith.constant 9 : index
      %c3_86 = arith.constant 3 : index
      %89 = vector.load %arg7[%c0_85, %c9, %c3_86] : memref<2x22x22xf32, #tpu.memory_space<vmem>>, vector<1x1x16xf32>
      %90 = vector.shape_cast %89 : vector<1x1x16xf32> to vector<1x16xf32>
      %91 = vector.shape_cast %88 : vector<1x16xf32> to vector<1x1x16xf32>
      tpu.vector_store %arg7[%c0_85, %c9, %c3_86], %91 {strides = array<i32>} : memref<2x22x22xf32, #tpu.memory_space<vmem>>, vector<1x1x16xf32>,
      %c0_87 = arith.constant 0 : index
      %c96_88 = arith.constant 96 : index
      %92 = vector.load %arg6[%c0_87, %c96_88] : memref<1x256xf32, #tpu.memory_space<vmem>>, vector<1x16xf32>
      %c1_89 = arith.constant 1 : index
      %c9_90 = arith.constant 9 : index
      %c3_91 = arith.constant 3 : index
      %93 = vector.load %arg7[%c1_89, %c9_90, %c3_91] : memref<2x22x22xf32, #tpu.memory_space<vmem>>, vector<1x1x16xf32>
      %94 = vector.shape_cast %93 : vector<1x1x16xf32> to vector<1x16xf32>
      %95 = vector.shape_cast %92 : vector<1x16xf32> to vector<1x1x16xf32>
      tpu.vector_store %arg7[%c1_89, %c9_90, %c3_91], %95 {strides = array<i32>} : memref<2x22x22xf32, #tpu.memory_space<vmem>>, vector<1x1x16xf32>,
      %c0_92 = arith.constant 0 : index
      %c112 = arith.constant 112 : index
      %96 = vector.load %arg5[%c0_92, %c112] : memref<1x256xf32, #tpu.memory_space<vmem>>, vector<1x16xf32>
      %cst_93 = arith.constant 2.500000e-01 : f32
      %97 = vector.broadcast %cst_93 : f32 to vector<1x16xf32>
      %98 = arith.mulf %96, %97 : vector<1x16xf32>
      %c0_94 = arith.constant 0 : index
      %c10 = arith.constant 10 : index
      %c3_95 = arith.constant 3 : index
      %99 = vector.load %arg7[%c0_94, %c10, %c3_95] : memref<2x22x22xf32, #tpu.memory_space<vmem>>, vector<1x1x16xf32>
      %100 = vector.shape_cast %99 : vector<1x1x16xf32> to vector<1x16xf32>
      %101 = vector.shape_cast %98 : vector<1x16xf32> to vector<1x1x16xf32>
      tpu.vector_store %arg7[%c0_94, %c10, %c3_95], %101 {strides = array<i32>} : memref<2x22x22xf32, #tpu.memory_space<vmem>>, vector<1x1x16xf32>,
      %c0_96 = arith.constant 0 : index
      %c112_97 = arith.constant 112 : index
      %102 = vector.load %arg6[%c0_96, %c112_97] : memref<1x256xf32, #tpu.memory_space<vmem>>, vector<1x16xf32>
      %c1_98 = arith.constant 1 : index
      %c10_99 = arith.constant 10 : index
      %c3_100 = arith.constant 3 : index
      %103 = vector.load %arg7[%c1_98, %c10_99, %c3_100] : memref<2x22x22xf32, #tpu.memory_space<vmem>>, vector<1x1x16xf32>
      %104 = vector.shape_cast %103 : vector<1x1x16xf32> to vector<1x16xf32>
      %105 = vector.shape_cast %102 : vector<1x16xf32> to vector<1x1x16xf32>
      tpu.vector_store %arg7[%c1_98, %c10_99, %c3_100], %105 {strides = array<i32>} : memref<2x22x22xf32, #tpu.memory_space<vmem>>, vector<1x1x16xf32>,
      %c0_101 = arith.constant 0 : index
      %c128 = arith.constant 128 : index
      %106 = vector.load %arg5[%c0_101, %c128] : memref<1x256xf32, #tpu.memory_space<vmem>>, vector<1x16xf32>
      %cst_102 = arith.constant 2.500000e-01 : f32
      %107 = vector.broadcast %cst_102 : f32 to vector<1x16xf32>
      %108 = arith.mulf %106, %107 : vector<1x16xf32>
      %c0_103 = arith.constant 0 : index
      %c11 = arith.constant 11 : index
      %c3_104 = arith.constant 3 : index
      %109 = vector.load %arg7[%c0_103, %c11, %c3_104] : memref<2x22x22xf32, #tpu.memory_space<vmem>>, vector<1x1x16xf32>
      %110 = vector.shape_cast %109 : vector<1x1x16xf32> to vector<1x16xf32>
      %111 = vector.shape_cast %108 : vector<1x16xf32> to vector<1x1x16xf32>
      tpu.vector_store %arg7[%c0_103, %c11, %c3_104], %111 {strides = array<i32>} : memref<2x22x22xf32, #tpu.memory_space<vmem>>, vector<1x1x16xf32>,
      %c0_105 = arith.constant 0 : index
      %c128_106 = arith.constant 128 : index
      %112 = vector.load %arg6[%c0_105, %c128_106] : memref<1x256xf32, #tpu.memory_space<vmem>>, vector<1x16xf32>
      %c1_107 = arith.constant 1 : index
      %c11_108 = arith.constant 11 : index
      %c3_109 = arith.constant 3 : index
      %113 = vector.load %arg7[%c1_107, %c11_108, %c3_109] : memref<2x22x22xf32, #tpu.memory_space<vmem>>, vector<1x1x16xf32>
      %114 = vector.shape_cast %113 : vector<1x1x16xf32> to vector<1x16xf32>
      %115 = vector.shape_cast %112 : vector<1x16xf32> to vector<1x1x16xf32>
      tpu.vector_store %arg7[%c1_107, %c11_108, %c3_109], %115 {strides = array<i32>} : memref<2x22x22xf32, #tpu.memory_space<vmem>>, vector<1x1x16xf32>,
      %c0_110 = arith.constant 0 : index
      %c144 = arith.constant 144 : index
      %116 = vector.load %arg5[%c0_110, %c144] : memref<1x256xf32, #tpu.memory_space<vmem>>, vector<1x16xf32>
      %cst_111 = arith.constant 2.500000e-01 : f32
      %117 = vector.broadcast %cst_111 : f32 to vector<1x16xf32>
      %118 = arith.mulf %116, %117 : vector<1x16xf32>
      %c0_112 = arith.constant 0 : index
      %c12 = arith.constant 12 : index
      %c3_113 = arith.constant 3 : index
      %119 = vector.load %arg7[%c0_112, %c12, %c3_113] : memref<2x22x22xf32, #tpu.memory_space<vmem>>, vector<1x1x16xf32>
      %120 = vector.shape_cast %119 : vector<1x1x16xf32> to vector<1x16xf32>
      %121 = vector.shape_cast %118 : vector<1x16xf32> to vector<1x1x16xf32>
      tpu.vector_store %arg7[%c0_112, %c12, %c3_113], %121 {strides = array<i32>} : memref<2x22x22xf32, #tpu.memory_space<vmem>>, vector<1x1x16xf32>,
      %c0_114 = arith.constant 0 : index
      %c144_115 = arith.constant 144 : index
      %122 = vector.load %arg6[%c0_114, %c144_115] : memref<1x256xf32, #tpu.memory_space<vmem>>, vector<1x16xf32>
      %c1_116 = arith.constant 1 : index
      %c12_117 = arith.constant 12 : index
      %c3_118 = arith.constant 3 : index
      %123 = vector.load %arg7[%c1_116, %c12_117, %c3_118] : memref<2x22x22xf32, #tpu.memory_space<vmem>>, vector<1x1x16xf32>
      %124 = vector.shape_cast %123 : vector<1x1x16xf32> to vector<1x16xf32>
      %125 = vector.shape_cast %122 : vector<1x16xf32> to vector<1x1x16xf32>
      tpu.vector_store %arg7[%c1_116, %c12_117, %c3_118], %125 {strides = array<i32>} : memref<2x22x22xf32, #tpu.memory_space<vmem>>, vector<1x1x16xf32>,
      %c0_119 = arith.constant 0 : index
      %c160 = arith.constant 160 : index
      %126 = vector.load %arg5[%c0_119, %c160] : memref<1x256xf32, #tpu.memory_space<vmem>>, vector<1x16xf32>
      %cst_120 = arith.constant 2.500000e-01 : f32
      %127 = vector.broadcast %cst_120 : f32 to vector<1x16xf32>
      %128 = arith.mulf %126, %127 : vector<1x16xf32>
      %c0_121 = arith.constant 0 : index
      %c13 = arith.constant 13 : index
      %c3_122 = arith.constant 3 : index
      %129 = vector.load %arg7[%c0_121, %c13, %c3_122] : memref<2x22x22xf32, #tpu.memory_space<vmem>>, vector<1x1x16xf32>
      %130 = vector.shape_cast %129 : vector<1x1x16xf32> to vector<1x16xf32>
      %131 = vector.shape_cast %128 : vector<1x16xf32> to vector<1x1x16xf32>
      tpu.vector_store %arg7[%c0_121, %c13, %c3_122], %131 {strides = array<i32>} : memref<2x22x22xf32, #tpu.memory_space<vmem>>, vector<1x1x16xf32>,
      %c0_123 = arith.constant 0 : index
      %c160_124 = arith.constant 160 : index
      %132 = vector.load %arg6[%c0_123, %c160_124] : memref<1x256xf32, #tpu.memory_space<vmem>>, vector<1x16xf32>
      %c1_125 = arith.constant 1 : index
      %c13_126 = arith.constant 13 : index
      %c3_127 = arith.constant 3 : index
      %133 = vector.load %arg7[%c1_125, %c13_126, %c3_127] : memref<2x22x22xf32, #tpu.memory_space<vmem>>, vector<1x1x16xf32>
      %134 = vector.shape_cast %133 : vector<1x1x16xf32> to vector<1x16xf32>
      %135 = vector.shape_cast %132 : vector<1x16xf32> to vector<1x1x16xf32>
      tpu.vector_store %arg7[%c1_125, %c13_126, %c3_127], %135 {strides = array<i32>} : memref<2x22x22xf32, #tpu.memory_space<vmem>>, vector<1x1x16xf32>,
      %c0_128 = arith.constant 0 : index
      %c176 = arith.constant 176 : index
      %136 = vector.load %arg5[%c0_128, %c176] : memref<1x256xf32, #tpu.memory_space<vmem>>, vector<1x16xf32>
      %cst_129 = arith.constant 2.500000e-01 : f32
      %137 = vector.broadcast %cst_129 : f32 to vector<1x16xf32>
      %138 = arith.mulf %136, %137 : vector<1x16xf32>
      %c0_130 = arith.constant 0 : index
      %c14 = arith.constant 14 : index
      %c3_131 = arith.constant 3 : index
      %139 = vector.load %arg7[%c0_130, %c14, %c3_131] : memref<2x22x22xf32, #tpu.memory_space<vmem>>, vector<1x1x16xf32>
      %140 = vector.shape_cast %139 : vector<1x1x16xf32> to vector<1x16xf32>
      %141 = vector.shape_cast %138 : vector<1x16xf32> to vector<1x1x16xf32>
      tpu.vector_store %arg7[%c0_130, %c14, %c3_131], %141 {strides = array<i32>} : memref<2x22x22xf32, #tpu.memory_space<vmem>>, vector<1x1x16xf32>,
      %c0_132 = arith.constant 0 : index
      %c176_133 = arith.constant 176 : index
      %142 = vector.load %arg6[%c0_132, %c176_133] : memref<1x256xf32, #tpu.memory_space<vmem>>, vector<1x16xf32>
      %c1_134 = arith.constant 1 : index
      %c14_135 = arith.constant 14 : index
      %c3_136 = arith.constant 3 : index
      %143 = vector.load %arg7[%c1_134, %c14_135, %c3_136] : memref<2x22x22xf32, #tpu.memory_space<vmem>>, vector<1x1x16xf32>
      %144 = vector.shape_cast %143 : vector<1x1x16xf32> to vector<1x16xf32>
      %145 = vector.shape_cast %142 : vector<1x16xf32> to vector<1x1x16xf32>
      tpu.vector_store %arg7[%c1_134, %c14_135, %c3_136], %145 {strides = array<i32>} : memref<2x22x22xf32, #tpu.memory_space<vmem>>, vector<1x1x16xf32>,
      %c0_137 = arith.constant 0 : index
      %c192 = arith.constant 192 : index
      %146 = vector.load %arg5[%c0_137, %c192] : memref<1x256xf32, #tpu.memory_space<vmem>>, vector<1x16xf32>
      %cst_138 = arith.constant 2.500000e-01 : f32
      %147 = vector.broadcast %cst_138 : f32 to vector<1x16xf32>
      %148 = arith.mulf %146, %147 : vector<1x16xf32>
      %c0_139 = arith.constant 0 : index
      %c15 = arith.constant 15 : index
      %c3_140 = arith.constant 3 : index
      %149 = vector.load %arg7[%c0_139, %c15, %c3_140] : memref<2x22x22xf32, #tpu.memory_space<vmem>>, vector<1x1x16xf32>
      %150 = vector.shape_cast %149 : vector<1x1x16xf32> to vector<1x16xf32>
      %151 = vector.shape_cast %148 : vector<1x16xf32> to vector<1x1x16xf32>
      tpu.vector_store %arg7[%c0_139, %c15, %c3_140], %151 {strides = array<i32>} : memref<2x22x22xf32, #tpu.memory_space<vmem>>, vector<1x1x16xf32>,
      %c0_141 = arith.constant 0 : index
      %c192_142 = arith.constant 192 : index
      %152 = vector.load %arg6[%c0_141, %c192_142] : memref<1x256xf32, #tpu.memory_space<vmem>>, vector<1x16xf32>
      %c1_143 = arith.constant 1 : index
      %c15_144 = arith.constant 15 : index
      %c3_145 = arith.constant 3 : index
      %153 = vector.load %arg7[%c1_143, %c15_144, %c3_145] : memref<2x22x22xf32, #tpu.memory_space<vmem>>, vector<1x1x16xf32>
      %154 = vector.shape_cast %153 : vector<1x1x16xf32> to vector<1x16xf32>
      %155 = vector.shape_cast %152 : vector<1x16xf32> to vector<1x1x16xf32>
      tpu.vector_store %arg7[%c1_143, %c15_144, %c3_145], %155 {strides = array<i32>} : memref<2x22x22xf32, #tpu.memory_space<vmem>>, vector<1x1x16xf32>,
      %c0_146 = arith.constant 0 : index
      %c208 = arith.constant 208 : index
      %156 = vector.load %arg5[%c0_146, %c208] : memref<1x256xf32, #tpu.memory_space<vmem>>, vector<1x16xf32>
      %cst_147 = arith.constant 2.500000e-01 : f32
      %157 = vector.broadcast %cst_147 : f32 to vector<1x16xf32>
      %158 = arith.mulf %156, %157 : vector<1x16xf32>
      %c0_148 = arith.constant 0 : index
      %c16_149 = arith.constant 16 : index
      %c3_150 = arith.constant 3 : index
      %159 = vector.load %arg7[%c0_148, %c16_149, %c3_150] : memref<2x22x22xf32, #tpu.memory_space<vmem>>, vector<1x1x16xf32>
      %160 = vector.shape_cast %159 : vector<1x1x16xf32> to vector<1x16xf32>
      %161 = vector.shape_cast %158 : vector<1x16xf32> to vector<1x1x16xf32>
      tpu.vector_store %arg7[%c0_148, %c16_149, %c3_150], %161 {strides = array<i32>} : memref<2x22x22xf32, #tpu.memory_space<vmem>>, vector<1x1x16xf32>,
      %c0_151 = arith.constant 0 : index
      %c208_152 = arith.constant 208 : index
      %162 = vector.load %arg6[%c0_151, %c208_152] : memref<1x256xf32, #tpu.memory_space<vmem>>, vector<1x16xf32>
      %c1_153 = arith.constant 1 : index
      %c16_154 = arith.constant 16 : index
      %c3_155 = arith.constant 3 : index
      %163 = vector.load %arg7[%c1_153, %c16_154, %c3_155] : memref<2x22x22xf32, #tpu.memory_space<vmem>>, vector<1x1x16xf32>
      %164 = vector.shape_cast %163 : vector<1x1x16xf32> to vector<1x16xf32>
      %165 = vector.shape_cast %162 : vector<1x16xf32> to vector<1x1x16xf32>
      tpu.vector_store %arg7[%c1_153, %c16_154, %c3_155], %165 {strides = array<i32>} : memref<2x22x22xf32, #tpu.memory_space<vmem>>, vector<1x1x16xf32>,
      %c0_156 = arith.constant 0 : index
      %c224 = arith.constant 224 : index
      %166 = vector.load %arg5[%c0_156, %c224] : memref<1x256xf32, #tpu.memory_space<vmem>>, vector<1x16xf32>
      %cst_157 = arith.constant 2.500000e-01 : f32
      %167 = vector.broadcast %cst_157 : f32 to vector<1x16xf32>
      %168 = arith.mulf %166, %167 : vector<1x16xf32>
      %c0_158 = arith.constant 0 : index
      %c17 = arith.constant 17 : index
      %c3_159 = arith.constant 3 : index
      %169 = vector.load %arg7[%c0_158, %c17, %c3_159] : memref<2x22x22xf32, #tpu.memory_space<vmem>>, vector<1x1x16xf32>
      %170 = vector.shape_cast %169 : vector<1x1x16xf32> to vector<1x16xf32>
      %171 = vector.shape_cast %168 : vector<1x16xf32> to vector<1x1x16xf32>
      tpu.vector_store %arg7[%c0_158, %c17, %c3_159], %171 {strides = array<i32>} : memref<2x22x22xf32, #tpu.memory_space<vmem>>, vector<1x1x16xf32>,
      %c0_160 = arith.constant 0 : index
      %c224_161 = arith.constant 224 : index
      %172 = vector.load %arg6[%c0_160, %c224_161] : memref<1x256xf32, #tpu.memory_space<vmem>>, vector<1x16xf32>
      %c1_162 = arith.constant 1 : index
      %c17_163 = arith.constant 17 : index
      %c3_164 = arith.constant 3 : index
      %173 = vector.load %arg7[%c1_162, %c17_163, %c3_164] : memref<2x22x22xf32, #tpu.memory_space<vmem>>, vector<1x1x16xf32>
      %174 = vector.shape_cast %173 : vector<1x1x16xf32> to vector<1x16xf32>
      %175 = vector.shape_cast %172 : vector<1x16xf32> to vector<1x1x16xf32>
      tpu.vector_store %arg7[%c1_162, %c17_163, %c3_164], %175 {strides = array<i32>} : memref<2x22x22xf32, #tpu.memory_space<vmem>>, vector<1x1x16xf32>,
      %c0_165 = arith.constant 0 : index
      %c240 = arith.constant 240 : index
      %176 = vector.load %arg5[%c0_165, %c240] : memref<1x256xf32, #tpu.memory_space<vmem>>, vector<1x16xf32>
      %cst_166 = arith.constant 2.500000e-01 : f32
      %177 = vector.broadcast %cst_166 : f32 to vector<1x16xf32>
      %178 = arith.mulf %176, %177 : vector<1x16xf32>
      %c0_167 = arith.constant 0 : index
      %c18 = arith.constant 18 : index
      %c3_168 = arith.constant 3 : index
      %179 = vector.load %arg7[%c0_167, %c18, %c3_168] : memref<2x22x22xf32, #tpu.memory_space<vmem>>, vector<1x1x16xf32>
      %180 = vector.shape_cast %179 : vector<1x1x16xf32> to vector<1x16xf32>
      %181 = vector.shape_cast %178 : vector<1x16xf32> to vector<1x1x16xf32>
      tpu.vector_store %arg7[%c0_167, %c18, %c3_168], %181 {strides = array<i32>} : memref<2x22x22xf32, #tpu.memory_space<vmem>>, vector<1x1x16xf32>,
      %c0_169 = arith.constant 0 : index
      %c240_170 = arith.constant 240 : index
      %182 = vector.load %arg6[%c0_169, %c240_170] : memref<1x256xf32, #tpu.memory_space<vmem>>, vector<1x16xf32>
      %c1_171 = arith.constant 1 : index
      %c18_172 = arith.constant 18 : index
      %c3_173 = arith.constant 3 : index
      %183 = vector.load %arg7[%c1_171, %c18_172, %c3_173] : memref<2x22x22xf32, #tpu.memory_space<vmem>>, vector<1x1x16xf32>
      %184 = vector.shape_cast %183 : vector<1x1x16xf32> to vector<1x16xf32>
      %185 = vector.shape_cast %182 : vector<1x16xf32> to vector<1x1x16xf32>
      tpu.vector_store %arg7[%c1_171, %c18_172, %c3_173], %185 {strides = array<i32>} : memref<2x22x22xf32, #tpu.memory_space<vmem>>, vector<1x1x16xf32>,
      %cst_174 = arith.constant 0.000000e+00 : f32
      %186 = vector.broadcast %cst_174 : f32 to vector<16x16xf32>
      %c0_175 = arith.constant 0 : index
      %187 = memref.load %arg3[%c0_175] : memref<98xf32, #tpu.memory_space<smem>>
      %c0_176 = arith.constant 0 : index
      %c0_177 = arith.constant 0 : index
      %c0_178 = arith.constant 0 : index
      %188 = vector.load %arg7[%c0_176, %c0_177, %c0_178] : memref<2x22x22xf32, #tpu.memory_space<vmem>>, vector<1x16x16xf32>
      %189 = vector.shape_cast %188 : vector<1x16x16xf32> to vector<16x16xf32>
      %190 = vector.broadcast %187 : f32 to vector<16x16xf32>
      %191 = arith.mulf %190, %189 : vector<16x16xf32>
      %192 = arith.addf %186, %191 : vector<16x16xf32>
      %c1_179 = arith.constant 1 : index
      %193 = memref.load %arg3[%c1_179] : memref<98xf32, #tpu.memory_space<smem>>
      %c0_180 = arith.constant 0 : index
      %c0_181 = arith.constant 0 : index
      %c1_182 = arith.constant 1 : index
      %194 = vector.load %arg7[%c0_180, %c0_181, %c1_182] : memref<2x22x22xf32, #tpu.memory_space<vmem>>, vector<1x16x16xf32>
      %195 = vector.shape_cast %194 : vector<1x16x16xf32> to vector<16x16xf32>
      %196 = vector.broadcast %193 : f32 to vector<16x16xf32>
      %197 = arith.mulf %196, %195 : vector<16x16xf32>
      %198 = arith.addf %192, %197 : vector<16x16xf32>
      %c2 = arith.constant 2 : index
      %199 = memref.load %arg3[%c2] : memref<98xf32, #tpu.memory_space<smem>>
      %c0_183 = arith.constant 0 : index
      %c0_184 = arith.constant 0 : index
      %c2_185 = arith.constant 2 : index
      %200 = vector.load %arg7[%c0_183, %c0_184, %c2_185] : memref<2x22x22xf32, #tpu.memory_space<vmem>>, vector<1x16x16xf32>
      %201 = vector.shape_cast %200 : vector<1x16x16xf32> to vector<16x16xf32>
      %202 = vector.broadcast %199 : f32 to vector<16x16xf32>
      %203 = arith.mulf %202, %201 : vector<16x16xf32>
      %204 = arith.addf %198, %203 : vector<16x16xf32>
      %c3_186 = arith.constant 3 : index
      %205 = memref.load %arg3[%c3_186] : memref<98xf32, #tpu.memory_space<smem>>
      %c0_187 = arith.constant 0 : index
      %c0_188 = arith.constant 0 : index
      %c3_189 = arith.constant 3 : index
      %206 = vector.load %arg7[%c0_187, %c0_188, %c3_189] : memref<2x22x22xf32, #tpu.memory_space<vmem>>, vector<1x16x16xf32>
      %207 = vector.shape_cast %206 : vector<1x16x16xf32> to vector<16x16xf32>
      %208 = vector.broadcast %205 : f32 to vector<16x16xf32>
      %209 = arith.mulf %208, %207 : vector<16x16xf32>
      %210 = arith.addf %204, %209 : vector<16x16xf32>
      %c4_190 = arith.constant 4 : index
      %211 = memref.load %arg3[%c4_190] : memref<98xf32, #tpu.memory_space<smem>>
      %c0_191 = arith.constant 0 : index
      %c0_192 = arith.constant 0 : index
      %c4_193 = arith.constant 4 : index
      %212 = vector.load %arg7[%c0_191, %c0_192, %c4_193] : memref<2x22x22xf32, #tpu.memory_space<vmem>>, vector<1x16x16xf32>
      %213 = vector.shape_cast %212 : vector<1x16x16xf32> to vector<16x16xf32>
      %214 = vector.broadcast %211 : f32 to vector<16x16xf32>
      %215 = arith.mulf %214, %213 : vector<16x16xf32>
      %216 = arith.addf %210, %215 : vector<16x16xf32>
      %c5_194 = arith.constant 5 : index
      %217 = memref.load %arg3[%c5_194] : memref<98xf32, #tpu.memory_space<smem>>
      %c0_195 = arith.constant 0 : index
      %c0_196 = arith.constant 0 : index
      %c5_197 = arith.constant 5 : index
      %218 = vector.load %arg7[%c0_195, %c0_196, %c5_197] : memref<2x22x22xf32, #tpu.memory_space<vmem>>, vector<1x16x16xf32>
      %219 = vector.shape_cast %218 : vector<1x16x16xf32> to vector<16x16xf32>
      %220 = vector.broadcast %217 : f32 to vector<16x16xf32>
      %221 = arith.mulf %220, %219 : vector<16x16xf32>
      %222 = arith.addf %216, %221 : vector<16x16xf32>
      %c6_198 = arith.constant 6 : index
      %223 = memref.load %arg3[%c6_198] : memref<98xf32, #tpu.memory_space<smem>>
      %c0_199 = arith.constant 0 : index
      %c0_200 = arith.constant 0 : index
      %c6_201 = arith.constant 6 : index
      %224 = vector.load %arg7[%c0_199, %c0_200, %c6_201] : memref<2x22x22xf32, #tpu.memory_space<vmem>>, vector<1x16x16xf32>
      %225 = vector.shape_cast %224 : vector<1x16x16xf32> to vector<16x16xf32>
      %226 = vector.broadcast %223 : f32 to vector<16x16xf32>
      %227 = arith.mulf %226, %225 : vector<16x16xf32>
      %228 = arith.addf %222, %227 : vector<16x16xf32>
      %c7_202 = arith.constant 7 : index
      %229 = memref.load %arg3[%c7_202] : memref<98xf32, #tpu.memory_space<smem>>
      %c0_203 = arith.constant 0 : index
      %c1_204 = arith.constant 1 : index
      %c0_205 = arith.constant 0 : index
      %230 = vector.load %arg7[%c0_203, %c1_204, %c0_205] : memref<2x22x22xf32, #tpu.memory_space<vmem>>, vector<1x16x16xf32>
      %231 = vector.shape_cast %230 : vector<1x16x16xf32> to vector<16x16xf32>
      %232 = vector.broadcast %229 : f32 to vector<16x16xf32>
      %233 = arith.mulf %232, %231 : vector<16x16xf32>
      %234 = arith.addf %228, %233 : vector<16x16xf32>
      %c8_206 = arith.constant 8 : index
      %235 = memref.load %arg3[%c8_206] : memref<98xf32, #tpu.memory_space<smem>>
      %c0_207 = arith.constant 0 : index
      %c1_208 = arith.constant 1 : index
      %c1_209 = arith.constant 1 : index
      %236 = vector.load %arg7[%c0_207, %c1_208, %c1_209] : memref<2x22x22xf32, #tpu.memory_space<vmem>>, vector<1x16x16xf32>
      %237 = vector.shape_cast %236 : vector<1x16x16xf32> to vector<16x16xf32>
      %238 = vector.broadcast %235 : f32 to vector<16x16xf32>
      %239 = arith.mulf %238, %237 : vector<16x16xf32>
      %240 = arith.addf %234, %239 : vector<16x16xf32>
      %c9_210 = arith.constant 9 : index
      %241 = memref.load %arg3[%c9_210] : memref<98xf32, #tpu.memory_space<smem>>
      %c0_211 = arith.constant 0 : index
      %c1_212 = arith.constant 1 : index
      %c2_213 = arith.constant 2 : index
      %242 = vector.load %arg7[%c0_211, %c1_212, %c2_213] : memref<2x22x22xf32, #tpu.memory_space<vmem>>, vector<1x16x16xf32>
      %243 = vector.shape_cast %242 : vector<1x16x16xf32> to vector<16x16xf32>
      %244 = vector.broadcast %241 : f32 to vector<16x16xf32>
      %245 = arith.mulf %244, %243 : vector<16x16xf32>
      %246 = arith.addf %240, %245 : vector<16x16xf32>
      %c10_214 = arith.constant 10 : index
      %247 = memref.load %arg3[%c10_214] : memref<98xf32, #tpu.memory_space<smem>>
      %c0_215 = arith.constant 0 : index
      %c1_216 = arith.constant 1 : index
      %c3_217 = arith.constant 3 : index
      %248 = vector.load %arg7[%c0_215, %c1_216, %c3_217] : memref<2x22x22xf32, #tpu.memory_space<vmem>>, vector<1x16x16xf32>
      %249 = vector.shape_cast %248 : vector<1x16x16xf32> to vector<16x16xf32>
      %250 = vector.broadcast %247 : f32 to vector<16x16xf32>
      %251 = arith.mulf %250, %249 : vector<16x16xf32>
      %252 = arith.addf %246, %251 : vector<16x16xf32>
      %c11_218 = arith.constant 11 : index
      %253 = memref.load %arg3[%c11_218] : memref<98xf32, #tpu.memory_space<smem>>
      %c0_219 = arith.constant 0 : index
      %c1_220 = arith.constant 1 : index
      %c4_221 = arith.constant 4 : index
      %254 = vector.load %arg7[%c0_219, %c1_220, %c4_221] : memref<2x22x22xf32, #tpu.memory_space<vmem>>, vector<1x16x16xf32>
      %255 = vector.shape_cast %254 : vector<1x16x16xf32> to vector<16x16xf32>
      %256 = vector.broadcast %253 : f32 to vector<16x16xf32>
      %257 = arith.mulf %256, %255 : vector<16x16xf32>
      %258 = arith.addf %252, %257 : vector<16x16xf32>
      %c12_222 = arith.constant 12 : index
      %259 = memref.load %arg3[%c12_222] : memref<98xf32, #tpu.memory_space<smem>>
      %c0_223 = arith.constant 0 : index
      %c1_224 = arith.constant 1 : index
      %c5_225 = arith.constant 5 : index
      %260 = vector.load %arg7[%c0_223, %c1_224, %c5_225] : memref<2x22x22xf32, #tpu.memory_space<vmem>>, vector<1x16x16xf32>
      %261 = vector.shape_cast %260 : vector<1x16x16xf32> to vector<16x16xf32>
      %262 = vector.broadcast %259 : f32 to vector<16x16xf32>
      %263 = arith.mulf %262, %261 : vector<16x16xf32>
      %264 = arith.addf %258, %263 : vector<16x16xf32>
      %c13_226 = arith.constant 13 : index
      %265 = memref.load %arg3[%c13_226] : memref<98xf32, #tpu.memory_space<smem>>
      %c0_227 = arith.constant 0 : index
      %c1_228 = arith.constant 1 : index
      %c6_229 = arith.constant 6 : index
      %266 = vector.load %arg7[%c0_227, %c1_228, %c6_229] : memref<2x22x22xf32, #tpu.memory_space<vmem>>, vector<1x16x16xf32>
      %267 = vector.shape_cast %266 : vector<1x16x16xf32> to vector<16x16xf32>
      %268 = vector.broadcast %265 : f32 to vector<16x16xf32>
      %269 = arith.mulf %268, %267 : vector<16x16xf32>
      %270 = arith.addf %264, %269 : vector<16x16xf32>
      %c14_230 = arith.constant 14 : index
      %271 = memref.load %arg3[%c14_230] : memref<98xf32, #tpu.memory_space<smem>>
      %c0_231 = arith.constant 0 : index
      %c2_232 = arith.constant 2 : index
      %c0_233 = arith.constant 0 : index
      %272 = vector.load %arg7[%c0_231, %c2_232, %c0_233] : memref<2x22x22xf32, #tpu.memory_space<vmem>>, vector<1x16x16xf32>
      %273 = vector.shape_cast %272 : vector<1x16x16xf32> to vector<16x16xf32>
      %274 = vector.broadcast %271 : f32 to vector<16x16xf32>
      %275 = arith.mulf %274, %273 : vector<16x16xf32>
      %276 = arith.addf %270, %275 : vector<16x16xf32>
      %c15_234 = arith.constant 15 : index
      %277 = memref.load %arg3[%c15_234] : memref<98xf32, #tpu.memory_space<smem>>
      %c0_235 = arith.constant 0 : index
      %c2_236 = arith.constant 2 : index
      %c1_237 = arith.constant 1 : index
      %278 = vector.load %arg7[%c0_235, %c2_236, %c1_237] : memref<2x22x22xf32, #tpu.memory_space<vmem>>, vector<1x16x16xf32>
      %279 = vector.shape_cast %278 : vector<1x16x16xf32> to vector<16x16xf32>
      %280 = vector.broadcast %277 : f32 to vector<16x16xf32>
      %281 = arith.mulf %280, %279 : vector<16x16xf32>
      %282 = arith.addf %276, %281 : vector<16x16xf32>
      %c16_238 = arith.constant 16 : index
      %283 = memref.load %arg3[%c16_238] : memref<98xf32, #tpu.memory_space<smem>>
      %c0_239 = arith.constant 0 : index
      %c2_240 = arith.constant 2 : index
      %c2_241 = arith.constant 2 : index
      %284 = vector.load %arg7[%c0_239, %c2_240, %c2_241] : memref<2x22x22xf32, #tpu.memory_space<vmem>>, vector<1x16x16xf32>
      %285 = vector.shape_cast %284 : vector<1x16x16xf32> to vector<16x16xf32>
      %286 = vector.broadcast %283 : f32 to vector<16x16xf32>
      %287 = arith.mulf %286, %285 : vector<16x16xf32>
      %288 = arith.addf %282, %287 : vector<16x16xf32>
      %c17_242 = arith.constant 17 : index
      %289 = memref.load %arg3[%c17_242] : memref<98xf32, #tpu.memory_space<smem>>
      %c0_243 = arith.constant 0 : index
      %c2_244 = arith.constant 2 : index
      %c3_245 = arith.constant 3 : index
      %290 = vector.load %arg7[%c0_243, %c2_244, %c3_245] : memref<2x22x22xf32, #tpu.memory_space<vmem>>, vector<1x16x16xf32>
      %291 = vector.shape_cast %290 : vector<1x16x16xf32> to vector<16x16xf32>
      %292 = vector.broadcast %289 : f32 to vector<16x16xf32>
      %293 = arith.mulf %292, %291 : vector<16x16xf32>
      %294 = arith.addf %288, %293 : vector<16x16xf32>
      %c18_246 = arith.constant 18 : index
      %295 = memref.load %arg3[%c18_246] : memref<98xf32, #tpu.memory_space<smem>>
      %c0_247 = arith.constant 0 : index
      %c2_248 = arith.constant 2 : index
      %c4_249 = arith.constant 4 : index
      %296 = vector.load %arg7[%c0_247, %c2_248, %c4_249] : memref<2x22x22xf32, #tpu.memory_space<vmem>>, vector<1x16x16xf32>
      %297 = vector.shape_cast %296 : vector<1x16x16xf32> to vector<16x16xf32>
      %298 = vector.broadcast %295 : f32 to vector<16x16xf32>
      %299 = arith.mulf %298, %297 : vector<16x16xf32>
      %300 = arith.addf %294, %299 : vector<16x16xf32>
      %c19_250 = arith.constant 19 : index
      %301 = memref.load %arg3[%c19_250] : memref<98xf32, #tpu.memory_space<smem>>
      %c0_251 = arith.constant 0 : index
      %c2_252 = arith.constant 2 : index
      %c5_253 = arith.constant 5 : index
      %302 = vector.load %arg7[%c0_251, %c2_252, %c5_253] : memref<2x22x22xf32, #tpu.memory_space<vmem>>, vector<1x16x16xf32>
      %303 = vector.shape_cast %302 : vector<1x16x16xf32> to vector<16x16xf32>
      %304 = vector.broadcast %301 : f32 to vector<16x16xf32>
      %305 = arith.mulf %304, %303 : vector<16x16xf32>
      %306 = arith.addf %300, %305 : vector<16x16xf32>
      %c20 = arith.constant 20 : index
      %307 = memref.load %arg3[%c20] : memref<98xf32, #tpu.memory_space<smem>>
      %c0_254 = arith.constant 0 : index
      %c2_255 = arith.constant 2 : index
      %c6_256 = arith.constant 6 : index
      %308 = vector.load %arg7[%c0_254, %c2_255, %c6_256] : memref<2x22x22xf32, #tpu.memory_space<vmem>>, vector<1x16x16xf32>
      %309 = vector.shape_cast %308 : vector<1x16x16xf32> to vector<16x16xf32>
      %310 = vector.broadcast %307 : f32 to vector<16x16xf32>
      %311 = arith.mulf %310, %309 : vector<16x16xf32>
      %312 = arith.addf %306, %311 : vector<16x16xf32>
      %c21 = arith.constant 21 : index
      %313 = memref.load %arg3[%c21] : memref<98xf32, #tpu.memory_space<smem>>
      %c0_257 = arith.constant 0 : index
      %c3_258 = arith.constant 3 : index
      %c0_259 = arith.constant 0 : index
      %314 = vector.load %arg7[%c0_257, %c3_258, %c0_259] : memref<2x22x22xf32, #tpu.memory_space<vmem>>, vector<1x16x16xf32>
      %315 = vector.shape_cast %314 : vector<1x16x16xf32> to vector<16x16xf32>
      %316 = vector.broadcast %313 : f32 to vector<16x16xf32>
      %317 = arith.mulf %316, %315 : vector<16x16xf32>
      %318 = arith.addf %312, %317 : vector<16x16xf32>
      %c22 = arith.constant 22 : index
      %319 = memref.load %arg3[%c22] : memref<98xf32, #tpu.memory_space<smem>>
      %c0_260 = arith.constant 0 : index
      %c3_261 = arith.constant 3 : index
      %c1_262 = arith.constant 1 : index
      %320 = vector.load %arg7[%c0_260, %c3_261, %c1_262] : memref<2x22x22xf32, #tpu.memory_space<vmem>>, vector<1x16x16xf32>
      %321 = vector.shape_cast %320 : vector<1x16x16xf32> to vector<16x16xf32>
      %322 = vector.broadcast %319 : f32 to vector<16x16xf32>
      %323 = arith.mulf %322, %321 : vector<16x16xf32>
      %324 = arith.addf %318, %323 : vector<16x16xf32>
      %c23 = arith.constant 23 : index
      %325 = memref.load %arg3[%c23] : memref<98xf32, #tpu.memory_space<smem>>
      %c0_263 = arith.constant 0 : index
      %c3_264 = arith.constant 3 : index
      %c2_265 = arith.constant 2 : index
      %326 = vector.load %arg7[%c0_263, %c3_264, %c2_265] : memref<2x22x22xf32, #tpu.memory_space<vmem>>, vector<1x16x16xf32>
      %327 = vector.shape_cast %326 : vector<1x16x16xf32> to vector<16x16xf32>
      %328 = vector.broadcast %325 : f32 to vector<16x16xf32>
      %329 = arith.mulf %328, %327 : vector<16x16xf32>
      %330 = arith.addf %324, %329 : vector<16x16xf32>
      %c24 = arith.constant 24 : index
      %331 = memref.load %arg3[%c24] : memref<98xf32, #tpu.memory_space<smem>>
      %c0_266 = arith.constant 0 : index
      %c3_267 = arith.constant 3 : index
      %c3_268 = arith.constant 3 : index
      %332 = vector.load %arg7[%c0_266, %c3_267, %c3_268] : memref<2x22x22xf32, #tpu.memory_space<vmem>>, vector<1x16x16xf32>
      %333 = vector.shape_cast %332 : vector<1x16x16xf32> to vector<16x16xf32>
      %334 = vector.broadcast %331 : f32 to vector<16x16xf32>
      %335 = arith.mulf %334, %333 : vector<16x16xf32>
      %336 = arith.addf %330, %335 : vector<16x16xf32>
      %c25 = arith.constant 25 : index
      %337 = memref.load %arg3[%c25] : memref<98xf32, #tpu.memory_space<smem>>
      %c0_269 = arith.constant 0 : index
      %c3_270 = arith.constant 3 : index
      %c4_271 = arith.constant 4 : index
      %338 = vector.load %arg7[%c0_269, %c3_270, %c4_271] : memref<2x22x22xf32, #tpu.memory_space<vmem>>, vector<1x16x16xf32>
      %339 = vector.shape_cast %338 : vector<1x16x16xf32> to vector<16x16xf32>
      %340 = vector.broadcast %337 : f32 to vector<16x16xf32>
      %341 = arith.mulf %340, %339 : vector<16x16xf32>
      %342 = arith.addf %336, %341 : vector<16x16xf32>
      %c26 = arith.constant 26 : index
      %343 = memref.load %arg3[%c26] : memref<98xf32, #tpu.memory_space<smem>>
      %c0_272 = arith.constant 0 : index
      %c3_273 = arith.constant 3 : index
      %c5_274 = arith.constant 5 : index
      %344 = vector.load %arg7[%c0_272, %c3_273, %c5_274] : memref<2x22x22xf32, #tpu.memory_space<vmem>>, vector<1x16x16xf32>
      %345 = vector.shape_cast %344 : vector<1x16x16xf32> to vector<16x16xf32>
      %346 = vector.broadcast %343 : f32 to vector<16x16xf32>
      %347 = arith.mulf %346, %345 : vector<16x16xf32>
      %348 = arith.addf %342, %347 : vector<16x16xf32>
      %c27 = arith.constant 27 : index
      %349 = memref.load %arg3[%c27] : memref<98xf32, #tpu.memory_space<smem>>
      %c0_275 = arith.constant 0 : index
      %c3_276 = arith.constant 3 : index
      %c6_277 = arith.constant 6 : index
      %350 = vector.load %arg7[%c0_275, %c3_276, %c6_277] : memref<2x22x22xf32, #tpu.memory_space<vmem>>, vector<1x16x16xf32>
      %351 = vector.shape_cast %350 : vector<1x16x16xf32> to vector<16x16xf32>
      %352 = vector.broadcast %349 : f32 to vector<16x16xf32>
      %353 = arith.mulf %352, %351 : vector<16x16xf32>
      %354 = arith.addf %348, %353 : vector<16x16xf32>
      %c28 = arith.constant 28 : index
      %355 = memref.load %arg3[%c28] : memref<98xf32, #tpu.memory_space<smem>>
      %c0_278 = arith.constant 0 : index
      %c4_279 = arith.constant 4 : index
      %c0_280 = arith.constant 0 : index
      %356 = vector.load %arg7[%c0_278, %c4_279, %c0_280] : memref<2x22x22xf32, #tpu.memory_space<vmem>>, vector<1x16x16xf32>
      %357 = vector.shape_cast %356 : vector<1x16x16xf32> to vector<16x16xf32>
      %358 = vector.broadcast %355 : f32 to vector<16x16xf32>
      %359 = arith.mulf %358, %357 : vector<16x16xf32>
      %360 = arith.addf %354, %359 : vector<16x16xf32>
      %c29 = arith.constant 29 : index
      %361 = memref.load %arg3[%c29] : memref<98xf32, #tpu.memory_space<smem>>
      %c0_281 = arith.constant 0 : index
      %c4_282 = arith.constant 4 : index
      %c1_283 = arith.constant 1 : index
      %362 = vector.load %arg7[%c0_281, %c4_282, %c1_283] : memref<2x22x22xf32, #tpu.memory_space<vmem>>, vector<1x16x16xf32>
      %363 = vector.shape_cast %362 : vector<1x16x16xf32> to vector<16x16xf32>
      %364 = vector.broadcast %361 : f32 to vector<16x16xf32>
      %365 = arith.mulf %364, %363 : vector<16x16xf32>
      %366 = arith.addf %360, %365 : vector<16x16xf32>
      %c30 = arith.constant 30 : index
      %367 = memref.load %arg3[%c30] : memref<98xf32, #tpu.memory_space<smem>>
      %c0_284 = arith.constant 0 : index
      %c4_285 = arith.constant 4 : index
      %c2_286 = arith.constant 2 : index
      %368 = vector.load %arg7[%c0_284, %c4_285, %c2_286] : memref<2x22x22xf32, #tpu.memory_space<vmem>>, vector<1x16x16xf32>
      %369 = vector.shape_cast %368 : vector<1x16x16xf32> to vector<16x16xf32>
      %370 = vector.broadcast %367 : f32 to vector<16x16xf32>
      %371 = arith.mulf %370, %369 : vector<16x16xf32>
      %372 = arith.addf %366, %371 : vector<16x16xf32>
      %c31 = arith.constant 31 : index
      %373 = memref.load %arg3[%c31] : memref<98xf32, #tpu.memory_space<smem>>
      %c0_287 = arith.constant 0 : index
      %c4_288 = arith.constant 4 : index
      %c3_289 = arith.constant 3 : index
      %374 = vector.load %arg7[%c0_287, %c4_288, %c3_289] : memref<2x22x22xf32, #tpu.memory_space<vmem>>, vector<1x16x16xf32>
      %375 = vector.shape_cast %374 : vector<1x16x16xf32> to vector<16x16xf32>
      %376 = vector.broadcast %373 : f32 to vector<16x16xf32>
      %377 = arith.mulf %376, %375 : vector<16x16xf32>
      %378 = arith.addf %372, %377 : vector<16x16xf32>
      %c32_290 = arith.constant 32 : index
      %379 = memref.load %arg3[%c32_290] : memref<98xf32, #tpu.memory_space<smem>>
      %c0_291 = arith.constant 0 : index
      %c4_292 = arith.constant 4 : index
      %c4_293 = arith.constant 4 : index
      %380 = vector.load %arg7[%c0_291, %c4_292, %c4_293] : memref<2x22x22xf32, #tpu.memory_space<vmem>>, vector<1x16x16xf32>
      %381 = vector.shape_cast %380 : vector<1x16x16xf32> to vector<16x16xf32>
      %382 = vector.broadcast %379 : f32 to vector<16x16xf32>
      %383 = arith.mulf %382, %381 : vector<16x16xf32>
      %384 = arith.addf %378, %383 : vector<16x16xf32>
      %c33 = arith.constant 33 : index
      %385 = memref.load %arg3[%c33] : memref<98xf32, #tpu.memory_space<smem>>
      %c0_294 = arith.constant 0 : index
      %c4_295 = arith.constant 4 : index
      %c5_296 = arith.constant 5 : index
      %386 = vector.load %arg7[%c0_294, %c4_295, %c5_296] : memref<2x22x22xf32, #tpu.memory_space<vmem>>, vector<1x16x16xf32>
      %387 = vector.shape_cast %386 : vector<1x16x16xf32> to vector<16x16xf32>
      %388 = vector.broadcast %385 : f32 to vector<16x16xf32>
      %389 = arith.mulf %388, %387 : vector<16x16xf32>
      %390 = arith.addf %384, %389 : vector<16x16xf32>
      %c34 = arith.constant 34 : index
      %391 = memref.load %arg3[%c34] : memref<98xf32, #tpu.memory_space<smem>>
      %c0_297 = arith.constant 0 : index
      %c4_298 = arith.constant 4 : index
      %c6_299 = arith.constant 6 : index
      %392 = vector.load %arg7[%c0_297, %c4_298, %c6_299] : memref<2x22x22xf32, #tpu.memory_space<vmem>>, vector<1x16x16xf32>
      %393 = vector.shape_cast %392 : vector<1x16x16xf32> to vector<16x16xf32>
      %394 = vector.broadcast %391 : f32 to vector<16x16xf32>
      %395 = arith.mulf %394, %393 : vector<16x16xf32>
      %396 = arith.addf %390, %395 : vector<16x16xf32>
      %c35 = arith.constant 35 : index
      %397 = memref.load %arg3[%c35] : memref<98xf32, #tpu.memory_space<smem>>
      %c0_300 = arith.constant 0 : index
      %c5_301 = arith.constant 5 : index
      %c0_302 = arith.constant 0 : index
      %398 = vector.load %arg7[%c0_300, %c5_301, %c0_302] : memref<2x22x22xf32, #tpu.memory_space<vmem>>, vector<1x16x16xf32>
      %399 = vector.shape_cast %398 : vector<1x16x16xf32> to vector<16x16xf32>
      %400 = vector.broadcast %397 : f32 to vector<16x16xf32>
      %401 = arith.mulf %400, %399 : vector<16x16xf32>
      %402 = arith.addf %396, %401 : vector<16x16xf32>
      %c36 = arith.constant 36 : index
      %403 = memref.load %arg3[%c36] : memref<98xf32, #tpu.memory_space<smem>>
      %c0_303 = arith.constant 0 : index
      %c5_304 = arith.constant 5 : index
      %c1_305 = arith.constant 1 : index
      %404 = vector.load %arg7[%c0_303, %c5_304, %c1_305] : memref<2x22x22xf32, #tpu.memory_space<vmem>>, vector<1x16x16xf32>
      %405 = vector.shape_cast %404 : vector<1x16x16xf32> to vector<16x16xf32>
      %406 = vector.broadcast %403 : f32 to vector<16x16xf32>
      %407 = arith.mulf %406, %405 : vector<16x16xf32>
      %408 = arith.addf %402, %407 : vector<16x16xf32>
      %c37 = arith.constant 37 : index
      %409 = memref.load %arg3[%c37] : memref<98xf32, #tpu.memory_space<smem>>
      %c0_306 = arith.constant 0 : index
      %c5_307 = arith.constant 5 : index
      %c2_308 = arith.constant 2 : index
      %410 = vector.load %arg7[%c0_306, %c5_307, %c2_308] : memref<2x22x22xf32, #tpu.memory_space<vmem>>, vector<1x16x16xf32>
      %411 = vector.shape_cast %410 : vector<1x16x16xf32> to vector<16x16xf32>
      %412 = vector.broadcast %409 : f32 to vector<16x16xf32>
      %413 = arith.mulf %412, %411 : vector<16x16xf32>
      %414 = arith.addf %408, %413 : vector<16x16xf32>
      %c38 = arith.constant 38 : index
      %415 = memref.load %arg3[%c38] : memref<98xf32, #tpu.memory_space<smem>>
      %c0_309 = arith.constant 0 : index
      %c5_310 = arith.constant 5 : index
      %c3_311 = arith.constant 3 : index
      %416 = vector.load %arg7[%c0_309, %c5_310, %c3_311] : memref<2x22x22xf32, #tpu.memory_space<vmem>>, vector<1x16x16xf32>
      %417 = vector.shape_cast %416 : vector<1x16x16xf32> to vector<16x16xf32>
      %418 = vector.broadcast %415 : f32 to vector<16x16xf32>
      %419 = arith.mulf %418, %417 : vector<16x16xf32>
      %420 = arith.addf %414, %419 : vector<16x16xf32>
      %c39 = arith.constant 39 : index
      %421 = memref.load %arg3[%c39] : memref<98xf32, #tpu.memory_space<smem>>
      %c0_312 = arith.constant 0 : index
      %c5_313 = arith.constant 5 : index
      %c4_314 = arith.constant 4 : index
      %422 = vector.load %arg7[%c0_312, %c5_313, %c4_314] : memref<2x22x22xf32, #tpu.memory_space<vmem>>, vector<1x16x16xf32>
      %423 = vector.shape_cast %422 : vector<1x16x16xf32> to vector<16x16xf32>
      %424 = vector.broadcast %421 : f32 to vector<16x16xf32>
      %425 = arith.mulf %424, %423 : vector<16x16xf32>
      %426 = arith.addf %420, %425 : vector<16x16xf32>
      %c40 = arith.constant 40 : index
      %427 = memref.load %arg3[%c40] : memref<98xf32, #tpu.memory_space<smem>>
      %c0_315 = arith.constant 0 : index
      %c5_316 = arith.constant 5 : index
      %c5_317 = arith.constant 5 : index
      %428 = vector.load %arg7[%c0_315, %c5_316, %c5_317] : memref<2x22x22xf32, #tpu.memory_space<vmem>>, vector<1x16x16xf32>
      %429 = vector.shape_cast %428 : vector<1x16x16xf32> to vector<16x16xf32>
      %430 = vector.broadcast %427 : f32 to vector<16x16xf32>
      %431 = arith.mulf %430, %429 : vector<16x16xf32>
      %432 = arith.addf %426, %431 : vector<16x16xf32>
      %c41 = arith.constant 41 : index
      %433 = memref.load %arg3[%c41] : memref<98xf32, #tpu.memory_space<smem>>
      %c0_318 = arith.constant 0 : index
      %c5_319 = arith.constant 5 : index
      %c6_320 = arith.constant 6 : index
      %434 = vector.load %arg7[%c0_318, %c5_319, %c6_320] : memref<2x22x22xf32, #tpu.memory_space<vmem>>, vector<1x16x16xf32>
      %435 = vector.shape_cast %434 : vector<1x16x16xf32> to vector<16x16xf32>
      %436 = vector.broadcast %433 : f32 to vector<16x16xf32>
      %437 = arith.mulf %436, %435 : vector<16x16xf32>
      %438 = arith.addf %432, %437 : vector<16x16xf32>
      %c42 = arith.constant 42 : index
      %439 = memref.load %arg3[%c42] : memref<98xf32, #tpu.memory_space<smem>>
      %c0_321 = arith.constant 0 : index
      %c6_322 = arith.constant 6 : index
      %c0_323 = arith.constant 0 : index
      %440 = vector.load %arg7[%c0_321, %c6_322, %c0_323] : memref<2x22x22xf32, #tpu.memory_space<vmem>>, vector<1x16x16xf32>
      %441 = vector.shape_cast %440 : vector<1x16x16xf32> to vector<16x16xf32>
      %442 = vector.broadcast %439 : f32 to vector<16x16xf32>
      %443 = arith.mulf %442, %441 : vector<16x16xf32>
      %444 = arith.addf %438, %443 : vector<16x16xf32>
      %c43 = arith.constant 43 : index
      %445 = memref.load %arg3[%c43] : memref<98xf32, #tpu.memory_space<smem>>
      %c0_324 = arith.constant 0 : index
      %c6_325 = arith.constant 6 : index
      %c1_326 = arith.constant 1 : index
      %446 = vector.load %arg7[%c0_324, %c6_325, %c1_326] : memref<2x22x22xf32, #tpu.memory_space<vmem>>, vector<1x16x16xf32>
      %447 = vector.shape_cast %446 : vector<1x16x16xf32> to vector<16x16xf32>
      %448 = vector.broadcast %445 : f32 to vector<16x16xf32>
      %449 = arith.mulf %448, %447 : vector<16x16xf32>
      %450 = arith.addf %444, %449 : vector<16x16xf32>
      %c44 = arith.constant 44 : index
      %451 = memref.load %arg3[%c44] : memref<98xf32, #tpu.memory_space<smem>>
      %c0_327 = arith.constant 0 : index
      %c6_328 = arith.constant 6 : index
      %c2_329 = arith.constant 2 : index
      %452 = vector.load %arg7[%c0_327, %c6_328, %c2_329] : memref<2x22x22xf32, #tpu.memory_space<vmem>>, vector<1x16x16xf32>
      %453 = vector.shape_cast %452 : vector<1x16x16xf32> to vector<16x16xf32>
      %454 = vector.broadcast %451 : f32 to vector<16x16xf32>
      %455 = arith.mulf %454, %453 : vector<16x16xf32>
      %456 = arith.addf %450, %455 : vector<16x16xf32>
      %c45 = arith.constant 45 : index
      %457 = memref.load %arg3[%c45] : memref<98xf32, #tpu.memory_space<smem>>
      %c0_330 = arith.constant 0 : index
      %c6_331 = arith.constant 6 : index
      %c3_332 = arith.constant 3 : index
      %458 = vector.load %arg7[%c0_330, %c6_331, %c3_332] : memref<2x22x22xf32, #tpu.memory_space<vmem>>, vector<1x16x16xf32>
      %459 = vector.shape_cast %458 : vector<1x16x16xf32> to vector<16x16xf32>
      %460 = vector.broadcast %457 : f32 to vector<16x16xf32>
      %461 = arith.mulf %460, %459 : vector<16x16xf32>
      %462 = arith.addf %456, %461 : vector<16x16xf32>
      %c46 = arith.constant 46 : index
      %463 = memref.load %arg3[%c46] : memref<98xf32, #tpu.memory_space<smem>>
      %c0_333 = arith.constant 0 : index
      %c6_334 = arith.constant 6 : index
      %c4_335 = arith.constant 4 : index
      %464 = vector.load %arg7[%c0_333, %c6_334, %c4_335] : memref<2x22x22xf32, #tpu.memory_space<vmem>>, vector<1x16x16xf32>
      %465 = vector.shape_cast %464 : vector<1x16x16xf32> to vector<16x16xf32>
      %466 = vector.broadcast %463 : f32 to vector<16x16xf32>
      %467 = arith.mulf %466, %465 : vector<16x16xf32>
      %468 = arith.addf %462, %467 : vector<16x16xf32>
      %c47 = arith.constant 47 : index
      %469 = memref.load %arg3[%c47] : memref<98xf32, #tpu.memory_space<smem>>
      %c0_336 = arith.constant 0 : index
      %c6_337 = arith.constant 6 : index
      %c5_338 = arith.constant 5 : index
      %470 = vector.load %arg7[%c0_336, %c6_337, %c5_338] : memref<2x22x22xf32, #tpu.memory_space<vmem>>, vector<1x16x16xf32>
      %471 = vector.shape_cast %470 : vector<1x16x16xf32> to vector<16x16xf32>
      %472 = vector.broadcast %469 : f32 to vector<16x16xf32>
      %473 = arith.mulf %472, %471 : vector<16x16xf32>
      %474 = arith.addf %468, %473 : vector<16x16xf32>
      %c48_339 = arith.constant 48 : index
      %475 = memref.load %arg3[%c48_339] : memref<98xf32, #tpu.memory_space<smem>>
      %c0_340 = arith.constant 0 : index
      %c6_341 = arith.constant 6 : index
      %c6_342 = arith.constant 6 : index
      %476 = vector.load %arg7[%c0_340, %c6_341, %c6_342] : memref<2x22x22xf32, #tpu.memory_space<vmem>>, vector<1x16x16xf32>
      %477 = vector.shape_cast %476 : vector<1x16x16xf32> to vector<16x16xf32>
      %478 = vector.broadcast %475 : f32 to vector<16x16xf32>
      %479 = arith.mulf %478, %477 : vector<16x16xf32>
      %480 = arith.addf %474, %479 : vector<16x16xf32>
      %c49 = arith.constant 49 : index
      %481 = memref.load %arg3[%c49] : memref<98xf32, #tpu.memory_space<smem>>
      %c1_343 = arith.constant 1 : index
      %c0_344 = arith.constant 0 : index
      %c0_345 = arith.constant 0 : index
      %482 = vector.load %arg7[%c1_343, %c0_344, %c0_345] : memref<2x22x22xf32, #tpu.memory_space<vmem>>, vector<1x16x16xf32>
      %483 = vector.shape_cast %482 : vector<1x16x16xf32> to vector<16x16xf32>
      %484 = vector.broadcast %481 : f32 to vector<16x16xf32>
      %485 = arith.mulf %484, %483 : vector<16x16xf32>
      %486 = arith.addf %480, %485 : vector<16x16xf32>
      %c50 = arith.constant 50 : index
      %487 = memref.load %arg3[%c50] : memref<98xf32, #tpu.memory_space<smem>>
      %c1_346 = arith.constant 1 : index
      %c0_347 = arith.constant 0 : index
      %c1_348 = arith.constant 1 : index
      %488 = vector.load %arg7[%c1_346, %c0_347, %c1_348] : memref<2x22x22xf32, #tpu.memory_space<vmem>>, vector<1x16x16xf32>
      %489 = vector.shape_cast %488 : vector<1x16x16xf32> to vector<16x16xf32>
      %490 = vector.broadcast %487 : f32 to vector<16x16xf32>
      %491 = arith.mulf %490, %489 : vector<16x16xf32>
      %492 = arith.addf %486, %491 : vector<16x16xf32>
      %c51 = arith.constant 51 : index
      %493 = memref.load %arg3[%c51] : memref<98xf32, #tpu.memory_space<smem>>
      %c1_349 = arith.constant 1 : index
      %c0_350 = arith.constant 0 : index
      %c2_351 = arith.constant 2 : index
      %494 = vector.load %arg7[%c1_349, %c0_350, %c2_351] : memref<2x22x22xf32, #tpu.memory_space<vmem>>, vector<1x16x16xf32>
      %495 = vector.shape_cast %494 : vector<1x16x16xf32> to vector<16x16xf32>
      %496 = vector.broadcast %493 : f32 to vector<16x16xf32>
      %497 = arith.mulf %496, %495 : vector<16x16xf32>
      %498 = arith.addf %492, %497 : vector<16x16xf32>
      %c52 = arith.constant 52 : index
      %499 = memref.load %arg3[%c52] : memref<98xf32, #tpu.memory_space<smem>>
      %c1_352 = arith.constant 1 : index
      %c0_353 = arith.constant 0 : index
      %c3_354 = arith.constant 3 : index
      %500 = vector.load %arg7[%c1_352, %c0_353, %c3_354] : memref<2x22x22xf32, #tpu.memory_space<vmem>>, vector<1x16x16xf32>
      %501 = vector.shape_cast %500 : vector<1x16x16xf32> to vector<16x16xf32>
      %502 = vector.broadcast %499 : f32 to vector<16x16xf32>
      %503 = arith.mulf %502, %501 : vector<16x16xf32>
      %504 = arith.addf %498, %503 : vector<16x16xf32>
      %c53 = arith.constant 53 : index
      %505 = memref.load %arg3[%c53] : memref<98xf32, #tpu.memory_space<smem>>
      %c1_355 = arith.constant 1 : index
      %c0_356 = arith.constant 0 : index
      %c4_357 = arith.constant 4 : index
      %506 = vector.load %arg7[%c1_355, %c0_356, %c4_357] : memref<2x22x22xf32, #tpu.memory_space<vmem>>, vector<1x16x16xf32>
      %507 = vector.shape_cast %506 : vector<1x16x16xf32> to vector<16x16xf32>
      %508 = vector.broadcast %505 : f32 to vector<16x16xf32>
      %509 = arith.mulf %508, %507 : vector<16x16xf32>
      %510 = arith.addf %504, %509 : vector<16x16xf32>
      %c54 = arith.constant 54 : index
      %511 = memref.load %arg3[%c54] : memref<98xf32, #tpu.memory_space<smem>>
      %c1_358 = arith.constant 1 : index
      %c0_359 = arith.constant 0 : index
      %c5_360 = arith.constant 5 : index
      %512 = vector.load %arg7[%c1_358, %c0_359, %c5_360] : memref<2x22x22xf32, #tpu.memory_space<vmem>>, vector<1x16x16xf32>
      %513 = vector.shape_cast %512 : vector<1x16x16xf32> to vector<16x16xf32>
      %514 = vector.broadcast %511 : f32 to vector<16x16xf32>
      %515 = arith.mulf %514, %513 : vector<16x16xf32>
      %516 = arith.addf %510, %515 : vector<16x16xf32>
      %c55 = arith.constant 55 : index
      %517 = memref.load %arg3[%c55] : memref<98xf32, #tpu.memory_space<smem>>
      %c1_361 = arith.constant 1 : index
      %c0_362 = arith.constant 0 : index
      %c6_363 = arith.constant 6 : index
      %518 = vector.load %arg7[%c1_361, %c0_362, %c6_363] : memref<2x22x22xf32, #tpu.memory_space<vmem>>, vector<1x16x16xf32>
      %519 = vector.shape_cast %518 : vector<1x16x16xf32> to vector<16x16xf32>
      %520 = vector.broadcast %517 : f32 to vector<16x16xf32>
      %521 = arith.mulf %520, %519 : vector<16x16xf32>
      %522 = arith.addf %516, %521 : vector<16x16xf32>
      %c56 = arith.constant 56 : index
      %523 = memref.load %arg3[%c56] : memref<98xf32, #tpu.memory_space<smem>>
      %c1_364 = arith.constant 1 : index
      %c1_365 = arith.constant 1 : index
      %c0_366 = arith.constant 0 : index
      %524 = vector.load %arg7[%c1_364, %c1_365, %c0_366] : memref<2x22x22xf32, #tpu.memory_space<vmem>>, vector<1x16x16xf32>
      %525 = vector.shape_cast %524 : vector<1x16x16xf32> to vector<16x16xf32>
      %526 = vector.broadcast %523 : f32 to vector<16x16xf32>
      %527 = arith.mulf %526, %525 : vector<16x16xf32>
      %528 = arith.addf %522, %527 : vector<16x16xf32>
      %c57 = arith.constant 57 : index
      %529 = memref.load %arg3[%c57] : memref<98xf32, #tpu.memory_space<smem>>
      %c1_367 = arith.constant 1 : index
      %c1_368 = arith.constant 1 : index
      %c1_369 = arith.constant 1 : index
      %530 = vector.load %arg7[%c1_367, %c1_368, %c1_369] : memref<2x22x22xf32, #tpu.memory_space<vmem>>, vector<1x16x16xf32>
      %531 = vector.shape_cast %530 : vector<1x16x16xf32> to vector<16x16xf32>
      %532 = vector.broadcast %529 : f32 to vector<16x16xf32>
      %533 = arith.mulf %532, %531 : vector<16x16xf32>
      %534 = arith.addf %528, %533 : vector<16x16xf32>
      %c58 = arith.constant 58 : index
      %535 = memref.load %arg3[%c58] : memref<98xf32, #tpu.memory_space<smem>>
      %c1_370 = arith.constant 1 : index
      %c1_371 = arith.constant 1 : index
      %c2_372 = arith.constant 2 : index
      %536 = vector.load %arg7[%c1_370, %c1_371, %c2_372] : memref<2x22x22xf32, #tpu.memory_space<vmem>>, vector<1x16x16xf32>
      %537 = vector.shape_cast %536 : vector<1x16x16xf32> to vector<16x16xf32>
      %538 = vector.broadcast %535 : f32 to vector<16x16xf32>
      %539 = arith.mulf %538, %537 : vector<16x16xf32>
      %540 = arith.addf %534, %539 : vector<16x16xf32>
      %c59 = arith.constant 59 : index
      %541 = memref.load %arg3[%c59] : memref<98xf32, #tpu.memory_space<smem>>
      %c1_373 = arith.constant 1 : index
      %c1_374 = arith.constant 1 : index
      %c3_375 = arith.constant 3 : index
      %542 = vector.load %arg7[%c1_373, %c1_374, %c3_375] : memref<2x22x22xf32, #tpu.memory_space<vmem>>, vector<1x16x16xf32>
      %543 = vector.shape_cast %542 : vector<1x16x16xf32> to vector<16x16xf32>
      %544 = vector.broadcast %541 : f32 to vector<16x16xf32>
      %545 = arith.mulf %544, %543 : vector<16x16xf32>
      %546 = arith.addf %540, %545 : vector<16x16xf32>
      %c60 = arith.constant 60 : index
      %547 = memref.load %arg3[%c60] : memref<98xf32, #tpu.memory_space<smem>>
      %c1_376 = arith.constant 1 : index
      %c1_377 = arith.constant 1 : index
      %c4_378 = arith.constant 4 : index
      %548 = vector.load %arg7[%c1_376, %c1_377, %c4_378] : memref<2x22x22xf32, #tpu.memory_space<vmem>>, vector<1x16x16xf32>
      %549 = vector.shape_cast %548 : vector<1x16x16xf32> to vector<16x16xf32>
      %550 = vector.broadcast %547 : f32 to vector<16x16xf32>
      %551 = arith.mulf %550, %549 : vector<16x16xf32>
      %552 = arith.addf %546, %551 : vector<16x16xf32>
      %c61 = arith.constant 61 : index
      %553 = memref.load %arg3[%c61] : memref<98xf32, #tpu.memory_space<smem>>
      %c1_379 = arith.constant 1 : index
      %c1_380 = arith.constant 1 : index
      %c5_381 = arith.constant 5 : index
      %554 = vector.load %arg7[%c1_379, %c1_380, %c5_381] : memref<2x22x22xf32, #tpu.memory_space<vmem>>, vector<1x16x16xf32>
      %555 = vector.shape_cast %554 : vector<1x16x16xf32> to vector<16x16xf32>
      %556 = vector.broadcast %553 : f32 to vector<16x16xf32>
      %557 = arith.mulf %556, %555 : vector<16x16xf32>
      %558 = arith.addf %552, %557 : vector<16x16xf32>
      %c62 = arith.constant 62 : index
      %559 = memref.load %arg3[%c62] : memref<98xf32, #tpu.memory_space<smem>>
      %c1_382 = arith.constant 1 : index
      %c1_383 = arith.constant 1 : index
      %c6_384 = arith.constant 6 : index
      %560 = vector.load %arg7[%c1_382, %c1_383, %c6_384] : memref<2x22x22xf32, #tpu.memory_space<vmem>>, vector<1x16x16xf32>
      %561 = vector.shape_cast %560 : vector<1x16x16xf32> to vector<16x16xf32>
      %562 = vector.broadcast %559 : f32 to vector<16x16xf32>
      %563 = arith.mulf %562, %561 : vector<16x16xf32>
      %564 = arith.addf %558, %563 : vector<16x16xf32>
      %c63 = arith.constant 63 : index
      %565 = memref.load %arg3[%c63] : memref<98xf32, #tpu.memory_space<smem>>
      %c1_385 = arith.constant 1 : index
      %c2_386 = arith.constant 2 : index
      %c0_387 = arith.constant 0 : index
      %566 = vector.load %arg7[%c1_385, %c2_386, %c0_387] : memref<2x22x22xf32, #tpu.memory_space<vmem>>, vector<1x16x16xf32>
      %567 = vector.shape_cast %566 : vector<1x16x16xf32> to vector<16x16xf32>
      %568 = vector.broadcast %565 : f32 to vector<16x16xf32>
      %569 = arith.mulf %568, %567 : vector<16x16xf32>
      %570 = arith.addf %564, %569 : vector<16x16xf32>
      %c64_388 = arith.constant 64 : index
      %571 = memref.load %arg3[%c64_388] : memref<98xf32, #tpu.memory_space<smem>>
      %c1_389 = arith.constant 1 : index
      %c2_390 = arith.constant 2 : index
      %c1_391 = arith.constant 1 : index
      %572 = vector.load %arg7[%c1_389, %c2_390, %c1_391] : memref<2x22x22xf32, #tpu.memory_space<vmem>>, vector<1x16x16xf32>
      %573 = vector.shape_cast %572 : vector<1x16x16xf32> to vector<16x16xf32>
      %574 = vector.broadcast %571 : f32 to vector<16x16xf32>
      %575 = arith.mulf %574, %573 : vector<16x16xf32>
      %576 = arith.addf %570, %575 : vector<16x16xf32>
      %c65 = arith.constant 65 : index
      %577 = memref.load %arg3[%c65] : memref<98xf32, #tpu.memory_space<smem>>
      %c1_392 = arith.constant 1 : index
      %c2_393 = arith.constant 2 : index
      %c2_394 = arith.constant 2 : index
      %578 = vector.load %arg7[%c1_392, %c2_393, %c2_394] : memref<2x22x22xf32, #tpu.memory_space<vmem>>, vector<1x16x16xf32>
      %579 = vector.shape_cast %578 : vector<1x16x16xf32> to vector<16x16xf32>
      %580 = vector.broadcast %577 : f32 to vector<16x16xf32>
      %581 = arith.mulf %580, %579 : vector<16x16xf32>
      %582 = arith.addf %576, %581 : vector<16x16xf32>
      %c66 = arith.constant 66 : index
      %583 = memref.load %arg3[%c66] : memref<98xf32, #tpu.memory_space<smem>>
      %c1_395 = arith.constant 1 : index
      %c2_396 = arith.constant 2 : index
      %c3_397 = arith.constant 3 : index
      %584 = vector.load %arg7[%c1_395, %c2_396, %c3_397] : memref<2x22x22xf32, #tpu.memory_space<vmem>>, vector<1x16x16xf32>
      %585 = vector.shape_cast %584 : vector<1x16x16xf32> to vector<16x16xf32>
      %586 = vector.broadcast %583 : f32 to vector<16x16xf32>
      %587 = arith.mulf %586, %585 : vector<16x16xf32>
      %588 = arith.addf %582, %587 : vector<16x16xf32>
      %c67 = arith.constant 67 : index
      %589 = memref.load %arg3[%c67] : memref<98xf32, #tpu.memory_space<smem>>
      %c1_398 = arith.constant 1 : index
      %c2_399 = arith.constant 2 : index
      %c4_400 = arith.constant 4 : index
      %590 = vector.load %arg7[%c1_398, %c2_399, %c4_400] : memref<2x22x22xf32, #tpu.memory_space<vmem>>, vector<1x16x16xf32>
      %591 = vector.shape_cast %590 : vector<1x16x16xf32> to vector<16x16xf32>
      %592 = vector.broadcast %589 : f32 to vector<16x16xf32>
      %593 = arith.mulf %592, %591 : vector<16x16xf32>
      %594 = arith.addf %588, %593 : vector<16x16xf32>
      %c68 = arith.constant 68 : index
      %595 = memref.load %arg3[%c68] : memref<98xf32, #tpu.memory_space<smem>>
      %c1_401 = arith.constant 1 : index
      %c2_402 = arith.constant 2 : index
      %c5_403 = arith.constant 5 : index
      %596 = vector.load %arg7[%c1_401, %c2_402, %c5_403] : memref<2x22x22xf32, #tpu.memory_space<vmem>>, vector<1x16x16xf32>
      %597 = vector.shape_cast %596 : vector<1x16x16xf32> to vector<16x16xf32>
      %598 = vector.broadcast %595 : f32 to vector<16x16xf32>
      %599 = arith.mulf %598, %597 : vector<16x16xf32>
      %600 = arith.addf %594, %599 : vector<16x16xf32>
      %c69 = arith.constant 69 : index
      %601 = memref.load %arg3[%c69] : memref<98xf32, #tpu.memory_space<smem>>
      %c1_404 = arith.constant 1 : index
      %c2_405 = arith.constant 2 : index
      %c6_406 = arith.constant 6 : index
      %602 = vector.load %arg7[%c1_404, %c2_405, %c6_406] : memref<2x22x22xf32, #tpu.memory_space<vmem>>, vector<1x16x16xf32>
      %603 = vector.shape_cast %602 : vector<1x16x16xf32> to vector<16x16xf32>
      %604 = vector.broadcast %601 : f32 to vector<16x16xf32>
      %605 = arith.mulf %604, %603 : vector<16x16xf32>
      %606 = arith.addf %600, %605 : vector<16x16xf32>
      %c70 = arith.constant 70 : index
      %607 = memref.load %arg3[%c70] : memref<98xf32, #tpu.memory_space<smem>>
      %c1_407 = arith.constant 1 : index
      %c3_408 = arith.constant 3 : index
      %c0_409 = arith.constant 0 : index
      %608 = vector.load %arg7[%c1_407, %c3_408, %c0_409] : memref<2x22x22xf32, #tpu.memory_space<vmem>>, vector<1x16x16xf32>
      %609 = vector.shape_cast %608 : vector<1x16x16xf32> to vector<16x16xf32>
      %610 = vector.broadcast %607 : f32 to vector<16x16xf32>
      %611 = arith.mulf %610, %609 : vector<16x16xf32>
      %612 = arith.addf %606, %611 : vector<16x16xf32>
      %c71 = arith.constant 71 : index
      %613 = memref.load %arg3[%c71] : memref<98xf32, #tpu.memory_space<smem>>
      %c1_410 = arith.constant 1 : index
      %c3_411 = arith.constant 3 : index
      %c1_412 = arith.constant 1 : index
      %614 = vector.load %arg7[%c1_410, %c3_411, %c1_412] : memref<2x22x22xf32, #tpu.memory_space<vmem>>, vector<1x16x16xf32>
      %615 = vector.shape_cast %614 : vector<1x16x16xf32> to vector<16x16xf32>
      %616 = vector.broadcast %613 : f32 to vector<16x16xf32>
      %617 = arith.mulf %616, %615 : vector<16x16xf32>
      %618 = arith.addf %612, %617 : vector<16x16xf32>
      %c72 = arith.constant 72 : index
      %619 = memref.load %arg3[%c72] : memref<98xf32, #tpu.memory_space<smem>>
      %c1_413 = arith.constant 1 : index
      %c3_414 = arith.constant 3 : index
      %c2_415 = arith.constant 2 : index
      %620 = vector.load %arg7[%c1_413, %c3_414, %c2_415] : memref<2x22x22xf32, #tpu.memory_space<vmem>>, vector<1x16x16xf32>
      %621 = vector.shape_cast %620 : vector<1x16x16xf32> to vector<16x16xf32>
      %622 = vector.broadcast %619 : f32 to vector<16x16xf32>
      %623 = arith.mulf %622, %621 : vector<16x16xf32>
      %624 = arith.addf %618, %623 : vector<16x16xf32>
      %c73 = arith.constant 73 : index
      %625 = memref.load %arg3[%c73] : memref<98xf32, #tpu.memory_space<smem>>
      %c1_416 = arith.constant 1 : index
      %c3_417 = arith.constant 3 : index
      %c3_418 = arith.constant 3 : index
      %626 = vector.load %arg7[%c1_416, %c3_417, %c3_418] : memref<2x22x22xf32, #tpu.memory_space<vmem>>, vector<1x16x16xf32>
      %627 = vector.shape_cast %626 : vector<1x16x16xf32> to vector<16x16xf32>
      %628 = vector.broadcast %625 : f32 to vector<16x16xf32>
      %629 = arith.mulf %628, %627 : vector<16x16xf32>
      %630 = arith.addf %624, %629 : vector<16x16xf32>
      %c74 = arith.constant 74 : index
      %631 = memref.load %arg3[%c74] : memref<98xf32, #tpu.memory_space<smem>>
      %c1_419 = arith.constant 1 : index
      %c3_420 = arith.constant 3 : index
      %c4_421 = arith.constant 4 : index
      %632 = vector.load %arg7[%c1_419, %c3_420, %c4_421] : memref<2x22x22xf32, #tpu.memory_space<vmem>>, vector<1x16x16xf32>
      %633 = vector.shape_cast %632 : vector<1x16x16xf32> to vector<16x16xf32>
      %634 = vector.broadcast %631 : f32 to vector<16x16xf32>
      %635 = arith.mulf %634, %633 : vector<16x16xf32>
      %636 = arith.addf %630, %635 : vector<16x16xf32>
      %c75 = arith.constant 75 : index
      %637 = memref.load %arg3[%c75] : memref<98xf32, #tpu.memory_space<smem>>
      %c1_422 = arith.constant 1 : index
      %c3_423 = arith.constant 3 : index
      %c5_424 = arith.constant 5 : index
      %638 = vector.load %arg7[%c1_422, %c3_423, %c5_424] : memref<2x22x22xf32, #tpu.memory_space<vmem>>, vector<1x16x16xf32>
      %639 = vector.shape_cast %638 : vector<1x16x16xf32> to vector<16x16xf32>
      %640 = vector.broadcast %637 : f32 to vector<16x16xf32>
      %641 = arith.mulf %640, %639 : vector<16x16xf32>
      %642 = arith.addf %636, %641 : vector<16x16xf32>
      %c76 = arith.constant 76 : index
      %643 = memref.load %arg3[%c76] : memref<98xf32, #tpu.memory_space<smem>>
      %c1_425 = arith.constant 1 : index
      %c3_426 = arith.constant 3 : index
      %c6_427 = arith.constant 6 : index
      %644 = vector.load %arg7[%c1_425, %c3_426, %c6_427] : memref<2x22x22xf32, #tpu.memory_space<vmem>>, vector<1x16x16xf32>
      %645 = vector.shape_cast %644 : vector<1x16x16xf32> to vector<16x16xf32>
      %646 = vector.broadcast %643 : f32 to vector<16x16xf32>
      %647 = arith.mulf %646, %645 : vector<16x16xf32>
      %648 = arith.addf %642, %647 : vector<16x16xf32>
      %c77 = arith.constant 77 : index
      %649 = memref.load %arg3[%c77] : memref<98xf32, #tpu.memory_space<smem>>
      %c1_428 = arith.constant 1 : index
      %c4_429 = arith.constant 4 : index
      %c0_430 = arith.constant 0 : index
      %650 = vector.load %arg7[%c1_428, %c4_429, %c0_430] : memref<2x22x22xf32, #tpu.memory_space<vmem>>, vector<1x16x16xf32>
      %651 = vector.shape_cast %650 : vector<1x16x16xf32> to vector<16x16xf32>
      %652 = vector.broadcast %649 : f32 to vector<16x16xf32>
      %653 = arith.mulf %652, %651 : vector<16x16xf32>
      %654 = arith.addf %648, %653 : vector<16x16xf32>
      %c78 = arith.constant 78 : index
      %655 = memref.load %arg3[%c78] : memref<98xf32, #tpu.memory_space<smem>>
      %c1_431 = arith.constant 1 : index
      %c4_432 = arith.constant 4 : index
      %c1_433 = arith.constant 1 : index
      %656 = vector.load %arg7[%c1_431, %c4_432, %c1_433] : memref<2x22x22xf32, #tpu.memory_space<vmem>>, vector<1x16x16xf32>
      %657 = vector.shape_cast %656 : vector<1x16x16xf32> to vector<16x16xf32>
      %658 = vector.broadcast %655 : f32 to vector<16x16xf32>
      %659 = arith.mulf %658, %657 : vector<16x16xf32>
      %660 = arith.addf %654, %659 : vector<16x16xf32>
      %c79 = arith.constant 79 : index
      %661 = memref.load %arg3[%c79] : memref<98xf32, #tpu.memory_space<smem>>
      %c1_434 = arith.constant 1 : index
      %c4_435 = arith.constant 4 : index
      %c2_436 = arith.constant 2 : index
      %662 = vector.load %arg7[%c1_434, %c4_435, %c2_436] : memref<2x22x22xf32, #tpu.memory_space<vmem>>, vector<1x16x16xf32>
      %663 = vector.shape_cast %662 : vector<1x16x16xf32> to vector<16x16xf32>
      %664 = vector.broadcast %661 : f32 to vector<16x16xf32>
      %665 = arith.mulf %664, %663 : vector<16x16xf32>
      %666 = arith.addf %660, %665 : vector<16x16xf32>
      %c80_437 = arith.constant 80 : index
      %667 = memref.load %arg3[%c80_437] : memref<98xf32, #tpu.memory_space<smem>>
      %c1_438 = arith.constant 1 : index
      %c4_439 = arith.constant 4 : index
      %c3_440 = arith.constant 3 : index
      %668 = vector.load %arg7[%c1_438, %c4_439, %c3_440] : memref<2x22x22xf32, #tpu.memory_space<vmem>>, vector<1x16x16xf32>
      %669 = vector.shape_cast %668 : vector<1x16x16xf32> to vector<16x16xf32>
      %670 = vector.broadcast %667 : f32 to vector<16x16xf32>
      %671 = arith.mulf %670, %669 : vector<16x16xf32>
      %672 = arith.addf %666, %671 : vector<16x16xf32>
      %c81 = arith.constant 81 : index
      %673 = memref.load %arg3[%c81] : memref<98xf32, #tpu.memory_space<smem>>
      %c1_441 = arith.constant 1 : index
      %c4_442 = arith.constant 4 : index
      %c4_443 = arith.constant 4 : index
      %674 = vector.load %arg7[%c1_441, %c4_442, %c4_443] : memref<2x22x22xf32, #tpu.memory_space<vmem>>, vector<1x16x16xf32>
      %675 = vector.shape_cast %674 : vector<1x16x16xf32> to vector<16x16xf32>
      %676 = vector.broadcast %673 : f32 to vector<16x16xf32>
      %677 = arith.mulf %676, %675 : vector<16x16xf32>
      %678 = arith.addf %672, %677 : vector<16x16xf32>
      %c82 = arith.constant 82 : index
      %679 = memref.load %arg3[%c82] : memref<98xf32, #tpu.memory_space<smem>>
      %c1_444 = arith.constant 1 : index
      %c4_445 = arith.constant 4 : index
      %c5_446 = arith.constant 5 : index
      %680 = vector.load %arg7[%c1_444, %c4_445, %c5_446] : memref<2x22x22xf32, #tpu.memory_space<vmem>>, vector<1x16x16xf32>
      %681 = vector.shape_cast %680 : vector<1x16x16xf32> to vector<16x16xf32>
      %682 = vector.broadcast %679 : f32 to vector<16x16xf32>
      %683 = arith.mulf %682, %681 : vector<16x16xf32>
      %684 = arith.addf %678, %683 : vector<16x16xf32>
      %c83 = arith.constant 83 : index
      %685 = memref.load %arg3[%c83] : memref<98xf32, #tpu.memory_space<smem>>
      %c1_447 = arith.constant 1 : index
      %c4_448 = arith.constant 4 : index
      %c6_449 = arith.constant 6 : index
      %686 = vector.load %arg7[%c1_447, %c4_448, %c6_449] : memref<2x22x22xf32, #tpu.memory_space<vmem>>, vector<1x16x16xf32>
      %687 = vector.shape_cast %686 : vector<1x16x16xf32> to vector<16x16xf32>
      %688 = vector.broadcast %685 : f32 to vector<16x16xf32>
      %689 = arith.mulf %688, %687 : vector<16x16xf32>
      %690 = arith.addf %684, %689 : vector<16x16xf32>
      %c84 = arith.constant 84 : index
      %691 = memref.load %arg3[%c84] : memref<98xf32, #tpu.memory_space<smem>>
      %c1_450 = arith.constant 1 : index
      %c5_451 = arith.constant 5 : index
      %c0_452 = arith.constant 0 : index
      %692 = vector.load %arg7[%c1_450, %c5_451, %c0_452] : memref<2x22x22xf32, #tpu.memory_space<vmem>>, vector<1x16x16xf32>
      %693 = vector.shape_cast %692 : vector<1x16x16xf32> to vector<16x16xf32>
      %694 = vector.broadcast %691 : f32 to vector<16x16xf32>
      %695 = arith.mulf %694, %693 : vector<16x16xf32>
      %696 = arith.addf %690, %695 : vector<16x16xf32>
      %c85 = arith.constant 85 : index
      %697 = memref.load %arg3[%c85] : memref<98xf32, #tpu.memory_space<smem>>
      %c1_453 = arith.constant 1 : index
      %c5_454 = arith.constant 5 : index
      %c1_455 = arith.constant 1 : index
      %698 = vector.load %arg7[%c1_453, %c5_454, %c1_455] : memref<2x22x22xf32, #tpu.memory_space<vmem>>, vector<1x16x16xf32>
      %699 = vector.shape_cast %698 : vector<1x16x16xf32> to vector<16x16xf32>
      %700 = vector.broadcast %697 : f32 to vector<16x16xf32>
      %701 = arith.mulf %700, %699 : vector<16x16xf32>
      %702 = arith.addf %696, %701 : vector<16x16xf32>
      %c86 = arith.constant 86 : index
      %703 = memref.load %arg3[%c86] : memref<98xf32, #tpu.memory_space<smem>>
      %c1_456 = arith.constant 1 : index
      %c5_457 = arith.constant 5 : index
      %c2_458 = arith.constant 2 : index
      %704 = vector.load %arg7[%c1_456, %c5_457, %c2_458] : memref<2x22x22xf32, #tpu.memory_space<vmem>>, vector<1x16x16xf32>
      %705 = vector.shape_cast %704 : vector<1x16x16xf32> to vector<16x16xf32>
      %706 = vector.broadcast %703 : f32 to vector<16x16xf32>
      %707 = arith.mulf %706, %705 : vector<16x16xf32>
      %708 = arith.addf %702, %707 : vector<16x16xf32>
      %c87 = arith.constant 87 : index
      %709 = memref.load %arg3[%c87] : memref<98xf32, #tpu.memory_space<smem>>
      %c1_459 = arith.constant 1 : index
      %c5_460 = arith.constant 5 : index
      %c3_461 = arith.constant 3 : index
      %710 = vector.load %arg7[%c1_459, %c5_460, %c3_461] : memref<2x22x22xf32, #tpu.memory_space<vmem>>, vector<1x16x16xf32>
      %711 = vector.shape_cast %710 : vector<1x16x16xf32> to vector<16x16xf32>
      %712 = vector.broadcast %709 : f32 to vector<16x16xf32>
      %713 = arith.mulf %712, %711 : vector<16x16xf32>
      %714 = arith.addf %708, %713 : vector<16x16xf32>
      %c88 = arith.constant 88 : index
      %715 = memref.load %arg3[%c88] : memref<98xf32, #tpu.memory_space<smem>>
      %c1_462 = arith.constant 1 : index
      %c5_463 = arith.constant 5 : index
      %c4_464 = arith.constant 4 : index
      %716 = vector.load %arg7[%c1_462, %c5_463, %c4_464] : memref<2x22x22xf32, #tpu.memory_space<vmem>>, vector<1x16x16xf32>
      %717 = vector.shape_cast %716 : vector<1x16x16xf32> to vector<16x16xf32>
      %718 = vector.broadcast %715 : f32 to vector<16x16xf32>
      %719 = arith.mulf %718, %717 : vector<16x16xf32>
      %720 = arith.addf %714, %719 : vector<16x16xf32>
      %c89 = arith.constant 89 : index
      %721 = memref.load %arg3[%c89] : memref<98xf32, #tpu.memory_space<smem>>
      %c1_465 = arith.constant 1 : index
      %c5_466 = arith.constant 5 : index
      %c5_467 = arith.constant 5 : index
      %722 = vector.load %arg7[%c1_465, %c5_466, %c5_467] : memref<2x22x22xf32, #tpu.memory_space<vmem>>, vector<1x16x16xf32>
      %723 = vector.shape_cast %722 : vector<1x16x16xf32> to vector<16x16xf32>
      %724 = vector.broadcast %721 : f32 to vector<16x16xf32>
      %725 = arith.mulf %724, %723 : vector<16x16xf32>
      %726 = arith.addf %720, %725 : vector<16x16xf32>
      %c90 = arith.constant 90 : index
      %727 = memref.load %arg3[%c90] : memref<98xf32, #tpu.memory_space<smem>>
      %c1_468 = arith.constant 1 : index
      %c5_469 = arith.constant 5 : index
      %c6_470 = arith.constant 6 : index
      %728 = vector.load %arg7[%c1_468, %c5_469, %c6_470] : memref<2x22x22xf32, #tpu.memory_space<vmem>>, vector<1x16x16xf32>
      %729 = vector.shape_cast %728 : vector<1x16x16xf32> to vector<16x16xf32>
      %730 = vector.broadcast %727 : f32 to vector<16x16xf32>
      %731 = arith.mulf %730, %729 : vector<16x16xf32>
      %732 = arith.addf %726, %731 : vector<16x16xf32>
      %c91 = arith.constant 91 : index
      %733 = memref.load %arg3[%c91] : memref<98xf32, #tpu.memory_space<smem>>
      %c1_471 = arith.constant 1 : index
      %c6_472 = arith.constant 6 : index
      %c0_473 = arith.constant 0 : index
      %734 = vector.load %arg7[%c1_471, %c6_472, %c0_473] : memref<2x22x22xf32, #tpu.memory_space<vmem>>, vector<1x16x16xf32>
      %735 = vector.shape_cast %734 : vector<1x16x16xf32> to vector<16x16xf32>
      %736 = vector.broadcast %733 : f32 to vector<16x16xf32>
      %737 = arith.mulf %736, %735 : vector<16x16xf32>
      %738 = arith.addf %732, %737 : vector<16x16xf32>
      %c92 = arith.constant 92 : index
      %739 = memref.load %arg3[%c92] : memref<98xf32, #tpu.memory_space<smem>>
      %c1_474 = arith.constant 1 : index
      %c6_475 = arith.constant 6 : index
      %c1_476 = arith.constant 1 : index
      %740 = vector.load %arg7[%c1_474, %c6_475, %c1_476] : memref<2x22x22xf32, #tpu.memory_space<vmem>>, vector<1x16x16xf32>
      %741 = vector.shape_cast %740 : vector<1x16x16xf32> to vector<16x16xf32>
      %742 = vector.broadcast %739 : f32 to vector<16x16xf32>
      %743 = arith.mulf %742, %741 : vector<16x16xf32>
      %744 = arith.addf %738, %743 : vector<16x16xf32>
      %c93 = arith.constant 93 : index
      %745 = memref.load %arg3[%c93] : memref<98xf32, #tpu.memory_space<smem>>
      %c1_477 = arith.constant 1 : index
      %c6_478 = arith.constant 6 : index
      %c2_479 = arith.constant 2 : index
      %746 = vector.load %arg7[%c1_477, %c6_478, %c2_479] : memref<2x22x22xf32, #tpu.memory_space<vmem>>, vector<1x16x16xf32>
      %747 = vector.shape_cast %746 : vector<1x16x16xf32> to vector<16x16xf32>
      %748 = vector.broadcast %745 : f32 to vector<16x16xf32>
      %749 = arith.mulf %748, %747 : vector<16x16xf32>
      %750 = arith.addf %744, %749 : vector<16x16xf32>
      %c94 = arith.constant 94 : index
      %751 = memref.load %arg3[%c94] : memref<98xf32, #tpu.memory_space<smem>>
      %c1_480 = arith.constant 1 : index
      %c6_481 = arith.constant 6 : index
      %c3_482 = arith.constant 3 : index
      %752 = vector.load %arg7[%c1_480, %c6_481, %c3_482] : memref<2x22x22xf32, #tpu.memory_space<vmem>>, vector<1x16x16xf32>
      %753 = vector.shape_cast %752 : vector<1x16x16xf32> to vector<16x16xf32>
      %754 = vector.broadcast %751 : f32 to vector<16x16xf32>
      %755 = arith.mulf %754, %753 : vector<16x16xf32>
      %756 = arith.addf %750, %755 : vector<16x16xf32>
      %c95 = arith.constant 95 : index
      %757 = memref.load %arg3[%c95] : memref<98xf32, #tpu.memory_space<smem>>
      %c1_483 = arith.constant 1 : index
      %c6_484 = arith.constant 6 : index
      %c4_485 = arith.constant 4 : index
      %758 = vector.load %arg7[%c1_483, %c6_484, %c4_485] : memref<2x22x22xf32, #tpu.memory_space<vmem>>, vector<1x16x16xf32>
      %759 = vector.shape_cast %758 : vector<1x16x16xf32> to vector<16x16xf32>
      %760 = vector.broadcast %757 : f32 to vector<16x16xf32>
      %761 = arith.mulf %760, %759 : vector<16x16xf32>
      %762 = arith.addf %756, %761 : vector<16x16xf32>
      %c96_486 = arith.constant 96 : index
      %763 = memref.load %arg3[%c96_486] : memref<98xf32, #tpu.memory_space<smem>>
      %c1_487 = arith.constant 1 : index
      %c6_488 = arith.constant 6 : index
      %c5_489 = arith.constant 5 : index
      %764 = vector.load %arg7[%c1_487, %c6_488, %c5_489] : memref<2x22x22xf32, #tpu.memory_space<vmem>>, vector<1x16x16xf32>
      %765 = vector.shape_cast %764 : vector<1x16x16xf32> to vector<16x16xf32>
      %766 = vector.broadcast %763 : f32 to vector<16x16xf32>
      %767 = arith.mulf %766, %765 : vector<16x16xf32>
      %768 = arith.addf %762, %767 : vector<16x16xf32>
      %c97 = arith.constant 97 : index
      %769 = memref.load %arg3[%c97] : memref<98xf32, #tpu.memory_space<smem>>
      %c1_490 = arith.constant 1 : index
      %c6_491 = arith.constant 6 : index
      %c6_492 = arith.constant 6 : index
      %770 = vector.load %arg7[%c1_490, %c6_491, %c6_492] : memref<2x22x22xf32, #tpu.memory_space<vmem>>, vector<1x16x16xf32>
      %771 = vector.shape_cast %770 : vector<1x16x16xf32> to vector<16x16xf32>
      %772 = vector.broadcast %769 : f32 to vector<16x16xf32>
      %773 = arith.mulf %772, %771 : vector<16x16xf32>
      %774 = arith.addf %768, %773 : vector<16x16xf32>
      %cst_493 = arith.constant 0.000000e+00 : f32
      %775 = vector.broadcast %cst_493 : f32 to vector<16x16xf32>
      %776 = arith.subf %775, %774 : vector<16x16xf32>
      %777 = math.exp %776 : vector<16x16xf32>
      %cst_494 = arith.constant 1.000000e+00 : f32
      %778 = vector.broadcast %cst_494 : f32 to vector<16x16xf32>
      %779 = arith.addf %778, %777 : vector<16x16xf32>
      %cst_495 = arith.constant 1.000000e+00 : f32
      %780 = vector.broadcast %cst_495 : f32 to vector<16x16xf32>
      %781 = arith.divf %780, %779 : vector<16x16xf32>
      %782 = vector.extract_strided_slice %781 {offsets = [0, 0], sizes = [1, 16], strides = [1, 1]} : vector<16x16xf32> to vector<1x16xf32>
      %c0_496 = arith.constant 0 : index
      %c0_497 = arith.constant 0 : index
      %c0_498 = arith.constant 0 : index
      %783 = vector.load %arg4[%c0_496, %c0_497, %c0_498] : memref<1x1x256xf32, #tpu.memory_space<vmem>>, vector<1x1x16xf32>
      %784 = vector.shape_cast %783 : vector<1x1x16xf32> to vector<1x16xf32>
      %785 = vector.shape_cast %782 : vector<1x16xf32> to vector<1x1x16xf32>
      tpu.vector_store %arg4[%c0_496, %c0_497, %c0_498], %785 {strides = array<i32>} : memref<1x1x256xf32, #tpu.memory_space<vmem>>, vector<1x1x16xf32>,
      %786 = vector.extract_strided_slice %781 {offsets = [1, 0], sizes = [1, 16], strides = [1, 1]} : vector<16x16xf32> to vector<1x16xf32>
      %c0_499 = arith.constant 0 : index
      %c0_500 = arith.constant 0 : index
      %c16_501 = arith.constant 16 : index
      %787 = vector.load %arg4[%c0_499, %c0_500, %c16_501] : memref<1x1x256xf32, #tpu.memory_space<vmem>>, vector<1x1x16xf32>
      %788 = vector.shape_cast %787 : vector<1x1x16xf32> to vector<1x16xf32>
      %789 = vector.shape_cast %786 : vector<1x16xf32> to vector<1x1x16xf32>
      tpu.vector_store %arg4[%c0_499, %c0_500, %c16_501], %789 {strides = array<i32>} : memref<1x1x256xf32, #tpu.memory_space<vmem>>, vector<1x1x16xf32>,
      %790 = vector.extract_strided_slice %781 {offsets = [2, 0], sizes = [1, 16], strides = [1, 1]} : vector<16x16xf32> to vector<1x16xf32>
      %c0_502 = arith.constant 0 : index
      %c0_503 = arith.constant 0 : index
      %c32_504 = arith.constant 32 : index
      %791 = vector.load %arg4[%c0_502, %c0_503, %c32_504] : memref<1x1x256xf32, #tpu.memory_space<vmem>>, vector<1x1x16xf32>
      %792 = vector.shape_cast %791 : vector<1x1x16xf32> to vector<1x16xf32>
      %793 = vector.shape_cast %790 : vector<1x16xf32> to vector<1x1x16xf32>
      tpu.vector_store %arg4[%c0_502, %c0_503, %c32_504], %793 {strides = array<i32>} : memref<1x1x256xf32, #tpu.memory_space<vmem>>, vector<1x1x16xf32>,
      %794 = vector.extract_strided_slice %781 {offsets = [3, 0], sizes = [1, 16], strides = [1, 1]} : vector<16x16xf32> to vector<1x16xf32>
      %c0_505 = arith.constant 0 : index
      %c0_506 = arith.constant 0 : index
      %c48_507 = arith.constant 48 : index
      %795 = vector.load %arg4[%c0_505, %c0_506, %c48_507] : memref<1x1x256xf32, #tpu.memory_space<vmem>>, vector<1x1x16xf32>
      %796 = vector.shape_cast %795 : vector<1x1x16xf32> to vector<1x16xf32>
      %797 = vector.shape_cast %794 : vector<1x16xf32> to vector<1x1x16xf32>
      tpu.vector_store %arg4[%c0_505, %c0_506, %c48_507], %797 {strides = array<i32>} : memref<1x1x256xf32, #tpu.memory_space<vmem>>, vector<1x1x16xf32>,
      %798 = vector.extract_strided_slice %781 {offsets = [4, 0], sizes = [1, 16], strides = [1, 1]} : vector<16x16xf32> to vector<1x16xf32>
      %c0_508 = arith.constant 0 : index
      %c0_509 = arith.constant 0 : index
      %c64_510 = arith.constant 64 : index
      %799 = vector.load %arg4[%c0_508, %c0_509, %c64_510] : memref<1x1x256xf32, #tpu.memory_space<vmem>>, vector<1x1x16xf32>
      %800 = vector.shape_cast %799 : vector<1x1x16xf32> to vector<1x16xf32>
      %801 = vector.shape_cast %798 : vector<1x16xf32> to vector<1x1x16xf32>
      tpu.vector_store %arg4[%c0_508, %c0_509, %c64_510], %801 {strides = array<i32>} : memref<1x1x256xf32, #tpu.memory_space<vmem>>, vector<1x1x16xf32>,
      %802 = vector.extract_strided_slice %781 {offsets = [5, 0], sizes = [1, 16], strides = [1, 1]} : vector<16x16xf32> to vector<1x16xf32>
      %c0_511 = arith.constant 0 : index
      %c0_512 = arith.constant 0 : index
      %c80_513 = arith.constant 80 : index
      %803 = vector.load %arg4[%c0_511, %c0_512, %c80_513] : memref<1x1x256xf32, #tpu.memory_space<vmem>>, vector<1x1x16xf32>
      %804 = vector.shape_cast %803 : vector<1x1x16xf32> to vector<1x16xf32>
      %805 = vector.shape_cast %802 : vector<1x16xf32> to vector<1x1x16xf32>
      tpu.vector_store %arg4[%c0_511, %c0_512, %c80_513], %805 {strides = array<i32>} : memref<1x1x256xf32, #tpu.memory_space<vmem>>, vector<1x1x16xf32>,
      %806 = vector.extract_strided_slice %781 {offsets = [6, 0], sizes = [1, 16], strides = [1, 1]} : vector<16x16xf32> to vector<1x16xf32>
      %c0_514 = arith.constant 0 : index
      %c0_515 = arith.constant 0 : index
      %c96_516 = arith.constant 96 : index
      %807 = vector.load %arg4[%c0_514, %c0_515, %c96_516] : memref<1x1x256xf32, #tpu.memory_space<vmem>>, vector<1x1x16xf32>
      %808 = vector.shape_cast %807 : vector<1x1x16xf32> to vector<1x16xf32>
      %809 = vector.shape_cast %806 : vector<1x16xf32> to vector<1x1x16xf32>
      tpu.vector_store %arg4[%c0_514, %c0_515, %c96_516], %809 {strides = array<i32>} : memref<1x1x256xf32, #tpu.memory_space<vmem>>, vector<1x1x16xf32>,
      %810 = vector.extract_strided_slice %781 {offsets = [7, 0], sizes = [1, 16], strides = [1, 1]} : vector<16x16xf32> to vector<1x16xf32>
      %c0_517 = arith.constant 0 : index
      %c0_518 = arith.constant 0 : index
      %c112_519 = arith.constant 112 : index
      %811 = vector.load %arg4[%c0_517, %c0_518, %c112_519] : memref<1x1x256xf32, #tpu.memory_space<vmem>>, vector<1x1x16xf32>
      %812 = vector.shape_cast %811 : vector<1x1x16xf32> to vector<1x16xf32>
      %813 = vector.shape_cast %810 : vector<1x16xf32> to vector<1x1x16xf32>
      tpu.vector_store %arg4[%c0_517, %c0_518, %c112_519], %813 {strides = array<i32>} : memref<1x1x256xf32, #tpu.memory_space<vmem>>, vector<1x1x16xf32>,
      %814 = vector.extract_strided_slice %781 {offsets = [8, 0], sizes = [1, 16], strides = [1, 1]} : vector<16x16xf32> to vector<1x16xf32>
      %c0_520 = arith.constant 0 : index
      %c0_521 = arith.constant 0 : index
      %c128_522 = arith.constant 128 : index
      %815 = vector.load %arg4[%c0_520, %c0_521, %c128_522] : memref<1x1x256xf32, #tpu.memory_space<vmem>>, vector<1x1x16xf32>
      %816 = vector.shape_cast %815 : vector<1x1x16xf32> to vector<1x16xf32>
      %817 = vector.shape_cast %814 : vector<1x16xf32> to vector<1x1x16xf32>
      tpu.vector_store %arg4[%c0_520, %c0_521, %c128_522], %817 {strides = array<i32>} : memref<1x1x256xf32, #tpu.memory_space<vmem>>, vector<1x1x16xf32>,
      %818 = vector.extract_strided_slice %781 {offsets = [9, 0], sizes = [1, 16], strides = [1, 1]} : vector<16x16xf32> to vector<1x16xf32>
      %c0_523 = arith.constant 0 : index
      %c0_524 = arith.constant 0 : index
      %c144_525 = arith.constant 144 : index
      %819 = vector.load %arg4[%c0_523, %c0_524, %c144_525] : memref<1x1x256xf32, #tpu.memory_space<vmem>>, vector<1x1x16xf32>
      %820 = vector.shape_cast %819 : vector<1x1x16xf32> to vector<1x16xf32>
      %821 = vector.shape_cast %818 : vector<1x16xf32> to vector<1x1x16xf32>
      tpu.vector_store %arg4[%c0_523, %c0_524, %c144_525], %821 {strides = array<i32>} : memref<1x1x256xf32, #tpu.memory_space<vmem>>, vector<1x1x16xf32>,
      %822 = vector.extract_strided_slice %781 {offsets = [10, 0], sizes = [1, 16], strides = [1, 1]} : vector<16x16xf32> to vector<1x16xf32>
      %c0_526 = arith.constant 0 : index
      %c0_527 = arith.constant 0 : index
      %c160_528 = arith.constant 160 : index
      %823 = vector.load %arg4[%c0_526, %c0_527, %c160_528] : memref<1x1x256xf32, #tpu.memory_space<vmem>>, vector<1x1x16xf32>
      %824 = vector.shape_cast %823 : vector<1x1x16xf32> to vector<1x16xf32>
      %825 = vector.shape_cast %822 : vector<1x16xf32> to vector<1x1x16xf32>
      tpu.vector_store %arg4[%c0_526, %c0_527, %c160_528], %825 {strides = array<i32>} : memref<1x1x256xf32, #tpu.memory_space<vmem>>, vector<1x1x16xf32>,
      %826 = vector.extract_strided_slice %781 {offsets = [11, 0], sizes = [1, 16], strides = [1, 1]} : vector<16x16xf32> to vector<1x16xf32>
      %c0_529 = arith.constant 0 : index
      %c0_530 = arith.constant 0 : index
      %c176_531 = arith.constant 176 : index
      %827 = vector.load %arg4[%c0_529, %c0_530, %c176_531] : memref<1x1x256xf32, #tpu.memory_space<vmem>>, vector<1x1x16xf32>
      %828 = vector.shape_cast %827 : vector<1x1x16xf32> to vector<1x16xf32>
      %829 = vector.shape_cast %826 : vector<1x16xf32> to vector<1x1x16xf32>
      tpu.vector_store %arg4[%c0_529, %c0_530, %c176_531], %829 {strides = array<i32>} : memref<1x1x256xf32, #tpu.memory_space<vmem>>, vector<1x1x16xf32>,
      %830 = vector.extract_strided_slice %781 {offsets = [12, 0], sizes = [1, 16], strides = [1, 1]} : vector<16x16xf32> to vector<1x16xf32>
      %c0_532 = arith.constant 0 : index
      %c0_533 = arith.constant 0 : index
      %c192_534 = arith.constant 192 : index
      %831 = vector.load %arg4[%c0_532, %c0_533, %c192_534] : memref<1x1x256xf32, #tpu.memory_space<vmem>>, vector<1x1x16xf32>
      %832 = vector.shape_cast %831 : vector<1x1x16xf32> to vector<1x16xf32>
      %833 = vector.shape_cast %830 : vector<1x16xf32> to vector<1x1x16xf32>
      tpu.vector_store %arg4[%c0_532, %c0_533, %c192_534], %833 {strides = array<i32>} : memref<1x1x256xf32, #tpu.memory_space<vmem>>, vector<1x1x16xf32>,
      %834 = vector.extract_strided_slice %781 {offsets = [13, 0], sizes = [1, 16], strides = [1, 1]} : vector<16x16xf32> to vector<1x16xf32>
      %c0_535 = arith.constant 0 : index
      %c0_536 = arith.constant 0 : index
      %c208_537 = arith.constant 208 : index
      %835 = vector.load %arg4[%c0_535, %c0_536, %c208_537] : memref<1x1x256xf32, #tpu.memory_space<vmem>>, vector<1x1x16xf32>
      %836 = vector.shape_cast %835 : vector<1x1x16xf32> to vector<1x16xf32>
      %837 = vector.shape_cast %834 : vector<1x16xf32> to vector<1x1x16xf32>
      tpu.vector_store %arg4[%c0_535, %c0_536, %c208_537], %837 {strides = array<i32>} : memref<1x1x256xf32, #tpu.memory_space<vmem>>, vector<1x1x16xf32>,
      %838 = vector.extract_strided_slice %781 {offsets = [14, 0], sizes = [1, 16], strides = [1, 1]} : vector<16x16xf32> to vector<1x16xf32>
      %c0_538 = arith.constant 0 : index
      %c0_539 = arith.constant 0 : index
      %c224_540 = arith.constant 224 : index
      %839 = vector.load %arg4[%c0_538, %c0_539, %c224_540] : memref<1x1x256xf32, #tpu.memory_space<vmem>>, vector<1x1x16xf32>
      %840 = vector.shape_cast %839 : vector<1x1x16xf32> to vector<1x16xf32>
      %841 = vector.shape_cast %838 : vector<1x16xf32> to vector<1x1x16xf32>
      tpu.vector_store %arg4[%c0_538, %c0_539, %c224_540], %841 {strides = array<i32>} : memref<1x1x256xf32, #tpu.memory_space<vmem>>, vector<1x1x16xf32>,
      %842 = vector.extract_strided_slice %781 {offsets = [15, 0], sizes = [1, 16], strides = [1, 1]} : vector<16x16xf32> to vector<1x16xf32>
      %c0_541 = arith.constant 0 : index
      %c0_542 = arith.constant 0 : index
      %c240_543 = arith.constant 240 : index
      %843 = vector.load %arg4[%c0_541, %c0_542, %c240_543] : memref<1x1x256xf32, #tpu.memory_space<vmem>>, vector<1x1x16xf32>
      %844 = vector.shape_cast %843 : vector<1x1x16xf32> to vector<1x16xf32>
      %845 = vector.shape_cast %842 : vector<1x16xf32> to vector<1x1x16xf32>
      tpu.vector_store %arg4[%c0_541, %c0_542, %c240_543], %845 {strides = array<i32>} : memref<1x1x256xf32, #tpu.memory_space<vmem>>, vector<1x1x16xf32>,
    } else {
    }
    return
  }
  func.func @transform_0(%arg0: i32, %arg1: i32) -> (i32, i32, i32) {
    %c0_i32 = arith.constant 0 : i32
    %c0_i32_0 = arith.constant 0 : i32
    return %arg0, %arg1, %c0_i32 : i32, i32, i32
  }
  func.func @transform_1(%arg0: i32, %arg1: i32) -> i32 {
    %c0_i32 = arith.constant 0 : i32
    %c0_i32_0 = arith.constant 0 : i32
    return %c0_i32 : i32
  }
  func.func @transform_2(%arg0: i32, %arg1: i32) -> (i32, i32, i32) {
    %c0_i32 = arith.constant 0 : i32
    %c0_i32_0 = arith.constant 0 : i32
    %c0_i32_1 = arith.constant 0 : i32
    return %arg0, %c0_i32, %c0_i32_0 : i32, i32, i32
  }
}

</mosaic_0001>

<llo_original>
// kernel: spatial_attention.1
$region0: #{spatial_attention.1}
  #allocation0 [shape = 'u32[]', space=smem, size = 0x4, offset = 0x4, fixed_abs, tag = 'smem constant byte address 0x4 - core index']
  #allocation1 [shape = 'u32[144,128]{1,0:T(1,128)}', space=vmem, size = 0x12000, scoped, tag = 'internal scratch']
  #allocation2 [shape = 'f32[1,256]{1,0:T(1,128)}', space=vmem, size = 0x400, scoped, tag = 'scratch operand']
  #allocation3 [shape = 'f32[1,256]{1,0:T(1,128)}', space=vmem, size = 0x400, scoped, tag = 'scratch operand']
  #allocation4 [shape = 'f32[2,22,22]{2,1,0:T(8,128)}', space=vmem, size = 0x6000, scoped, tag = 'scratch operand']
  %s0 = inlined_call_operand.vmem [shape: f32[2,4,256], index: 0, kind: input, shape index: {}]
  %s1 = inlined_call_operand.vmem [shape: f32[98], index: 1, kind: input, shape index: {}]
  %s2 = inlined_call_operand.vmem [shape: f32[2,1,256], index: 2, kind: output, shape index: {}]
  %s3 = sld [smem:[#allocation0]]
  $region53: #{spatial_attention.1} parent=0
    _
  %s5 = ssub.s32 1, %s3
  %s6 = scalar_select 0, %s5, %s3
  $region1: #{spatial_attention.1} parent=0
    #allocation5 [shape = 'u8[512]{0}', space=smem, size = 0x200, scoped, tag = 'input window, operand 1, single buffered']
    #allocation6 [shape = 's32[2]{0}', space=sflag, size = 0x8, scoped, tag = 'scoped memory for spatial_attention.1']
    %7 = vsyncpa [#allocation6], 0
    loop: start=0, step=1, limit=4
    $region2: #{spatial_attention.1} parent=1 // loop_pre_header
      _
    $region3: #{spatial_attention.1} parent=1 // loop_header
      %s9 = sphi 0, %s13
      %p10 = scmp.ge.s32.totalorder %s9, 4
      %s16 = sphi 0, %s28
      %s17 = sphi 0, %s24
      %s18 = sphi 0, %s16
      %s19 = sphi 0, %s17
      %s20 = sphi 0, %s18
      %s21 = sphi 0, %s19
      %s33 = sphi 0, %s35
      %s36 = sphi 0, %s33
      %s37 = sphi 0, %s36
      %s53 = sphi 0, %s37
      %s57 = sphi 0, %s57
      %s59 = sphi 0, %s57
      %s60 = sphi 0, %s59
      %s74 = sphi 0, %s60
      %s80 = sphi 0, %s82
      %s83 = sphi 0, %s80
      %s84 = sphi 0, %s83
      %s100 = sphi 0, %s84
    $region4: #{spatial_attention.1} parent=1 // loop_header_branch
      %12 = sbr.rel (%p10) target = $region8
    $region5: #{spatial_attention.1} parent=1 // loop_body
      %s14 = ssub.s32 %s9, 1
      %s15 = ssub.s32 %s9, 2
      %s22 = sadd.s32 1, %s17
      %p23 = scmp.ge.s32.totalorder %s22, 1
      %s24 = scalar_select %p23, 0, %s22
      %s25 = sadd.s32 1, %s16
      %s26 = scalar_select %p23, %s25, %s16
      %p27 = scmp.ge.s32.totalorder %s26, 2
      %s28 = scalar_select %p27, 0, %s26
      %s29 = ssub.s32 %s16, %s28
      %s30 = ssub.s32 %s17, %s24
      %s31 = sor.u32 %s29, %s30
      %p32 = scmp.eq.s32.totalorder %s31, 0
      %s34 = sadd.s32 %s33, 1
      %s35 = scalar_select %p32, %s33, %s34
      %p38 = pneg %p32
      %p39 = scmp.eq.s32.totalorder %s9, 1
      %p40 = por %p38, %p39
      %p41 = scmp.ne.s32.totalorder %s33, %s36
      %p42 = scmp.eq.s32.totalorder %s9, 0
      %p43 = por %p41, %p42
      %p44 = scmp.ne.s32.totalorder %s33, %s36
      %p45 = scmp.eq.s32.totalorder %s14, 1
      %p46 = por %p44, %p45
      %p47 = scmp.ne.s32.totalorder %s36, %s37
      %p48 = scmp.eq.s32.totalorder %s14, 0
      %p49 = por %p47, %p48
      %p50 = scmp.ne.s32.totalorder %s36, %s37
      %p51 = scmp.eq.s32.totalorder %s15, 1
      %p52 = por %p50, %p51
      %p54 = scmp.ne.s32.totalorder %s37, %s53
      %p55 = scmp.eq.s32.totalorder %s15, 0
      %p56 = por %p54, %p55
      %s58 = sadd.s32 %s57, 1
      %p61 = scmp.eq.s32.totalorder %s9, 1
      %p62 = scmp.ne.s32.totalorder %s57, %s59
      %p63 = scmp.eq.s32.totalorder %s9, 0
      %p64 = por %p62, %p63
      %p65 = scmp.ne.s32.totalorder %s57, %s59
      %p66 = scmp.eq.s32.totalorder %s14, 1
      %p67 = por %p65, %p66
      %p68 = scmp.ne.s32.totalorder %s59, %s60
      %p69 = scmp.eq.s32.totalorder %s14, 0
      %p70 = por %p68, %p69
      %p71 = scmp.ne.s32.totalorder %s59, %s60
      %p72 = scmp.eq.s32.totalorder %s15, 1
      %p73 = por %p71, %p72
      %p75 = scmp.ne.s32.totalorder %s60, %s74
      %p76 = scmp.eq.s32.totalorder %s15, 0
      %p77 = por %p75, %p76
      %s78 = ssub.s32 %s16, %s28
      %p79 = scmp.eq.s32.totalorder %s78, 0
      %s81 = sadd.s32 %s80, 1
      %s82 = scalar_select %p79, %s80, %s81
      %p85 = pneg %p79
      %p86 = scmp.eq.s32.totalorder %s9, 1
      %p87 = por %p85, %p86
      %p88 = scmp.ne.s32.totalorder %s80, %s83
      %p89 = scmp.eq.s32.totalorder %s9, 0
      %p90 = por %p88, %p89
      %p91 = scmp.ne.s32.totalorder %s80, %s83
      %p92 = scmp.eq.s32.totalorder %s14, 1
      %p93 = por %p91, %p92
      %p94 = scmp.ne.s32.totalorder %s83, %s84
      %p95 = scmp.eq.s32.totalorder %s14, 0
      %p96 = por %p94, %p95
      %p97 = scmp.ne.s32.totalorder %s83, %s84
      %p98 = scmp.eq.s32.totalorder %s15, 1
      %p99 = por %p97, %p98
      %p101 = scmp.ne.s32.totalorder %s84, %s100
      %p102 = scmp.eq.s32.totalorder %s15, 0
      %p103 = por %p101, %p102
      %p104 = scmp.le.s32.totalorder 1, %s9
      %p105 = scmp.lt.s32.totalorder %s9, 3
      %p106 = pnand %p104, %p105
      %p107 = pneg %p106
      // Predicated region
      $region9: #{spatial_attention.1} parent=5 // pred_check
        _
      $region10: #{spatial_attention.1} parent=5 // pred_check_branch
        %109 = sbr.rel (%p106) target = $region12
      $region11: #{spatial_attention.1} parent=5 // pred_region
        %s110 = ssub.s32 %s9, 1
        // Predicated region
        $region13: #{spatial_attention.1} parent=11 // pred_check
          %p111 = pneg %p70
        $region14: #{spatial_attention.1} parent=11 // pred_check_branch
          %113 = sbr.rel (%p111) target = $region16
        $region15: #{spatial_attention.1} parent=11 // pred_region
          %s115 = ssub.s32 16, 16
          %116 = vsyncadd [#allocation6], %s115
          %s118 = sshll.u32 %s1, 4
          %s119 = int_to_ptr.vmem [resolvable:$true] %s118
          %121 = dma.vmem_to_smem %s119, 16, [#allocation5], [#allocation6]
        $region16: #{spatial_attention.1} parent=11 // pred_fallthru
          _
      $region12: #{spatial_attention.1} parent=5 // pred_fallthru
        _
      %p122 = scmp.lt.s32.totalorder %s9, 2
      // Predicated region
      $region17: #{spatial_attention.1} parent=5 // pred_check
        %p123 = pneg %p122
      $region18: #{spatial_attention.1} parent=5 // pred_check_branch
        %125 = sbr.rel (%p123) target = $region20
      $region19: #{spatial_attention.1} parent=5 // pred_region
        // Predicated region
        $region21: #{spatial_attention.1} parent=19 // pred_check
          %p126 = pneg %p43
        $region22: #{spatial_attention.1} parent=19 // pred_check_branch
          %128 = sbr.rel (%p126) target = $region24
        $region23: #{spatial_attention.1} parent=19 // pred_region
          %p129 = scmp.lt.s32.totalorder %s16, 1
          %s130 = scalar_select %p129, %s16, 1
          %p131 = scmp.lt.s32.totalorder %s17, 0
          %s132 = scalar_select %p131, %s17, 0
          %s133 = smul.addr %s132, 2
          %s134 = smul.addr %s130, 2
          %s135 = sadd.s32 %s133, %s134
          %s136 = smul.addr %s135, 4
          %s137 = scalar_lea.vmem %s0, %s136
        $region24: #{spatial_attention.1} parent=19 // pred_fallthru
          _
      $region20: #{spatial_attention.1} parent=5 // pred_fallthru
        _
      %p138 = scmp.le.s32.totalorder 1, %s9
      %p139 = scmp.lt.s32.totalorder %s9, 3
      %p140 = pnand %p138, %p139
      %p141 = pneg %p140
      // Predicated region
      $region25: #{spatial_attention.1} parent=5 // pred_check
        _
      $region26: #{spatial_attention.1} parent=5 // pred_check_branch
        %143 = sbr.rel (%p140) target = $region28
      $region27: #{spatial_attention.1} parent=5 // pred_region
        %s144 = ssub.s32 %s9, 1
        // Predicated region
        $region29: #{spatial_attention.1} parent=27 // pred_check
          %p145 = pneg %p70
        $region30: #{spatial_attention.1} parent=27 // pred_check_branch
          %147 = sbr.rel (%p145) target = $region32
        $region31: #{spatial_attention.1} parent=27 // pred_region
          %148 = dma.done [#allocation6], 16
        $region32: #{spatial_attention.1} parent=27 // pred_fallthru
          _
        %149 = sfence
        %p150 = scmp.lt.s32.totalorder %s18, 1
        %s151 = scalar_select %p150, %s18, 1
        %p152 = scmp.lt.s32.totalorder %s19, 0
        %s153 = scalar_select %p152, %s19, 0
        %s154 = smul.addr %s153, 2
        %s155 = smul.addr %s151, 2
        %s156 = sadd.s32 %s154, %s155
        %s157 = smul.addr %s156, 4
        %s158 = scalar_lea.vmem %s0, %s157
        %p159 = pneg %p49
        %p160 = pneg %p46
        %p161 = pneg %p70
        %p162 = pneg %p67
        %p163 = pneg %p96
        %p164 = pneg %p93
        %p165 = scmp.lt.s32.totalorder %s18, 1
        %s166 = scalar_select %p165, %s18, 1
        %s167 = smul.addr %s166, 2
        %s168 = scalar_lea.vmem %s2, %s167
        %p169 = scmp.lt.s32.totalorder %s18, 1
        %s170 = scalar_select %p169, %s18, 1
        %p171 = scmp.lt.s32.totalorder %s19, 0
        %s172 = scalar_select %p171, %s19, 0
        %s173 = smul.addr %s172, 2
        %s174 = smul.addr %s170, 2
        %s175 = sadd.s32 %s173, %s174
        %s176 = smul.addr %s175, 4
        %s177 = scalar_lea.vmem %s0, %s176
        %p178 = scmp.lt.s32.totalorder %s18, 1
        %s179 = scalar_select %p178, %s18, 1
        %s180 = smul.addr %s179, 2
        %s181 = scalar_lea.vmem %s2, %s180
        %p182 = scmp.eq.s32.totalorder %s19, 0
        // Predicated region
        $region33: #{spatial_attention.1} parent=27 // pred_check
          %p183 = pneg %p182
        $region34: #{spatial_attention.1} parent=27 // pred_check_branch
          %185 = sbr.rel (%p183) target = $region36
        $region35: #{spatial_attention.1} parent=27 // pred_region
          %v186 = vlaneseq
          %vm187 = vcmp.ge.s32.totalorder %v186, 0
          %vm188 = vcmp.lt.s32.totalorder %v186, 256
          %vm189 = vmand %vm187, %vm188
          %190 = vst.msk [vmem:[#allocation2] sm:$0x3] %vm189, 0.0
          %191 = vst.msk [vmem:[#allocation3] sm:$0x3] %vm189, -inf
        $region36: #{spatial_attention.1} parent=27 // pred_fallthru
          _
        %v192 = vld [vmem:[%s177] sm:$0xff]
        %v193 = vld [vmem:[#allocation2] sm:$0x3]
        %v195 = vcombine.high %v192, %v192
        %vm197 = vcmask 1043456
        %v198 = vsel %vm197, %v192, 0.0
        %v199 = vrot.slane %v198, 4
        %v200 = vadd.f32 %v198, %v199
        %v201 = vrot.slane %v200, 2
        %v202 = vadd.f32 %v200, %v201
        %v203 = vrot.slane %v202, 1
        %v204 = vadd.f32 %v202, %v203
        %v205 = vsel %vm197, %v195, 0.0
        %v206 = vrot.slane %v205, 4
        %v207 = vadd.f32 %v205, %v206
        %v208 = vrot.slane %v207, 2
        %v209 = vadd.f32 %v207, %v208
        %v210 = vrot.slane %v209, 1
        %v211 = vadd.f32 %v209, %v210
        %v214 = vcombine.low %v204, %v211
        %v216 = vunpack.c.l.s4 1966171168
        %v217 = vunpack.c.0.s8 %v216
        %v218 = vlaneseq
        %v219 = vshrl.u32 %v218, 7
        %v220 = vsub.s32 %v217, %v219
        %v221 = vrot.slane %v214, %v220
        %v223 = vunpack.c.l.s4 1966171168
        %v224 = vunpack.c.0.s8 %v223
        %v225 = vlaneseq
        %v226 = vshrl.u32 %v225, 7
        %v227 = vsub.s32 %v224, %v226
        %v228 = vrot.slane %v221, %v227
        %v230 = vadd.f32 %v193, %v228
        %v231 = vlaneseq
        %vm232 = vcmp.ge.s32.totalorder %v231, 0
        %vm233 = vcmp.lt.s32.totalorder %v231, 256
        %vm234 = vmand %vm232, %vm233
        %235 = vst.msk [vmem:[#allocation2] sm:$0x3] %vm234, %v230
        %v236 = vld [vmem:[#allocation3] sm:$0x3]
        %v237 = vsel %vm197, %v192, -inf
        %v238 = vrot.slane %v237, 4
        %v239 = vmax.f32 %v237, %v238
        %v240 = vrot.slane %v239, 2
        %v241 = vmax.f32 %v239, %v240
        %v242 = vrot.slane %v241, 1
        %v243 = vmax.f32 %v241, %v242
        %v244 = vsel %vm197, %v195, -inf
        %v245 = vrot.slane %v244, 4
        %v246 = vmax.f32 %v244, %v245
        %v247 = vrot.slane %v246, 2
        %v248 = vmax.f32 %v246, %v247
        %v249 = vrot.slane %v248, 1
        %v250 = vmax.f32 %v248, %v249
        %v253 = vcombine.low %v243, %v250
        %v255 = vunpack.c.l.s4 1966171168
        %v256 = vunpack.c.0.s8 %v255
        %v257 = vlaneseq
        %v258 = vshrl.u32 %v257, 7
        %v259 = vsub.s32 %v256, %v258
        %v260 = vrot.slane %v253, %v259
        %v262 = vunpack.c.l.s4 1966171168
        %v263 = vunpack.c.0.s8 %v262
        %v264 = vlaneseq
        %v265 = vshrl.u32 %v264, 7
        %v266 = vsub.s32 %v263, %v265
        %v267 = vrot.slane %v260, %v266
        %v269 = vmax.f32 %v236, %v267
        %270 = vst.msk [vmem:[#allocation3] sm:$0x3] %vm234, %v269
        // Predicated region
        $region37: #{spatial_attention.1} parent=27 // pred_check
          %p271 = pneg %p182
        $region38: #{spatial_attention.1} parent=27 // pred_check_branch
          %273 = sbr.rel (%p271) target = $region40
        $region39: #{spatial_attention.1} parent=27 // pred_region
          %vm274 = vcmask 174080
          %275 = vst.msk [vmem:[#allocation4] sm:$0x7] %vm274, 0.0
          %276 = vst.msk [vmem:[#allocation4 + $0x18] sm:$0x7] %vm274, 0.0
          %277 = vst.msk [vmem:[#allocation4 + $0x13] sm:$0x7] %vm274, 0.0
          %278 = vst.msk [vmem:[#allocation4 + $0x2b] sm:$0x7] %vm274, 0.0
          %vm279 = vcmask 23552
          %280 = vst.msk [vmem:[#allocation4 + $0x3] sm:$0xff] %vm279, 0.0
          %281 = vst.msk [vmem:[#allocation4 + $0xb] sm:$0xff] %vm279, 0.0
          %282 = vst.msk [vmem:[#allocation4 + $0x1b] sm:$0xff] %vm279, 0.0
          %283 = vst.msk [vmem:[#allocation4 + $0x23] sm:$0xff] %vm279, 0.0
          %vm284 = vcmask 179352
          %285 = vst.msk [vmem:[#allocation4 + $0x3] sm:$0xff] %vm284, 0.0
          %286 = vst.msk [vmem:[#allocation4 + $0xb] sm:$0xff] %vm284, 0.0
          %287 = vst.msk [vmem:[#allocation4 + $0x1b] sm:$0xff] %vm284, 0.0
          %288 = vst.msk [vmem:[#allocation4 + $0x23] sm:$0xff] %vm284, 0.0
          %v289 = vld [vmem:[#allocation2] sm:$0x1]
          %v290 = vmul.f32 %v289, 0.25
          %v292 = vlaneseq
          %v293 = vshrl.u32 %v292, 7
          %v294 = vsub.s32 0, %v293
          %v295 = vrot.slane %v290, %v294
          %296 = vrot.lane.b32.xlu0 %v295, 3
          %v297 = vpop.permute.xlu0 %296
          %vm299 = vcmask 147480
          %300 = vst.msk [vmem:[#allocation4 + $0x3] sm:$0x1] %vm299, %v297
          %v301 = vld [vmem:[#allocation3] sm:$0x1]
          %v303 = vlaneseq
          %v304 = vshrl.u32 %v303, 7
          %v305 = vsub.s32 0, %v304
          %v306 = vrot.slane %v301, %v305
          %307 = vrot.lane.b32.xlu0 %v306, 3
          %v308 = vpop.permute.xlu0 %307
          %s310 = scalar_lea.vmem [#allocation4], 24
          %311 = vst.msk [vmem:[%s310 + $0x3] sm:$0x1] %vm299, %v308
          %v312 = vld [vmem:[#allocation2] sm:$0x1]
          %v313 = vmul.f32 %v312, 0.25
          %v315 = vlaneseq
          %v316 = vshrl.u32 %v315, 7
          %v317 = vsub.s32 0, %v316
          %v318 = vrot.slane %v313, %v317
          %319 = vrot.lane.b32.xlu0 %v318, 115
          %v320 = vpop.permute.xlu0 %319
          %322 = vst.msk [vmem:[#allocation4 + $0x4] sm:$0x1] %vm299, %v320
          %v323 = vld [vmem:[#allocation3] sm:$0x1]
          %v325 = vlaneseq
          %v326 = vshrl.u32 %v325, 7
          %v327 = vsub.s32 0, %v326
          %v328 = vrot.slane %v323, %v327
          %329 = vrot.lane.b32.xlu0 %v328, 115
          %v330 = vpop.permute.xlu0 %329
          %332 = vst.msk [vmem:[%s310 + $0x4] sm:$0x1] %vm299, %v330
          %v333 = vld [vmem:[#allocation2] sm:$0x1]
          %v334 = vmul.f32 %v333, 0.25
          %v336 = vlaneseq
          %v337 = vshrl.u32 %v336, 7
          %v338 = vsub.s32 0, %v337
          %v339 = vrot.slane %v334, %v338
          %340 = vrot.lane.b32.xlu0 %v339, 99
          %v341 = vpop.permute.xlu0 %340
          %343 = vst.msk [vmem:[#allocation4 + $0x5] sm:$0x1] %vm299, %v341
          %v344 = vld [vmem:[#allocation3] sm:$0x1]
          %v346 = vlaneseq
          %v347 = vshrl.u32 %v346, 7
          %v348 = vsub.s32 0, %v347
          %v349 = vrot.slane %v344, %v348
          %350 = vrot.lane.b32.xlu0 %v349, 99
          %v351 = vpop.permute.xlu0 %350
          %353 = vst.msk [vmem:[%s310 + $0x5] sm:$0x1] %vm299, %v351
          %v354 = vld [vmem:[#allocation2] sm:$0x1]
          %v355 = vmul.f32 %v354, 0.25
          %v357 = vlaneseq
          %v358 = vshrl.u32 %v357, 7
          %v359 = vsub.s32 0, %v358
          %v360 = vrot.slane %v355, %v359
          %361 = vrot.lane.b32.xlu0 %v360, 83
          %v362 = vpop.permute.xlu0 %361
          %364 = vst.msk [vmem:[#allocation4 + $0x6] sm:$0x1] %vm299, %v362
          %v365 = vld [vmem:[#allocation3] sm:$0x1]
          %v367 = vlaneseq
          %v368 = vshrl.u32 %v367, 7
          %v369 = vsub.s32 0, %v368
          %v370 = vrot.slane %v365, %v369
          %371 = vrot.lane.b32.xlu0 %v370, 83
          %v372 = vpop.permute.xlu0 %371
          %374 = vst.msk [vmem:[%s310 + $0x6] sm:$0x1] %vm299, %v372
          %v375 = vld [vmem:[#allocation2] sm:$0x1]
          %v376 = vmul.f32 %v375, 0.25
          %v378 = vlaneseq
          %v379 = vshrl.u32 %v378, 7
          %v380 = vsub.s32 0, %v379
          %v381 = vrot.slane %v376, %v380
          %382 = vrot.lane.b32.xlu0 %v381, 67
          %v383 = vpop.permute.xlu0 %382
          %385 = vst.msk [vmem:[#allocation4 + $0x7] sm:$0x1] %vm299, %v383
          %v386 = vld [vmem:[#allocation3] sm:$0x1]
          %v388 = vlaneseq
          %v389 = vshrl.u32 %v388, 7
          %v390 = vsub.s32 0, %v389
          %v391 = vrot.slane %v386, %v390
          %392 = vrot.lane.b32.xlu0 %v391, 67
          %v393 = vpop.permute.xlu0 %392
          %395 = vst.msk [vmem:[%s310 + $0x7] sm:$0x1] %vm299, %v393
          %v396 = vld [vmem:[#allocation2] sm:$0x1]
          %v397 = vmul.f32 %v396, 0.25
          %v399 = vlaneseq
          %v400 = vshrl.u32 %v399, 7
          %v401 = vsub.s32 0, %v400
          %v402 = vrot.slane %v397, %v401
          %403 = vrot.lane.b32.xlu0 %v402, 51
          %v404 = vpop.permute.xlu0 %403
          %406 = vst.msk [vmem:[#allocation4 + $0x8] sm:$0x1] %vm299, %v404
          %v407 = vld [vmem:[#allocation3] sm:$0x1]
          %v409 = vlaneseq
          %v410 = vshrl.u32 %v409, 7
          %v411 = vsub.s32 0, %v410
          %v412 = vrot.slane %v407, %v411
          %413 = vrot.lane.b32.xlu0 %v412, 51
          %v414 = vpop.permute.xlu0 %413
          %416 = vst.msk [vmem:[%s310 + $0x8] sm:$0x1] %vm299, %v414
          %v417 = vld [vmem:[#allocation2] sm:$0x1]
          %v418 = vmul.f32 %v417, 0.25
          %v420 = vlaneseq
          %v421 = vshrl.u32 %v420, 7
          %v422 = vsub.s32 0, %v421
          %v423 = vrot.slane %v418, %v422
          %424 = vrot.lane.b32.xlu0 %v423, 35
          %v425 = vpop.permute.xlu0 %424
          %427 = vst.msk [vmem:[#allocation4 + $0x9] sm:$0x1] %vm299, %v425
          %v428 = vld [vmem:[#allocation3] sm:$0x1]
          %v430 = vlaneseq
          %v431 = vshrl.u32 %v430, 7
          %v432 = vsub.s32 0, %v431
          %v433 = vrot.slane %v428, %v432
          %434 = vrot.lane.b32.xlu0 %v433, 35
          %v435 = vpop.permute.xlu0 %434
          %437 = vst.msk [vmem:[%s310 + $0x9] sm:$0x1] %vm299, %v435
          %v438 = vld [vmem:[#allocation2] sm:$0x1]
          %v439 = vmul.f32 %v438, 0.25
          %v441 = vlaneseq
          %v442 = vshrl.u32 %v441, 7
          %v443 = vsub.s32 0, %v442
          %v444 = vrot.slane %v439, %v443
          %445 = vrot.lane.b32.xlu0 %v444, 19
          %v446 = vpop.permute.xlu0 %445
          %448 = vst.msk [vmem:[#allocation4 + $0xa] sm:$0x1] %vm299, %v446
          %v449 = vld [vmem:[#allocation3] sm:$0x1]
          %v451 = vlaneseq
          %v452 = vshrl.u32 %v451, 7
          %v453 = vsub.s32 0, %v452
          %v454 = vrot.slane %v449, %v453
          %455 = vrot.lane.b32.xlu0 %v454, 19
          %v456 = vpop.permute.xlu0 %455
          %458 = vst.msk [vmem:[%s310 + $0xa] sm:$0x1] %vm299, %v456
          %v459 = vld [vmem:[#allocation2 + $0x1] sm:$0x1]
          %v460 = vmul.f32 %v459, 0.25
          %v462 = vlaneseq
          %v463 = vshrl.u32 %v462, 7
          %v464 = vsub.s32 0, %v463
          %v465 = vrot.slane %v460, %v464
          %466 = vrot.lane.b32.xlu0 %v465, 3
          %v467 = vpop.permute.xlu0 %466
          %469 = vst.msk [vmem:[#allocation4 + $0xb] sm:$0x1] %vm299, %v467
          %v470 = vld [vmem:[#allocation3 + $0x1] sm:$0x1]
          %v472 = vlaneseq
          %v473 = vshrl.u32 %v472, 7
          %v474 = vsub.s32 0, %v473
          %v475 = vrot.slane %v470, %v474
          %476 = vrot.lane.b32.xlu0 %v475, 3
          %v477 = vpop.permute.xlu0 %476
          %479 = vst.msk [vmem:[%s310 + $0xb] sm:$0x1] %vm299, %v477
          %v480 = vld [vmem:[#allocation2 + $0x1] sm:$0x1]
          %v481 = vmul.f32 %v480, 0.25
          %v483 = vlaneseq
          %v484 = vshrl.u32 %v483, 7
          %v485 = vsub.s32 0, %v484
          %v486 = vrot.slane %v481, %v485
          %487 = vrot.lane.b32.xlu0 %v486, 115
          %v488 = vpop.permute.xlu0 %487
          %490 = vst.msk [vmem:[#allocation4 + $0xc] sm:$0x1] %vm299, %v488
          %v491 = vld [vmem:[#allocation3 + $0x1] sm:$0x1]
          %v493 = vlaneseq
          %v494 = vshrl.u32 %v493, 7
          %v495 = vsub.s32 0, %v494
          %v496 = vrot.slane %v491, %v495
          %497 = vrot.lane.b32.xlu0 %v496, 115
          %v498 = vpop.permute.xlu0 %497
          %500 = vst.msk [vmem:[%s310 + $0xc] sm:$0x1] %vm299, %v498
          %v501 = vld [vmem:[#allocation2 + $0x1] sm:$0x1]
          %v502 = vmul.f32 %v501, 0.25
          %v504 = vlaneseq
          %v505 = vshrl.u32 %v504, 7
          %v506 = vsub.s32 0, %v505
          %v507 = vrot.slane %v502, %v506
          %508 = vrot.lane.b32.xlu0 %v507, 99
          %v509 = vpop.permute.xlu0 %508
          %511 = vst.msk [vmem:[#allocation4 + $0xd] sm:$0x1] %vm299, %v509
          %v512 = vld [vmem:[#allocation3 + $0x1] sm:$0x1]
          %v514 = vlaneseq
          %v515 = vshrl.u32 %v514, 7
          %v516 = vsub.s32 0, %v515
          %v517 = vrot.slane %v512, %v516
          %518 = vrot.lane.b32.xlu0 %v517, 99
          %v519 = vpop.permute.xlu0 %518
          %521 = vst.msk [vmem:[%s310 + $0xd] sm:$0x1] %vm299, %v519
          %v522 = vld [vmem:[#allocation2 + $0x1] sm:$0x1]
          %v523 = vmul.f32 %v522, 0.25
          %v525 = vlaneseq
          %v526 = vshrl.u32 %v525, 7
          %v527 = vsub.s32 0, %v526
          %v528 = vrot.slane %v523, %v527
          %529 = vrot.lane.b32.xlu0 %v528, 83
          %v530 = vpop.permute.xlu0 %529
          %532 = vst.msk [vmem:[#allocation4 + $0xe] sm:$0x1] %vm299, %v530
          %v533 = vld [vmem:[#allocation3 + $0x1] sm:$0x1]
          %v535 = vlaneseq
          %v536 = vshrl.u32 %v535, 7
          %v537 = vsub.s32 0, %v536
          %v538 = vrot.slane %v533, %v537
          %539 = vrot.lane.b32.xlu0 %v538, 83
          %v540 = vpop.permute.xlu0 %539
          %542 = vst.msk [vmem:[%s310 + $0xe] sm:$0x1] %vm299, %v540
          %v543 = vld [vmem:[#allocation2 + $0x1] sm:$0x1]
          %v544 = vmul.f32 %v543, 0.25
          %v546 = vlaneseq
          %v547 = vshrl.u32 %v546, 7
          %v548 = vsub.s32 0, %v547
          %v549 = vrot.slane %v544, %v548
          %550 = vrot.lane.b32.xlu0 %v549, 67
          %v551 = vpop.permute.xlu0 %550
          %553 = vst.msk [vmem:[#allocation4 + $0xf] sm:$0x1] %vm299, %v551
          %v554 = vld [vmem:[#allocation3 + $0x1] sm:$0x1]
          %v556 = vlaneseq
          %v557 = vshrl.u32 %v556, 7
          %v558 = vsub.s32 0, %v557
          %v559 = vrot.slane %v554, %v558
          %560 = vrot.lane.b32.xlu0 %v559, 67
          %v561 = vpop.permute.xlu0 %560
          %563 = vst.msk [vmem:[%s310 + $0xf] sm:$0x1] %vm299, %v561
          %v564 = vld [vmem:[#allocation2 + $0x1] sm:$0x1]
          %v565 = vmul.f32 %v564, 0.25
          %v567 = vlaneseq
          %v568 = vshrl.u32 %v567, 7
          %v569 = vsub.s32 0, %v568
          %v570 = vrot.slane %v565, %v569
          %571 = vrot.lane.b32.xlu0 %v570, 51
          %v572 = vpop.permute.xlu0 %571
          %574 = vst.msk [vmem:[#allocation4 + $0x10] sm:$0x1] %vm299, %v572
          %v575 = vld [vmem:[#allocation3 + $0x1] sm:$0x1]
          %v577 = vlaneseq
          %v578 = vshrl.u32 %v577, 7
          %v579 = vsub.s32 0, %v578
          %v580 = vrot.slane %v575, %v579
          %581 = vrot.lane.b32.xlu0 %v580, 51
          %v582 = vpop.permute.xlu0 %581
          %584 = vst.msk [vmem:[%s310 + $0x10] sm:$0x1] %vm299, %v582
          %v585 = vld [vmem:[#allocation2 + $0x1] sm:$0x1]
          %v586 = vmul.f32 %v585, 0.25
          %v588 = vlaneseq
          %v589 = vshrl.u32 %v588, 7
          %v590 = vsub.s32 0, %v589
          %v591 = vrot.slane %v586, %v590
          %592 = vrot.lane.b32.xlu0 %v591, 35
          %v593 = vpop.permute.xlu0 %592
          %595 = vst.msk [vmem:[#allocation4 + $0x11] sm:$0x1] %vm299, %v593
          %v596 = vld [vmem:[#allocation3 + $0x1] sm:$0x1]
          %v598 = vlaneseq
          %v599 = vshrl.u32 %v598, 7
          %v600 = vsub.s32 0, %v599
          %v601 = vrot.slane %v596, %v600
          %602 = vrot.lane.b32.xlu0 %v601, 35
          %v603 = vpop.permute.xlu0 %602
          %605 = vst.msk [vmem:[%s310 + $0x11] sm:$0x1] %vm299, %v603
          %v606 = vld [vmem:[#allocation2 + $0x1] sm:$0x1]
          %v607 = vmul.f32 %v606, 0.25
          %v609 = vlaneseq
          %v610 = vshrl.u32 %v609, 7
          %v611 = vsub.s32 0, %v610
          %v612 = vrot.slane %v607, %v611
          %613 = vrot.lane.b32.xlu0 %v612, 19
          %v614 = vpop.permute.xlu0 %613
          %616 = vst.msk [vmem:[#allocation4 + $0x12] sm:$0x1] %vm299, %v614
          %v617 = vld [vmem:[#allocation3 + $0x1] sm:$0x1]
          %v619 = vlaneseq
          %v620 = vshrl.u32 %v619, 7
          %v621 = vsub.s32 0, %v620
          %v622 = vrot.slane %v617, %v621
          %623 = vrot.lane.b32.xlu0 %v622, 19
          %v624 = vpop.permute.xlu0 %623
          %626 = vst.msk [vmem:[%s310 + $0x12] sm:$0x1] %vm299, %v624
          %s627 = sld [smem:[#allocation5]]
          %v628 = vld [vmem:[#allocation4] sm:$0xff]
          %v629 = vld [vmem:[#allocation4 + $0x8] sm:$0xff]
          %v630 = vstv %s627
          %v631 = vmul.f32 %v630, %v628
          %v632 = vmul.f32 %v630, %v629
          %v633 = vadd.f32 %v631, 0.0
          %v634 = vadd.f32 %v632, 0.0
          %s635 = sld [smem:[#allocation5 + $0x1]]
          %v636 = vstv %s635
          %v637 = vmul.f32 %v636, %v628
          %v638 = vmul.f32 %v636, %v629
          %641 = vrot.lane.b32.xlu0 %v637, 127
          %v642 = vpop.permute.xlu0 %641
          %643 = vrot.lane.b32.xlu0 %v638, 127
          %v644 = vpop.permute.xlu0 %643
          %v647 = vadd.f32 %v633, %v642
          %v648 = vadd.f32 %v634, %v644
          %s649 = sld [smem:[#allocation5 + $0x2]]
          %v650 = vstv %s649
          %v651 = vmul.f32 %v650, %v628
          %v652 = vmul.f32 %v650, %v629
          %655 = vrot.lane.b32.xlu0 %v651, 126
          %v656 = vpop.permute.xlu0 %655
          %657 = vrot.lane.b32.xlu0 %v652, 126
          %v658 = vpop.permute.xlu0 %657
          %v661 = vadd.f32 %v647, %v656
          %v662 = vadd.f32 %v648, %v658
          %s663 = sld [smem:[#allocation5 + $0x3]]
          %v664 = vstv %s663
          %v665 = vmul.f32 %v664, %v628
          %v666 = vmul.f32 %v664, %v629
          %669 = vrot.lane.b32.xlu0 %v665, 125
          %v670 = vpop.permute.xlu0 %669
          %671 = vrot.lane.b32.xlu0 %v666, 125
          %v672 = vpop.permute.xlu0 %671
          %v675 = vadd.f32 %v661, %v670
          %v676 = vadd.f32 %v662, %v672
          %s677 = sld [smem:[#allocation5 + $0x4]]
          %v678 = vstv %s677
          %v679 = vmul.f32 %v678, %v628
          %v680 = vmul.f32 %v678, %v629
          %683 = vrot.lane.b32.xlu0 %v679, 124
          %v684 = vpop.permute.xlu0 %683
          %685 = vrot.lane.b32.xlu0 %v680, 124
          %v686 = vpop.permute.xlu0 %685
          %v689 = vadd.f32 %v675, %v684
          %v690 = vadd.f32 %v676, %v686
          %s691 = sld [smem:[#allocation5 + $0x5]]
          %v692 = vstv %s691
          %v693 = vmul.f32 %v692, %v628
          %v694 = vmul.f32 %v692, %v629
          %697 = vrot.lane.b32.xlu0 %v693, 123
          %v698 = vpop.permute.xlu0 %697
          %699 = vrot.lane.b32.xlu0 %v694, 123
          %v700 = vpop.permute.xlu0 %699
          %v703 = vadd.f32 %v689, %v698
          %v704 = vadd.f32 %v690, %v700
          %s705 = sld [smem:[#allocation5 + $0x6]]
          %v706 = vstv %s705
          %v707 = vmul.f32 %v706, %v628
          %v708 = vmul.f32 %v706, %v629
          %711 = vrot.lane.b32.xlu0 %v707, 122
          %v712 = vpop.permute.xlu0 %711
          %713 = vrot.lane.b32.xlu0 %v708, 122
          %v714 = vpop.permute.xlu0 %713
          %v717 = vadd.f32 %v703, %v712
          %v718 = vadd.f32 %v704, %v714
          %s719 = sld [smem:[#allocation5 + $0x7]]
          %v720 = vld [vmem:[#allocation4 + $0x1] sm:$0xff]
          %v721 = vld [vmem:[#allocation4 + $0x9] sm:$0xff]
          %v722 = vstv %s719
          %v723 = vmul.f32 %v722, %v720
          %v724 = vmul.f32 %v722, %v721
          %v725 = vadd.f32 %v717, %v723
          %v726 = vadd.f32 %v718, %v724
          %s727 = sld [smem:[#allocation5 + $0x8]]
          %v728 = vstv %s727
          %v729 = vmul.f32 %v728, %v720
          %v730 = vmul.f32 %v728, %v721
          %733 = vrot.lane.b32.xlu0 %v729, 127
          %v734 = vpop.permute.xlu0 %733
          %735 = vrot.lane.b32.xlu0 %v730, 127
          %v736 = vpop.permute.xlu0 %735
          %v739 = vadd.f32 %v725, %v734
          %v740 = vadd.f32 %v726, %v736
          %s741 = sld [smem:[#allocation5 + $0x9]]
          %v742 = vstv %s741
          %v743 = vmul.f32 %v742, %v720
          %v744 = vmul.f32 %v742, %v721
          %747 = vrot.lane.b32.xlu0 %v743, 126
          %v748 = vpop.permute.xlu0 %747
          %749 = vrot.lane.b32.xlu0 %v744, 126
          %v750 = vpop.permute.xlu0 %749
          %v753 = vadd.f32 %v739, %v748
          %v754 = vadd.f32 %v740, %v750
          %s755 = sld [smem:[#allocation5 + $0xa]]
          %v756 = vstv %s755
          %v757 = vmul.f32 %v756, %v720
          %v758 = vmul.f32 %v756, %v721
          %761 = vrot.lane.b32.xlu0 %v757, 125
          %v762 = vpop.permute.xlu0 %761
          %763 = vrot.lane.b32.xlu0 %v758, 125
          %v764 = vpop.permute.xlu0 %763
          %v767 = vadd.f32 %v753, %v762
          %v768 = vadd.f32 %v754, %v764
          %s769 = sld [smem:[#allocation5 + $0xb]]
          %v770 = vstv %s769
          %v771 = vmul.f32 %v770, %v720
          %v772 = vmul.f32 %v770, %v721
          %775 = vrot.lane.b32.xlu0 %v771, 124
          %v776 = vpop.permute.xlu0 %775
          %777 = vrot.lane.b32.xlu0 %v772, 124
          %v778 = vpop.permute.xlu0 %777
          %v781 = vadd.f32 %v767, %v776
          %v782 = vadd.f32 %v768, %v778
          %s783 = sld [smem:[#allocation5 + $0xc]]
          %v784 = vstv %s783
          %v785 = vmul.f32 %v784, %v720
          %v786 = vmul.f32 %v784, %v721
          %789 = vrot.lane.b32.xlu0 %v785, 123
          %v790 = vpop.permute.xlu0 %789
          %791 = vrot.lane.b32.xlu0 %v786, 123
          %v792 = vpop.permute.xlu0 %791
          %v795 = vadd.f32 %v781, %v790
          %v796 = vadd.f32 %v782, %v792
          %s797 = sld [smem:[#allocation5 + $0xd]]
          %v798 = vstv %s797
          %v799 = vmul.f32 %v798, %v720
          %v800 = vmul.f32 %v798, %v721
          %803 = vrot.lane.b32.xlu0 %v799, 122
          %v804 = vpop.permute.xlu0 %803
          %805 = vrot.lane.b32.xlu0 %v800, 122
          %v806 = vpop.permute.xlu0 %805
          %v809 = vadd.f32 %v795, %v804
          %v810 = vadd.f32 %v796, %v806
          %s811 = sld [smem:[#allocation5 + $0xe]]
          %v812 = vld [vmem:[#allocation4 + $0x2] sm:$0xff]
          %v813 = vld [vmem:[#allocation4 + $0xa] sm:$0xff]
          %v814 = vstv %s811
          %v815 = vmul.f32 %v814, %v812
          %v816 = vmul.f32 %v814, %v813
          %v817 = vadd.f32 %v809, %v815
          %v818 = vadd.f32 %v810, %v816
          %s819 = sld [smem:[#allocation5 + $0xf]]
          %v820 = vstv %s819
          %v821 = vmul.f32 %v820, %v812
          %v822 = vmul.f32 %v820, %v813
          %825 = vrot.lane.b32.xlu0 %v821, 127
          %v826 = vpop.permute.xlu0 %825
          %827 = vrot.lane.b32.xlu0 %v822, 127
          %v828 = vpop.permute.xlu0 %827
          %v831 = vadd.f32 %v817, %v826
          %v832 = vadd.f32 %v818, %v828
          %s833 = sld [smem:[#allocation5 + $0x10]]
          %v834 = vstv %s833
          %v835 = vmul.f32 %v834, %v812
          %v836 = vmul.f32 %v834, %v813
          %839 = vrot.lane.b32.xlu0 %v835, 126
          %v840 = vpop.permute.xlu0 %839
          %841 = vrot.lane.b32.xlu0 %v836, 126
          %v842 = vpop.permute.xlu0 %841
          %v845 = vadd.f32 %v831, %v840
          %v846 = vadd.f32 %v832, %v842
          %s847 = sld [smem:[#allocation5 + $0x11]]
          %v848 = vstv %s847
          %v849 = vmul.f32 %v848, %v812
          %v850 = vmul.f32 %v848, %v813
          %853 = vrot.lane.b32.xlu0 %v849, 125
          %v854 = vpop.permute.xlu0 %853
          %855 = vrot.lane.b32.xlu0 %v850, 125
          %v856 = vpop.permute.xlu0 %855
          %v859 = vadd.f32 %v845, %v854
          %v860 = vadd.f32 %v846, %v856
          %s861 = sld [smem:[#allocation5 + $0x12]]
          %v862 = vstv %s861
          %v863 = vmul.f32 %v862, %v812
          %v864 = vmul.f32 %v862, %v813
          %867 = vrot.lane.b32.xlu0 %v863, 124
          %v868 = vpop.permute.xlu0 %867
          %869 = vrot.lane.b32.xlu0 %v864, 124
          %v870 = vpop.permute.xlu0 %869
          %v873 = vadd.f32 %v859, %v868
          %v874 = vadd.f32 %v860, %v870
          %s875 = sld [smem:[#allocation5 + $0x13]]
          %v876 = vstv %s875
          %v877 = vmul.f32 %v876, %v812
          %v878 = vmul.f32 %v876, %v813
          %881 = vrot.lane.b32.xlu0 %v877, 123
          %v882 = vpop.permute.xlu0 %881
          %883 = vrot.lane.b32.xlu0 %v878, 123
          %v884 = vpop.permute.xlu0 %883
          %v887 = vadd.f32 %v873, %v882
          %v888 = vadd.f32 %v874, %v884
          %s889 = sld [smem:[#allocation5 + $0x14]]
          %v890 = vstv %s889
          %v891 = vmul.f32 %v890, %v812
          %v892 = vmul.f32 %v890, %v813
          %895 = vrot.lane.b32.xlu0 %v891, 122
          %v896 = vpop.permute.xlu0 %895
          %897 = vrot.lane.b32.xlu0 %v892, 122
          %v898 = vpop.permute.xlu0 %897
          %v901 = vadd.f32 %v887, %v896
          %v902 = vadd.f32 %v888, %v898
          %s903 = sld [smem:[#allocation5 + $0x15]]
          %v904 = vld [vmem:[#allocation4 + $0x3] sm:$0xff]
          %v905 = vld [vmem:[#allocation4 + $0xb] sm:$0xff]
          %v906 = vstv %s903
          %v907 = vmul.f32 %v906, %v904
          %v908 = vmul.f32 %v906, %v905
          %v909 = vadd.f32 %v901, %v907
          %v910 = vadd.f32 %v902, %v908
          %s911 = sld [smem:[#allocation5 + $0x16]]
          %v912 = vstv %s911
          %v913 = vmul.f32 %v912, %v904
          %v914 = vmul.f32 %v912, %v905
          %917 = vrot.lane.b32.xlu0 %v913, 127
          %v918 = vpop.permute.xlu0 %917
          %919 = vrot.lane.b32.xlu0 %v914, 127
          %v920 = vpop.permute.xlu0 %919
          %v923 = vadd.f32 %v909, %v918
          %v924 = vadd.f32 %v910, %v920
          %s925 = sld [smem:[#allocation5 + $0x17]]
          %v926 = vstv %s925
          %v927 = vmul.f32 %v926, %v904
          %v928 = vmul.f32 %v926, %v905
          %931 = vrot.lane.b32.xlu0 %v927, 126
          %v932 = vpop.permute.xlu0 %931
          %933 = vrot.lane.b32.xlu0 %v928, 126
          %v934 = vpop.permute.xlu0 %933
          %v937 = vadd.f32 %v923, %v932
          %v938 = vadd.f32 %v924, %v934
          %s939 = sld [smem:[#allocation5 + $0x18]]
          %v940 = vstv %s939
          %v941 = vmul.f32 %v940, %v904
          %v942 = vmul.f32 %v940, %v905
          %945 = vrot.lane.b32.xlu0 %v941, 125
          %v946 = vpop.permute.xlu0 %945
          %947 = vrot.lane.b32.xlu0 %v942, 125
          %v948 = vpop.permute.xlu0 %947
          %v951 = vadd.f32 %v937, %v946
          %v952 = vadd.f32 %v938, %v948
          %s953 = sld [smem:[#allocation5 + $0x19]]
          %v954 = vstv %s953
          %v955 = vmul.f32 %v954, %v904
          %v956 = vmul.f32 %v954, %v905
          %959 = vrot.lane.b32.xlu0 %v955, 124
          %v960 = vpop.permute.xlu0 %959
          %961 = vrot.lane.b32.xlu0 %v956, 124
          %v962 = vpop.permute.xlu0 %961
          %v965 = vadd.f32 %v951, %v960
          %v966 = vadd.f32 %v952, %v962
          %s967 = sld [smem:[#allocation5 + $0x1a]]
          %v968 = vstv %s967
          %v969 = vmul.f32 %v968, %v904
          %v970 = vmul.f32 %v968, %v905
          %973 = vrot.lane.b32.xlu0 %v969, 123
          %v974 = vpop.permute.xlu0 %973
          %975 = vrot.lane.b32.xlu0 %v970, 123
          %v976 = vpop.permute.xlu0 %975
          %v979 = vadd.f32 %v965, %v974
          %v980 = vadd.f32 %v966, %v976
          %s981 = sld [smem:[#allocation5 + $0x1b]]
          %v982 = vstv %s981
          %v983 = vmul.f32 %v982, %v904
          %v984 = vmul.f32 %v982, %v905
          %987 = vrot.lane.b32.xlu0 %v983, 122
          %v988 = vpop.permute.xlu0 %987
          %989 = vrot.lane.b32.xlu0 %v984, 122
          %v990 = vpop.permute.xlu0 %989
          %v993 = vadd.f32 %v979, %v988
          %v994 = vadd.f32 %v980, %v990
          %s995 = sld [smem:[#allocation5 + $0x1c]]
          %v996 = vld [vmem:[#allocation4 + $0x4] sm:$0xff]
          %v997 = vld [vmem:[#allocation4 + $0xc] sm:$0xff]
          %v998 = vstv %s995
          %v999 = vmul.f32 %v998, %v996
          %v1000 = vmul.f32 %v998, %v997
          %v1001 = vadd.f32 %v993, %v999
          %v1002 = vadd.f32 %v994, %v1000
          %s1003 = sld [smem:[#allocation5 + $0x1d]]
          %v1004 = vstv %s1003
          %v1005 = vmul.f32 %v1004, %v996
          %v1006 = vmul.f32 %v1004, %v997
          %1009 = vrot.lane.b32.xlu0 %v1005, 127
          %v1010 = vpop.permute.xlu0 %1009
          %1011 = vrot.lane.b32.xlu0 %v1006, 127
          %v1012 = vpop.permute.xlu0 %1011
          %v1015 = vadd.f32 %v1001, %v1010
          %v1016 = vadd.f32 %v1002, %v1012
          %s1017 = sld [smem:[#allocation5 + $0x1e]]
          %v1018 = vstv %s1017
          %v1019 = vmul.f32 %v1018, %v996
          %v1020 = vmul.f32 %v1018, %v997
          %1023 = vrot.lane.b32.xlu0 %v1019, 126
          %v1024 = vpop.permute.xlu0 %1023
          %1025 = vrot.lane.b32.xlu0 %v1020, 126
          %v1026 = vpop.permute.xlu0 %1025
          %v1029 = vadd.f32 %v1015, %v1024
          %v1030 = vadd.f32 %v1016, %v1026
          %s1031 = sld [smem:[#allocation5 + $0x1f]]
          %v1032 = vstv %s1031
          %v1033 = vmul.f32 %v1032, %v996
          %v1034 = vmul.f32 %v1032, %v997
          %1037 = vrot.lane.b32.xlu0 %v1033, 125
          %v1038 = vpop.permute.xlu0 %1037
          %1039 = vrot.lane.b32.xlu0 %v1034, 125
          %v1040 = vpop.permute.xlu0 %1039
          %v1043 = vadd.f32 %v1029, %v1038
          %v1044 = vadd.f32 %v1030, %v1040
          %s1045 = sld [smem:[#allocation5 + $0x20]]
          %v1046 = vstv %s1045
          %v1047 = vmul.f32 %v1046, %v996
          %v1048 = vmul.f32 %v1046, %v997
          %1051 = vrot.lane.b32.xlu0 %v1047, 124
          %v1052 = vpop.permute.xlu0 %1051
          %1053 = vrot.lane.b32.xlu0 %v1048, 124
          %v1054 = vpop.permute.xlu0 %1053
          %v1057 = vadd.f32 %v1043, %v1052
          %v1058 = vadd.f32 %v1044, %v1054
          %s1059 = sld [smem:[#allocation5 + $0x21]]
          %v1060 = vstv %s1059
          %v1061 = vmul.f32 %v1060, %v996
          %v1062 = vmul.f32 %v1060, %v997
          %1065 = vrot.lane.b32.xlu0 %v1061, 123
          %v1066 = vpop.permute.xlu0 %1065
          %1067 = vrot.lane.b32.xlu0 %v1062, 123
          %v1068 = vpop.permute.xlu0 %1067
          %v1071 = vadd.f32 %v1057, %v1066
          %v1072 = vadd.f32 %v1058, %v1068
          %s1073 = sld [smem:[#allocation5 + $0x22]]
          %v1074 = vstv %s1073
          %v1075 = vmul.f32 %v1074, %v996
          %v1076 = vmul.f32 %v1074, %v997
          %1079 = vrot.lane.b32.xlu0 %v1075, 122
          %v1080 = vpop.permute.xlu0 %1079
          %1081 = vrot.lane.b32.xlu0 %v1076, 122
          %v1082 = vpop.permute.xlu0 %1081
          %v1085 = vadd.f32 %v1071, %v1080
          %v1086 = vadd.f32 %v1072, %v1082
          %s1087 = sld [smem:[#allocation5 + $0x23]]
          %v1088 = vld [vmem:[#allocation4 + $0x5] sm:$0xff]
          %v1089 = vld [vmem:[#allocation4 + $0xd] sm:$0xff]
          %v1090 = vstv %s1087
          %v1091 = vmul.f32 %v1090, %v1088
          %v1092 = vmul.f32 %v1090, %v1089
          %v1093 = vadd.f32 %v1085, %v1091
          %v1094 = vadd.f32 %v1086, %v1092
          %s1095 = sld [smem:[#allocation5 + $0x24]]
          %v1096 = vstv %s1095
          %v1097 = vmul.f32 %v1096, %v1088
          %v1098 = vmul.f32 %v1096, %v1089
          %1101 = vrot.lane.b32.xlu0 %v1097, 127
          %v1102 = vpop.permute.xlu0 %1101
          %1103 = vrot.lane.b32.xlu0 %v1098, 127
          %v1104 = vpop.permute.xlu0 %1103
          %v1107 = vadd.f32 %v1093, %v1102
          %v1108 = vadd.f32 %v1094, %v1104
          %s1109 = sld [smem:[#allocation5 + $0x25]]
          %v1110 = vstv %s1109
          %v1111 = vmul.f32 %v1110, %v1088
          %v1112 = vmul.f32 %v1110, %v1089
          %1115 = vrot.lane.b32.xlu0 %v1111, 126
          %v1116 = vpop.permute.xlu0 %1115
          %1117 = vrot.lane.b32.xlu0 %v1112, 126
          %v1118 = vpop.permute.xlu0 %1117
          %v1121 = vadd.f32 %v1107, %v1116
          %v1122 = vadd.f32 %v1108, %v1118
          %s1123 = sld [smem:[#allocation5 + $0x26]]
          %v1124 = vstv %s1123
          %v1125 = vmul.f32 %v1124, %v1088
          %v1126 = vmul.f32 %v1124, %v1089
          %1129 = vrot.lane.b32.xlu0 %v1125, 125
          %v1130 = vpop.permute.xlu0 %1129
          %1131 = vrot.lane.b32.xlu0 %v1126, 125
          %v1132 = vpop.permute.xlu0 %1131
          %v1135 = vadd.f32 %v1121, %v1130
          %v1136 = vadd.f32 %v1122, %v1132
          %s1137 = sld [smem:[#allocation5 + $0x27]]
          %v1138 = vstv %s1137
          %v1139 = vmul.f32 %v1138, %v1088
          %v1140 = vmul.f32 %v1138, %v1089
          %1143 = vrot.lane.b32.xlu0 %v1139, 124
          %v1144 = vpop.permute.xlu0 %1143
          %1145 = vrot.lane.b32.xlu0 %v1140, 124
          %v1146 = vpop.permute.xlu0 %1145
          %v1149 = vadd.f32 %v1135, %v1144
          %v1150 = vadd.f32 %v1136, %v1146
          %s1151 = sld [smem:[#allocation5 + $0x28]]
          %v1152 = vstv %s1151
          %v1153 = vmul.f32 %v1152, %v1088
          %v1154 = vmul.f32 %v1152, %v1089
          %1157 = vrot.lane.b32.xlu0 %v1153, 123
          %v1158 = vpop.permute.xlu0 %1157
          %1159 = vrot.lane.b32.xlu0 %v1154, 123
          %v1160 = vpop.permute.xlu0 %1159
          %v1163 = vadd.f32 %v1149, %v1158
          %v1164 = vadd.f32 %v1150, %v1160
          %s1165 = sld [smem:[#allocation5 + $0x29]]
          %v1166 = vstv %s1165
          %v1167 = vmul.f32 %v1166, %v1088
          %v1168 = vmul.f32 %v1166, %v1089
          %1171 = vrot.lane.b32.xlu0 %v1167, 122
          %v1172 = vpop.permute.xlu0 %1171
          %1173 = vrot.lane.b32.xlu0 %v1168, 122
          %v1174 = vpop.permute.xlu0 %1173
          %v1177 = vadd.f32 %v1163, %v1172
          %v1178 = vadd.f32 %v1164, %v1174
          %s1179 = sld [smem:[#allocation5 + $0x2a]]
          %v1180 = vld [vmem:[#allocation4 + $0x6] sm:$0xff]
          %v1181 = vld [vmem:[#allocation4 + $0xe] sm:$0xff]
          %v1182 = vstv %s1179
          %v1183 = vmul.f32 %v1182, %v1180
          %v1184 = vmul.f32 %v1182, %v1181
          %v1185 = vadd.f32 %v1177, %v1183
          %v1186 = vadd.f32 %v1178, %v1184
          %s1187 = sld [smem:[#allocation5 + $0x2b]]
          %v1188 = vstv %s1187
          %v1189 = vmul.f32 %v1188, %v1180
          %v1190 = vmul.f32 %v1188, %v1181
          %1193 = vrot.lane.b32.xlu0 %v1189, 127
          %v1194 = vpop.permute.xlu0 %1193
          %1195 = vrot.lane.b32.xlu0 %v1190, 127
          %v1196 = vpop.permute.xlu0 %1195
          %v1199 = vadd.f32 %v1185, %v1194
          %v1200 = vadd.f32 %v1186, %v1196
          %s1201 = sld [smem:[#allocation5 + $0x2c]]
          %v1202 = vstv %s1201
          %v1203 = vmul.f32 %v1202, %v1180
          %v1204 = vmul.f32 %v1202, %v1181
          %1207 = vrot.lane.b32.xlu0 %v1203, 126
          %v1208 = vpop.permute.xlu0 %1207
          %1209 = vrot.lane.b32.xlu0 %v1204, 126
          %v1210 = vpop.permute.xlu0 %1209
          %v1213 = vadd.f32 %v1199, %v1208
          %v1214 = vadd.f32 %v1200, %v1210
          %s1215 = sld [smem:[#allocation5 + $0x2d]]
          %v1216 = vstv %s1215
          %v1217 = vmul.f32 %v1216, %v1180
          %v1218 = vmul.f32 %v1216, %v1181
          %1221 = vrot.lane.b32.xlu0 %v1217, 125
          %v1222 = vpop.permute.xlu0 %1221
          %1223 = vrot.lane.b32.xlu0 %v1218, 125
          %v1224 = vpop.permute.xlu0 %1223
          %v1227 = vadd.f32 %v1213, %v1222
          %v1228 = vadd.f32 %v1214, %v1224
          %s1229 = sld [smem:[#allocation5 + $0x2e]]
          %v1230 = vstv %s1229
          %v1231 = vmul.f32 %v1230, %v1180
          %v1232 = vmul.f32 %v1230, %v1181
          %1235 = vrot.lane.b32.xlu0 %v1231, 124
          %v1236 = vpop.permute.xlu0 %1235
          %1237 = vrot.lane.b32.xlu0 %v1232, 124
          %v1238 = vpop.permute.xlu0 %1237
          %v1241 = vadd.f32 %v1227, %v1236
          %v1242 = vadd.f32 %v1228, %v1238
          %s1243 = sld [smem:[#allocation5 + $0x2f]]
          %v1244 = vstv %s1243
          %v1245 = vmul.f32 %v1244, %v1180
          %v1246 = vmul.f32 %v1244, %v1181
          %1249 = vrot.lane.b32.xlu0 %v1245, 123
          %v1250 = vpop.permute.xlu0 %1249
          %1251 = vrot.lane.b32.xlu0 %v1246, 123
          %v1252 = vpop.permute.xlu0 %1251
          %v1255 = vadd.f32 %v1241, %v1250
          %v1256 = vadd.f32 %v1242, %v1252
          %s1257 = sld [smem:[#allocation5 + $0x30]]
          %v1258 = vstv %s1257
          %v1259 = vmul.f32 %v1258, %v1180
          %v1260 = vmul.f32 %v1258, %v1181
          %1263 = vrot.lane.b32.xlu0 %v1259, 122
          %v1264 = vpop.permute.xlu0 %1263
          %1265 = vrot.lane.b32.xlu0 %v1260, 122
          %v1266 = vpop.permute.xlu0 %1265
          %v1269 = vadd.f32 %v1255, %v1264
          %v1270 = vadd.f32 %v1256, %v1266
          %s1271 = sld [smem:[#allocation5 + $0x31]]
          %v1272 = vld [vmem:[%s310] sm:$0xff]
          %v1273 = vld [vmem:[%s310 + $0x8] sm:$0xff]
          %v1274 = vstv %s1271
          %v1275 = vmul.f32 %v1274, %v1272
          %v1276 = vmul.f32 %v1274, %v1273
          %v1277 = vadd.f32 %v1269, %v1275
          %v1278 = vadd.f32 %v1270, %v1276
          %s1279 = sld [smem:[#allocation5 + $0x32]]
          %v1280 = vstv %s1279
          %v1281 = vmul.f32 %v1280, %v1272
          %v1282 = vmul.f32 %v1280, %v1273
          %1285 = vrot.lane.b32.xlu0 %v1281, 127
          %v1286 = vpop.permute.xlu0 %1285
          %1287 = vrot.lane.b32.xlu0 %v1282, 127
          %v1288 = vpop.permute.xlu0 %1287
          %v1291 = vadd.f32 %v1277, %v1286
          %v1292 = vadd.f32 %v1278, %v1288
          %s1293 = sld [smem:[#allocation5 + $0x33]]
          %v1294 = vstv %s1293
          %v1295 = vmul.f32 %v1294, %v1272
          %v1296 = vmul.f32 %v1294, %v1273
          %1299 = vrot.lane.b32.xlu0 %v1295, 126
          %v1300 = vpop.permute.xlu0 %1299
          %1301 = vrot.lane.b32.xlu0 %v1296, 126
          %v1302 = vpop.permute.xlu0 %1301
          %v1305 = vadd.f32 %v1291, %v1300
          %v1306 = vadd.f32 %v1292, %v1302
          %s1307 = sld [smem:[#allocation5 + $0x34]]
          %v1308 = vstv %s1307
          %v1309 = vmul.f32 %v1308, %v1272
          %v1310 = vmul.f32 %v1308, %v1273
          %1313 = vrot.lane.b32.xlu0 %v1309, 125
          %v1314 = vpop.permute.xlu0 %1313
          %1315 = vrot.lane.b32.xlu0 %v1310, 125
          %v1316 = vpop.permute.xlu0 %1315
          %v1319 = vadd.f32 %v1305, %v1314
          %v1320 = vadd.f32 %v1306, %v1316
          %s1321 = sld [smem:[#allocation5 + $0x35]]
          %v1322 = vstv %s1321
          %v1323 = vmul.f32 %v1322, %v1272
          %v1324 = vmul.f32 %v1322, %v1273
          %1327 = vrot.lane.b32.xlu0 %v1323, 124
          %v1328 = vpop.permute.xlu0 %1327
          %1329 = vrot.lane.b32.xlu0 %v1324, 124
          %v1330 = vpop.permute.xlu0 %1329
          %v1333 = vadd.f32 %v1319, %v1328
          %v1334 = vadd.f32 %v1320, %v1330
          %s1335 = sld [smem:[#allocation5 + $0x36]]
          %v1336 = vstv %s1335
          %v1337 = vmul.f32 %v1336, %v1272
          %v1338 = vmul.f32 %v1336, %v1273
          %1341 = vrot.lane.b32.xlu0 %v1337, 123
          %v1342 = vpop.permute.xlu0 %1341
          %1343 = vrot.lane.b32.xlu0 %v1338, 123
          %v1344 = vpop.permute.xlu0 %1343
          %v1347 = vadd.f32 %v1333, %v1342
          %v1348 = vadd.f32 %v1334, %v1344
          %s1349 = sld [smem:[#allocation5 + $0x37]]
          %v1350 = vstv %s1349
          %v1351 = vmul.f32 %v1350, %v1272
          %v1352 = vmul.f32 %v1350, %v1273
          %1355 = vrot.lane.b32.xlu0 %v1351, 122
          %v1356 = vpop.permute.xlu0 %1355
          %1357 = vrot.lane.b32.xlu0 %v1352, 122
          %v1358 = vpop.permute.xlu0 %1357
          %v1361 = vadd.f32 %v1347, %v1356
          %v1362 = vadd.f32 %v1348, %v1358
          %s1363 = sld [smem:[#allocation5 + $0x38]]
          %v1364 = vld [vmem:[%s310 + $0x1] sm:$0xff]
          %v1365 = vld [vmem:[%s310 + $0x9] sm:$0xff]
          %v1366 = vstv %s1363
          %v1367 = vmul.f32 %v1366, %v1364
          %v1368 = vmul.f32 %v1366, %v1365
          %v1369 = vadd.f32 %v1361, %v1367
          %v1370 = vadd.f32 %v1362, %v1368
          %s1371 = sld [smem:[#allocation5 + $0x39]]
          %v1372 = vstv %s1371
          %v1373 = vmul.f32 %v1372, %v1364
          %v1374 = vmul.f32 %v1372, %v1365
          %1377 = vrot.lane.b32.xlu0 %v1373, 127
          %v1378 = vpop.permute.xlu0 %1377
          %1379 = vrot.lane.b32.xlu0 %v1374, 127
          %v1380 = vpop.permute.xlu0 %1379
          %v1383 = vadd.f32 %v1369, %v1378
          %v1384 = vadd.f32 %v1370, %v1380
          %s1385 = sld [smem:[#allocation5 + $0x3a]]
          %v1386 = vstv %s1385
          %v1387 = vmul.f32 %v1386, %v1364
          %v1388 = vmul.f32 %v1386, %v1365
          %1391 = vrot.lane.b32.xlu0 %v1387, 126
          %v1392 = vpop.permute.xlu0 %1391
          %1393 = vrot.lane.b32.xlu0 %v1388, 126
          %v1394 = vpop.permute.xlu0 %1393
          %v1397 = vadd.f32 %v1383, %v1392
          %v1398 = vadd.f32 %v1384, %v1394
          %s1399 = sld [smem:[#allocation5 + $0x3b]]
          %v1400 = vstv %s1399
          %v1401 = vmul.f32 %v1400, %v1364
          %v1402 = vmul.f32 %v1400, %v1365
          %1405 = vrot.lane.b32.xlu0 %v1401, 125
          %v1406 = vpop.permute.xlu0 %1405
          %1407 = vrot.lane.b32.xlu0 %v1402, 125
          %v1408 = vpop.permute.xlu0 %1407
          %v1411 = vadd.f32 %v1397, %v1406
          %v1412 = vadd.f32 %v1398, %v1408
          %s1413 = sld [smem:[#allocation5 + $0x3c]]
          %v1414 = vstv %s1413
          %v1415 = vmul.f32 %v1414, %v1364
          %v1416 = vmul.f32 %v1414, %v1365
          %1419 = vrot.lane.b32.xlu0 %v1415, 124
          %v1420 = vpop.permute.xlu0 %1419
          %1421 = vrot.lane.b32.xlu0 %v1416, 124
          %v1422 = vpop.permute.xlu0 %1421
          %v1425 = vadd.f32 %v1411, %v1420
          %v1426 = vadd.f32 %v1412, %v1422
          %s1427 = sld [smem:[#allocation5 + $0x3d]]
          %v1428 = vstv %s1427
          %v1429 = vmul.f32 %v1428, %v1364
          %v1430 = vmul.f32 %v1428, %v1365
          %1433 = vrot.lane.b32.xlu0 %v1429, 123
          %v1434 = vpop.permute.xlu0 %1433
          %1435 = vrot.lane.b32.xlu0 %v1430, 123
          %v1436 = vpop.permute.xlu0 %1435
          %v1439 = vadd.f32 %v1425, %v1434
          %v1440 = vadd.f32 %v1426, %v1436
          %s1441 = sld [smem:[#allocation5 + $0x3e]]
          %v1442 = vstv %s1441
          %v1443 = vmul.f32 %v1442, %v1364
          %v1444 = vmul.f32 %v1442, %v1365
          %1447 = vrot.lane.b32.xlu0 %v1443, 122
          %v1448 = vpop.permute.xlu0 %1447
          %1449 = vrot.lane.b32.xlu0 %v1444, 122
          %v1450 = vpop.permute.xlu0 %1449
          %v1453 = vadd.f32 %v1439, %v1448
          %v1454 = vadd.f32 %v1440, %v1450
          %s1455 = sld [smem:[#allocation5 + $0x3f]]
          %v1456 = vld [vmem:[%s310 + $0x2] sm:$0xff]
          %v1457 = vld [vmem:[%s310 + $0xa] sm:$0xff]
          %v1458 = vstv %s1455
          %v1459 = vmul.f32 %v1458, %v1456
          %v1460 = vmul.f32 %v1458, %v1457
          %v1461 = vadd.f32 %v1453, %v1459
          %v1462 = vadd.f32 %v1454, %v1460
          %s1463 = sld [smem:[#allocation5 + $0x40]]
          %v1464 = vstv %s1463
          %v1465 = vmul.f32 %v1464, %v1456
          %v1466 = vmul.f32 %v1464, %v1457
          %1469 = vrot.lane.b32.xlu0 %v1465, 127
          %v1470 = vpop.permute.xlu0 %1469
          %1471 = vrot.lane.b32.xlu0 %v1466, 127
          %v1472 = vpop.permute.xlu0 %1471
          %v1475 = vadd.f32 %v1461, %v1470
          %v1476 = vadd.f32 %v1462, %v1472
          %s1477 = sld [smem:[#allocation5 + $0x41]]
          %v1478 = vstv %s1477
          %v1479 = vmul.f32 %v1478, %v1456
          %v1480 = vmul.f32 %v1478, %v1457
          %1483 = vrot.lane.b32.xlu0 %v1479, 126
          %v1484 = vpop.permute.xlu0 %1483
          %1485 = vrot.lane.b32.xlu0 %v1480, 126
          %v1486 = vpop.permute.xlu0 %1485
          %v1489 = vadd.f32 %v1475, %v1484
          %v1490 = vadd.f32 %v1476, %v1486
          %s1491 = sld [smem:[#allocation5 + $0x42]]
          %v1492 = vstv %s1491
          %v1493 = vmul.f32 %v1492, %v1456
          %v1494 = vmul.f32 %v1492, %v1457
          %1497 = vrot.lane.b32.xlu0 %v1493, 125
          %v1498 = vpop.permute.xlu0 %1497
          %1499 = vrot.lane.b32.xlu0 %v1494, 125
          %v1500 = vpop.permute.xlu0 %1499
          %v1503 = vadd.f32 %v1489, %v1498
          %v1504 = vadd.f32 %v1490, %v1500
          %s1505 = sld [smem:[#allocation5 + $0x43]]
          %v1506 = vstv %s1505
          %v1507 = vmul.f32 %v1506, %v1456
          %v1508 = vmul.f32 %v1506, %v1457
          %1511 = vrot.lane.b32.xlu0 %v1507, 124
          %v1512 = vpop.permute.xlu0 %1511
          %1513 = vrot.lane.b32.xlu0 %v1508, 124
          %v1514 = vpop.permute.xlu0 %1513
          %v1517 = vadd.f32 %v1503, %v1512
          %v1518 = vadd.f32 %v1504, %v1514
          %s1519 = sld [smem:[#allocation5 + $0x44]]
          %v1520 = vstv %s1519
          %v1521 = vmul.f32 %v1520, %v1456
          %v1522 = vmul.f32 %v1520, %v1457
          %1525 = vrot.lane.b32.xlu0 %v1521, 123
          %v1526 = vpop.permute.xlu0 %1525
          %1527 = vrot.lane.b32.xlu0 %v1522, 123
          %v1528 = vpop.permute.xlu0 %1527
          %v1531 = vadd.f32 %v1517, %v1526
          %v1532 = vadd.f32 %v1518, %v1528
          %s1533 = sld [smem:[#allocation5 + $0x45]]
          %v1534 = vstv %s1533
          %v1535 = vmul.f32 %v1534, %v1456
          %v1536 = vmul.f32 %v1534, %v1457
          %1539 = vrot.lane.b32.xlu0 %v1535, 122
          %v1540 = vpop.permute.xlu0 %1539
          %1541 = vrot.lane.b32.xlu0 %v1536, 122
          %v1542 = vpop.permute.xlu0 %1541
          %v1545 = vadd.f32 %v1531, %v1540
          %v1546 = vadd.f32 %v1532, %v1542
          %s1547 = sld [smem:[#allocation5 + $0x46]]
          %v1548 = vld [vmem:[%s310 + $0x3] sm:$0xff]
          %v1549 = vld [vmem:[%s310 + $0xb] sm:$0xff]
          %v1550 = vstv %s1547
          %v1551 = vmul.f32 %v1550, %v1548
          %v1552 = vmul.f32 %v1550, %v1549
          %v1553 = vadd.f32 %v1545, %v1551
          %v1554 = vadd.f32 %v1546, %v1552
          %s1555 = sld [smem:[#allocation5 + $0x47]]
          %v1556 = vstv %s1555
          %v1557 = vmul.f32 %v1556, %v1548
          %v1558 = vmul.f32 %v1556, %v1549
          %1561 = vrot.lane.b32.xlu0 %v1557, 127
          %v1562 = vpop.permute.xlu0 %1561
          %1563 = vrot.lane.b32.xlu0 %v1558, 127
          %v1564 = vpop.permute.xlu0 %1563
          %v1567 = vadd.f32 %v1553, %v1562
          %v1568 = vadd.f32 %v1554, %v1564
          %s1569 = sld [smem:[#allocation5 + $0x48]]
          %v1570 = vstv %s1569
          %v1571 = vmul.f32 %v1570, %v1548
          %v1572 = vmul.f32 %v1570, %v1549
          %1575 = vrot.lane.b32.xlu0 %v1571, 126
          %v1576 = vpop.permute.xlu0 %1575
          %1577 = vrot.lane.b32.xlu0 %v1572, 126
          %v1578 = vpop.permute.xlu0 %1577
          %v1581 = vadd.f32 %v1567, %v1576
          %v1582 = vadd.f32 %v1568, %v1578
          %s1583 = sld [smem:[#allocation5 + $0x49]]
          %v1584 = vstv %s1583
          %v1585 = vmul.f32 %v1584, %v1548
          %v1586 = vmul.f32 %v1584, %v1549
          %1589 = vrot.lane.b32.xlu0 %v1585, 125
          %v1590 = vpop.permute.xlu0 %1589
          %1591 = vrot.lane.b32.xlu0 %v1586, 125
          %v1592 = vpop.permute.xlu0 %1591
          %v1595 = vadd.f32 %v1581, %v1590
          %v1596 = vadd.f32 %v1582, %v1592
          %s1597 = sld [smem:[#allocation5 + $0x4a]]
          %v1598 = vstv %s1597
          %v1599 = vmul.f32 %v1598, %v1548
          %v1600 = vmul.f32 %v1598, %v1549
          %1603 = vrot.lane.b32.xlu0 %v1599, 124
          %v1604 = vpop.permute.xlu0 %1603
          %1605 = vrot.lane.b32.xlu0 %v1600, 124
          %v1606 = vpop.permute.xlu0 %1605
          %v1609 = vadd.f32 %v1595, %v1604
          %v1610 = vadd.f32 %v1596, %v1606
          %s1611 = sld [smem:[#allocation5 + $0x4b]]
          %v1612 = vstv %s1611
          %v1613 = vmul.f32 %v1612, %v1548
          %v1614 = vmul.f32 %v1612, %v1549
          %1617 = vrot.lane.b32.xlu0 %v1613, 123
          %v1618 = vpop.permute.xlu0 %1617
          %1619 = vrot.lane.b32.xlu0 %v1614, 123
          %v1620 = vpop.permute.xlu0 %1619
          %v1623 = vadd.f32 %v1609, %v1618
          %v1624 = vadd.f32 %v1610, %v1620
          %s1625 = sld [smem:[#allocation5 + $0x4c]]
          %v1626 = vstv %s1625
          %v1627 = vmul.f32 %v1626, %v1548
          %v1628 = vmul.f32 %v1626, %v1549
          %1631 = vrot.lane.b32.xlu0 %v1627, 122
          %v1632 = vpop.permute.xlu0 %1631
          %1633 = vrot.lane.b32.xlu0 %v1628, 122
          %v1634 = vpop.permute.xlu0 %1633
          %v1637 = vadd.f32 %v1623, %v1632
          %v1638 = vadd.f32 %v1624, %v1634
          %s1639 = sld [smem:[#allocation5 + $0x4d]]
          %v1640 = vld [vmem:[%s310 + $0x4] sm:$0xff]
          %v1641 = vld [vmem:[%s310 + $0xc] sm:$0xff]
          %v1642 = vstv %s1639
          %v1643 = vmul.f32 %v1642, %v1640
          %v1644 = vmul.f32 %v1642, %v1641
          %v1645 = vadd.f32 %v1637, %v1643
          %v1646 = vadd.f32 %v1638, %v1644
          %s1647 = sld [smem:[#allocation5 + $0x4e]]
          %v1648 = vstv %s1647
          %v1649 = vmul.f32 %v1648, %v1640
          %v1650 = vmul.f32 %v1648, %v1641
          %1653 = vrot.lane.b32.xlu0 %v1649, 127
          %v1654 = vpop.permute.xlu0 %1653
          %1655 = vrot.lane.b32.xlu0 %v1650, 127
          %v1656 = vpop.permute.xlu0 %1655
          %v1659 = vadd.f32 %v1645, %v1654
          %v1660 = vadd.f32 %v1646, %v1656
          %s1661 = sld [smem:[#allocation5 + $0x4f]]
          %v1662 = vstv %s1661
          %v1663 = vmul.f32 %v1662, %v1640
          %v1664 = vmul.f32 %v1662, %v1641
          %1667 = vrot.lane.b32.xlu0 %v1663, 126
          %v1668 = vpop.permute.xlu0 %1667
          %1669 = vrot.lane.b32.xlu0 %v1664, 126
          %v1670 = vpop.permute.xlu0 %1669
          %v1673 = vadd.f32 %v1659, %v1668
          %v1674 = vadd.f32 %v1660, %v1670
          %s1675 = sld [smem:[#allocation5 + $0x50]]
          %v1676 = vstv %s1675
          %v1677 = vmul.f32 %v1676, %v1640
          %v1678 = vmul.f32 %v1676, %v1641
          %1681 = vrot.lane.b32.xlu0 %v1677, 125
          %v1682 = vpop.permute.xlu0 %1681
          %1683 = vrot.lane.b32.xlu0 %v1678, 125
          %v1684 = vpop.permute.xlu0 %1683
          %v1687 = vadd.f32 %v1673, %v1682
          %v1688 = vadd.f32 %v1674, %v1684
          %s1689 = sld [smem:[#allocation5 + $0x51]]
          %v1690 = vstv %s1689
          %v1691 = vmul.f32 %v1690, %v1640
          %v1692 = vmul.f32 %v1690, %v1641
          %1695 = vrot.lane.b32.xlu0 %v1691, 124
          %v1696 = vpop.permute.xlu0 %1695
          %1697 = vrot.lane.b32.xlu0 %v1692, 124
          %v1698 = vpop.permute.xlu0 %1697
          %v1701 = vadd.f32 %v1687, %v1696
          %v1702 = vadd.f32 %v1688, %v1698
          %s1703 = sld [smem:[#allocation5 + $0x52]]
          %v1704 = vstv %s1703
          %v1705 = vmul.f32 %v1704, %v1640
          %v1706 = vmul.f32 %v1704, %v1641
          %1709 = vrot.lane.b32.xlu0 %v1705, 123
          %v1710 = vpop.permute.xlu0 %1709
          %1711 = vrot.lane.b32.xlu0 %v1706, 123
          %v1712 = vpop.permute.xlu0 %1711
          %v1715 = vadd.f32 %v1701, %v1710
          %v1716 = vadd.f32 %v1702, %v1712
          %s1717 = sld [smem:[#allocation5 + $0x53]]
          %v1718 = vstv %s1717
          %v1719 = vmul.f32 %v1718, %v1640
          %v1720 = vmul.f32 %v1718, %v1641
          %1723 = vrot.lane.b32.xlu0 %v1719, 122
          %v1724 = vpop.permute.xlu0 %1723
          %1725 = vrot.lane.b32.xlu0 %v1720, 122
          %v1726 = vpop.permute.xlu0 %1725
          %v1729 = vadd.f32 %v1715, %v1724
          %v1730 = vadd.f32 %v1716, %v1726
          %s1731 = sld [smem:[#allocation5 + $0x54]]
          %v1732 = vld [vmem:[%s310 + $0x5] sm:$0xff]
          %v1733 = vld [vmem:[%s310 + $0xd] sm:$0xff]
          %v1734 = vstv %s1731
          %v1735 = vmul.f32 %v1734, %v1732
          %v1736 = vmul.f32 %v1734, %v1733
          %v1737 = vadd.f32 %v1729, %v1735
          %v1738 = vadd.f32 %v1730, %v1736
          %s1739 = sld [smem:[#allocation5 + $0x55]]
          %v1740 = vstv %s1739
          %v1741 = vmul.f32 %v1740, %v1732
          %v1742 = vmul.f32 %v1740, %v1733
          %1745 = vrot.lane.b32.xlu0 %v1741, 127
          %v1746 = vpop.permute.xlu0 %1745
          %1747 = vrot.lane.b32.xlu0 %v1742, 127
          %v1748 = vpop.permute.xlu0 %1747
          %v1751 = vadd.f32 %v1737, %v1746
          %v1752 = vadd.f32 %v1738, %v1748
          %s1753 = sld [smem:[#allocation5 + $0x56]]
          %v1754 = vstv %s1753
          %v1755 = vmul.f32 %v1754, %v1732
          %v1756 = vmul.f32 %v1754, %v1733
          %1759 = vrot.lane.b32.xlu0 %v1755, 126
          %v1760 = vpop.permute.xlu0 %1759
          %1761 = vrot.lane.b32.xlu0 %v1756, 126
          %v1762 = vpop.permute.xlu0 %1761
          %v1765 = vadd.f32 %v1751, %v1760
          %v1766 = vadd.f32 %v1752, %v1762
          %s1767 = sld [smem:[#allocation5 + $0x57]]
          %v1768 = vstv %s1767
          %v1769 = vmul.f32 %v1768, %v1732
          %v1770 = vmul.f32 %v1768, %v1733
          %1773 = vrot.lane.b32.xlu0 %v1769, 125
          %v1774 = vpop.permute.xlu0 %1773
          %1775 = vrot.lane.b32.xlu0 %v1770, 125
          %v1776 = vpop.permute.xlu0 %1775
          %v1779 = vadd.f32 %v1765, %v1774
          %v1780 = vadd.f32 %v1766, %v1776
          %s1781 = sld [smem:[#allocation5 + $0x58]]
          %v1782 = vstv %s1781
          %v1783 = vmul.f32 %v1782, %v1732
          %v1784 = vmul.f32 %v1782, %v1733
          %1787 = vrot.lane.b32.xlu0 %v1783, 124
          %v1788 = vpop.permute.xlu0 %1787
          %1789 = vrot.lane.b32.xlu0 %v1784, 124
          %v1790 = vpop.permute.xlu0 %1789
          %v1793 = vadd.f32 %v1779, %v1788
          %v1794 = vadd.f32 %v1780, %v1790
          %s1795 = sld [smem:[#allocation5 + $0x59]]
          %v1796 = vstv %s1795
          %v1797 = vmul.f32 %v1796, %v1732
          %v1798 = vmul.f32 %v1796, %v1733
          %1801 = vrot.lane.b32.xlu0 %v1797, 123
          %v1802 = vpop.permute.xlu0 %1801
          %1803 = vrot.lane.b32.xlu0 %v1798, 123
          %v1804 = vpop.permute.xlu0 %1803
          %v1807 = vadd.f32 %v1793, %v1802
          %v1808 = vadd.f32 %v1794, %v1804
          %s1809 = sld [smem:[#allocation5 + $0x5a]]
          %v1810 = vstv %s1809
          %v1811 = vmul.f32 %v1810, %v1732
          %v1812 = vmul.f32 %v1810, %v1733
          %1815 = vrot.lane.b32.xlu0 %v1811, 122
          %v1816 = vpop.permute.xlu0 %1815
          %1817 = vrot.lane.b32.xlu0 %v1812, 122
          %v1818 = vpop.permute.xlu0 %1817
          %v1821 = vadd.f32 %v1807, %v1816
          %v1822 = vadd.f32 %v1808, %v1818
          %s1823 = sld [smem:[#allocation5 + $0x5b]]
          %v1824 = vld [vmem:[%s310 + $0x6] sm:$0xff]
          %v1825 = vld [vmem:[%s310 + $0xe] sm:$0xff]
          %v1826 = vstv %s1823
          %v1827 = vmul.f32 %v1826, %v1824
          %v1828 = vmul.f32 %v1826, %v1825
          %v1829 = vadd.f32 %v1821, %v1827
          %v1830 = vadd.f32 %v1822, %v1828
          %s1831 = sld [smem:[#allocation5 + $0x5c]]
          %v1832 = vstv %s1831
          %v1833 = vmul.f32 %v1832, %v1824
          %v1834 = vmul.f32 %v1832, %v1825
          %1837 = vrot.lane.b32.xlu0 %v1833, 127
          %v1838 = vpop.permute.xlu0 %1837
          %1839 = vrot.lane.b32.xlu0 %v1834, 127
          %v1840 = vpop.permute.xlu0 %1839
          %v1843 = vadd.f32 %v1829, %v1838
          %v1844 = vadd.f32 %v1830, %v1840
          %s1845 = sld [smem:[#allocation5 + $0x5d]]
          %v1846 = vstv %s1845
          %v1847 = vmul.f32 %v1846, %v1824
          %v1848 = vmul.f32 %v1846, %v1825
          %1851 = vrot.lane.b32.xlu0 %v1847, 126
          %v1852 = vpop.permute.xlu0 %1851
          %1853 = vrot.lane.b32.xlu0 %v1848, 126
          %v1854 = vpop.permute.xlu0 %1853
          %v1857 = vadd.f32 %v1843, %v1852
          %v1858 = vadd.f32 %v1844, %v1854
          %s1859 = sld [smem:[#allocation5 + $0x5e]]
          %v1860 = vstv %s1859
          %v1861 = vmul.f32 %v1860, %v1824
          %v1862 = vmul.f32 %v1860, %v1825
          %1865 = vrot.lane.b32.xlu0 %v1861, 125
          %v1866 = vpop.permute.xlu0 %1865
          %1867 = vrot.lane.b32.xlu0 %v1862, 125
          %v1868 = vpop.permute.xlu0 %1867
          %v1871 = vadd.f32 %v1857, %v1866
          %v1872 = vadd.f32 %v1858, %v1868
          %s1873 = sld [smem:[#allocation5 + $0x5f]]
          %v1874 = vstv %s1873
          %v1875 = vmul.f32 %v1874, %v1824
          %v1876 = vmul.f32 %v1874, %v1825
          %1879 = vrot.lane.b32.xlu0 %v1875, 124
          %v1880 = vpop.permute.xlu0 %1879
          %1881 = vrot.lane.b32.xlu0 %v1876, 124
          %v1882 = vpop.permute.xlu0 %1881
          %v1885 = vadd.f32 %v1871, %v1880
          %v1886 = vadd.f32 %v1872, %v1882
          %s1887 = sld [smem:[#allocation5 + $0x60]]
          %v1888 = vstv %s1887
          %v1889 = vmul.f32 %v1888, %v1824
          %v1890 = vmul.f32 %v1888, %v1825
          %1893 = vrot.lane.b32.xlu0 %v1889, 123
          %v1894 = vpop.permute.xlu0 %1893
          %1895 = vrot.lane.b32.xlu0 %v1890, 123
          %v1896 = vpop.permute.xlu0 %1895
          %v1899 = vadd.f32 %v1885, %v1894
          %v1900 = vadd.f32 %v1886, %v1896
          %s1901 = sld [smem:[#allocation5 + $0x61]]
          %v1902 = vstv %s1901
          %v1903 = vmul.f32 %v1902, %v1824
          %v1904 = vmul.f32 %v1902, %v1825
          %1907 = vrot.lane.b32.xlu0 %v1903, 122
          %v1908 = vpop.permute.xlu0 %1907
          %1909 = vrot.lane.b32.xlu0 %v1904, 122
          %v1910 = vpop.permute.xlu0 %1909
          %v1913 = vadd.f32 %v1899, %v1908
          %v1914 = vadd.f32 %v1900, %v1910
          %v1915 = vsub.f32 0.0, %v1913
          %v1916 = vsub.f32 0.0, %v1914
          %v1917 = vmul.f32 %v1915, 1.442695
          %v1918 = vpow.pop %v1917
          %v1919 = vmul.f32 %v1916, 1.442695
          %v1920 = vpow.pop %v1919
          %v1921 = vadd.f32 %v1918, 1.0
          %v1922 = vadd.f32 %v1920, 1.0
          %v1923 = vrcp.pop %v1921
          %v1924 = vmul.f32 1.0, %v1923
          %v1925 = vrcp.pop %v1922
          %v1926 = vmul.f32 1.0, %v1925
          %vm1927 = vcmp.lt.s32.totalorder %v231, 16
          %vm1928 = vmand %vm232, %vm1927
          %1929 = vst.msk [vmem:[%s181] sm:$0x1] %vm1928, %v1924
          %v1932 = vunpack.c.l.s4 1966171168
          %v1933 = vunpack.c.0.s8 %v1932
          %v1934 = vlaneseq
          %v1935 = vshrl.u32 %v1934, 7
          %v1936 = vsub.s32 %v1933, %v1935
          %v1937 = vrot.slane %v1924, %v1936
          %v1938 = vcombine.high %v1937, %v1937
          %v1940 = vunpack.c.l.s4 1966171168
          %v1941 = vunpack.c.0.s8 %v1940
          %v1942 = vlaneseq
          %v1943 = vshrl.u32 %v1942, 7
          %v1944 = vsub.s32 %v1941, %v1943
          %v1945 = vrot.slane %v1937, %v1944
          %v1947 = vunpack.c.l.s4 1966171168
          %v1948 = vunpack.c.0.s8 %v1947
          %v1949 = vlaneseq
          %v1950 = vshrl.u32 %v1949, 7
          %v1951 = vsub.s32 %v1948, %v1950
          %v1952 = vrot.slane %v1938, %v1951
          %1953 = vrot.lane.b32.xlu0 %v1952, 16
          %v1954 = vpop.permute.xlu0 %1953
          %vm1956 = vcmp.ge.s32.totalorder %v231, 16
          %vm1957 = vcmp.lt.s32.totalorder %v231, 32
          %vm1958 = vmand %vm1956, %vm1957
          %1959 = vst.msk [vmem:[%s181] sm:$0x1] %vm1958, %v1954
          %v1960 = vcombine.high %v1945, %v1945
          %1961 = vrot.lane.b32.xlu0 %v1960, 32
          %v1962 = vpop.permute.xlu0 %1961
          %vm1964 = vcmp.ge.s32.totalorder %v231, 32
          %vm1965 = vcmp.lt.s32.totalorder %v231, 48
          %vm1966 = vmand %vm1964, %vm1965
          %1967 = vst.msk [vmem:[%s181] sm:$0x1] %vm1966, %v1962
          %v1968 = vcombine.high %v1952, %v1952
          %1969 = vrot.lane.b32.xlu0 %v1968, 48
          %v1970 = vpop.permute.xlu0 %1969
          %vm1972 = vcmp.ge.s32.totalorder %v231, 48
          %vm1973 = vcmp.lt.s32.totalorder %v231, 64
          %vm1974 = vmand %vm1972, %vm1973
          %1975 = vst.msk [vmem:[%s181] sm:$0x1] %vm1974, %v1970
          %v1976 = vcombine.high %v1924, %v1924
          %v1978 = vunpack.c.l.s4 1966171168
          %v1979 = vunpack.c.0.s8 %v1978
          %v1980 = vlaneseq
          %v1981 = vshrl.u32 %v1980, 7
          %v1982 = vsub.s32 %v1979, %v1981
          %v1983 = vrot.slane %v1976, %v1982
          %v1985 = vunpack.c.l.s4 1966171168
          %v1986 = vunpack.c.0.s8 %v1985
          %v1987 = vlaneseq
          %v1988 = vshrl.u32 %v1987, 7
          %v1989 = vsub.s32 %v1986, %v1988
          %v1990 = vrot.slane %v1983, %v1989
          %1991 = vrot.lane.b32.xlu0 %v1990, 64
          %v1992 = vpop.permute.xlu0 %1991
          %vm1994 = vcmp.ge.s32.totalorder %v231, 64
          %vm1995 = vcmp.lt.s32.totalorder %v231, 80
          %vm1996 = vmand %vm1994, %vm1995
          %1997 = vst.msk [vmem:[%s181] sm:$0x1] %vm1996, %v1992
          %v1998 = vcombine.high %v1983, %v1983
          %v2000 = vunpack.c.l.s4 1966171168
          %v2001 = vunpack.c.0.s8 %v2000
          %v2002 = vlaneseq
          %v2003 = vshrl.u32 %v2002, 7
          %v2004 = vsub.s32 %v2001, %v2003
          %v2005 = vrot.slane %v1998, %v2004
          %2006 = vrot.lane.b32.xlu0 %v2005, 80
          %v2007 = vpop.permute.xlu0 %2006
          %vm2009 = vcmp.ge.s32.totalorder %v231, 80
          %vm2010 = vcmp.lt.s32.totalorder %v231, 96
          %vm2011 = vmand %vm2009, %vm2010
          %2012 = vst.msk [vmem:[%s181] sm:$0x1] %vm2011, %v2007
          %v2013 = vcombine.high %v1990, %v1990
          %2014 = vrot.lane.b32.xlu0 %v2013, 96
          %v2015 = vpop.permute.xlu0 %2014
          %vm2017 = vcmp.ge.s32.totalorder %v231, 96
          %vm2018 = vcmp.lt.s32.totalorder %v231, 112
          %vm2019 = vmand %vm2017, %vm2018
          %2020 = vst.msk [vmem:[%s181] sm:$0x1] %vm2019, %v2015
          %v2021 = vcombine.high %v2005, %v2005
          %2022 = vrot.lane.b32.xlu0 %v2021, 112
          %v2023 = vpop.permute.xlu0 %2022
          %vm2025 = vcmp.ge.s32.totalorder %v231, 112
          %vm2026 = vcmp.lt.s32.totalorder %v231, 128
          %vm2027 = vmand %vm2025, %vm2026
          %2028 = vst.msk [vmem:[%s181] sm:$0x1] %vm2027, %v2023
          %2029 = vst.msk [vmem:[%s181 + $0x1] sm:$0x1] %vm1928, %v1926
          %v2032 = vunpack.c.l.s4 1966171168
          %v2033 = vunpack.c.0.s8 %v2032
          %v2034 = vlaneseq
          %v2035 = vshrl.u32 %v2034, 7
          %v2036 = vsub.s32 %v2033, %v2035
          %v2037 = vrot.slane %v1926, %v2036
          %v2038 = vcombine.high %v2037, %v2037
          %v2040 = vunpack.c.l.s4 1966171168
          %v2041 = vunpack.c.0.s8 %v2040
          %v2042 = vlaneseq
          %v2043 = vshrl.u32 %v2042, 7
          %v2044 = vsub.s32 %v2041, %v2043
          %v2045 = vrot.slane %v2037, %v2044
          %v2047 = vunpack.c.l.s4 1966171168
          %v2048 = vunpack.c.0.s8 %v2047
          %v2049 = vlaneseq
          %v2050 = vshrl.u32 %v2049, 7
          %v2051 = vsub.s32 %v2048, %v2050
          %v2052 = vrot.slane %v2038, %v2051
          %2053 = vrot.lane.b32.xlu0 %v2052, 16
          %v2054 = vpop.permute.xlu0 %2053
          %2056 = vst.msk [vmem:[%s181 + $0x1] sm:$0x1] %vm1958, %v2054
          %v2057 = vcombine.high %v2045, %v2045
          %2058 = vrot.lane.b32.xlu0 %v2057, 32
          %v2059 = vpop.permute.xlu0 %2058
          %2061 = vst.msk [vmem:[%s181 + $0x1] sm:$0x1] %vm1966, %v2059
          %v2062 = vcombine.high %v2052, %v2052
          %2063 = vrot.lane.b32.xlu0 %v2062, 48
          %v2064 = vpop.permute.xlu0 %2063
          %2066 = vst.msk [vmem:[%s181 + $0x1] sm:$0x1] %vm1974, %v2064
          %v2067 = vcombine.high %v1926, %v1926
          %v2069 = vunpack.c.l.s4 1966171168
          %v2070 = vunpack.c.0.s8 %v2069
          %v2071 = vlaneseq
          %v2072 = vshrl.u32 %v2071, 7
          %v2073 = vsub.s32 %v2070, %v2072
          %v2074 = vrot.slane %v2067, %v2073
          %v2076 = vunpack.c.l.s4 1966171168
          %v2077 = vunpack.c.0.s8 %v2076
          %v2078 = vlaneseq
          %v2079 = vshrl.u32 %v2078, 7
          %v2080 = vsub.s32 %v2077, %v2079
          %v2081 = vrot.slane %v2074, %v2080
          %2082 = vrot.lane.b32.xlu0 %v2081, 64
          %v2083 = vpop.permute.xlu0 %2082
          %2085 = vst.msk [vmem:[%s181 + $0x1] sm:$0x1] %vm1996, %v2083
          %v2086 = vcombine.high %v2074, %v2074
          %v2088 = vunpack.c.l.s4 1966171168
          %v2089 = vunpack.c.0.s8 %v2088
          %v2090 = vlaneseq
          %v2091 = vshrl.u32 %v2090, 7
          %v2092 = vsub.s32 %v2089, %v2091
          %v2093 = vrot.slane %v2086, %v2092
          %2094 = vrot.lane.b32.xlu0 %v2093, 80
          %v2095 = vpop.permute.xlu0 %2094
          %2097 = vst.msk [vmem:[%s181 + $0x1] sm:$0x1] %vm2011, %v2095
          %v2098 = vcombine.high %v2081, %v2081
          %2099 = vrot.lane.b32.xlu0 %v2098, 96
          %v2100 = vpop.permute.xlu0 %2099
          %2102 = vst.msk [vmem:[%s181 + $0x1] sm:$0x1] %vm2019, %v2100
          %v2103 = vcombine.high %v2093, %v2093
          %2104 = vrot.lane.b32.xlu0 %v2103, 112
          %v2105 = vpop.permute.xlu0 %2104
          %2107 = vst.msk [vmem:[%s181 + $0x1] sm:$0x1] %vm2027, %v2105
        $region40: #{spatial_attention.1} parent=27 // pred_fallthru
          _
        %p2108 = scmp.lt.s32.totalorder %s18, 1
        %s2109 = scalar_select %p2108, %s18, 1
        %s2110 = smul.addr %s2109, 2
        %s2111 = scalar_lea.vmem %s2, %s2110
        // Predicated region
        $region41: #{spatial_attention.1} parent=27 // pred_check
          %p2112 = pneg %p93
        $region42: #{spatial_attention.1} parent=27 // pred_check_branch
          %2114 = sbr.rel (%p2112) target = $region44
        $region43: #{spatial_attention.1} parent=27 // pred_region
          _
        $region44: #{spatial_attention.1} parent=27 // pred_fallthru
          _
      $region28: #{spatial_attention.1} parent=5 // pred_fallthru
        _
      %p2115 = scmp.le.s32.totalorder 2, %s9
      // Predicated region
      $region45: #{spatial_attention.1} parent=5 // pred_check
        %p2116 = pneg %p2115
      $region46: #{spatial_attention.1} parent=5 // pred_check_branch
        %2118 = sbr.rel (%p2116) target = $region48
      $region47: #{spatial_attention.1} parent=5 // pred_region
        %s2119 = ssub.s32 %s9, 2
        // Predicated region
        $region49: #{spatial_attention.1} parent=47 // pred_check
          %p2120 = pneg %p99
        $region50: #{spatial_attention.1} parent=47 // pred_check_branch
          %2122 = sbr.rel (%p2120) target = $region52
        $region51: #{spatial_attention.1} parent=47 // pred_region
          %p2123 = scmp.lt.s32.totalorder %s20, 1
          %s2124 = scalar_select %p2123, %s20, 1
          %s2125 = smul.addr %s2124, 2
          %s2126 = scalar_lea.vmem %s2, %s2125
        $region52: #{spatial_attention.1} parent=47 // pred_fallthru
          _
      $region48: #{spatial_attention.1} parent=5 // pred_fallthru
        _
    $region6: #{spatial_attention.1} parent=1 // loop_footer
      %s13 = sadd.s32 1, %s9
    $region7: #{spatial_attention.1} parent=1 // loop_footer_branch
      %8 = sbr.rel target = $region3
    $region8: #{spatial_attention.1} parent=1 // loop_exit
      _
    %2127 = vsyncpa [#allocation6], 1
    %s2128 = scalar_lea.sflag [#allocation6], 1
    %2129 = vsyncpa %s2128, 1

</llo_original>
